<compile_context>
chip_gen: v7x
topology: tpu7x:2x2x1
jax: 0.10.0
libtpu: 0.0.40
codegen_flags: <defaults>
</compile_context>

<pallas_src>
import math

import numpy as np
import jax
import jax.numpy as jnp
from jax.experimental import pallas as pl
from jax.experimental.pallas import tpu as pltpu

BN_EPS = 1e-5
LEAKY_SLOPE = 0.2


def _vmem_spec():
    return pl.BlockSpec(memory_space=pltpu.MemorySpace.VMEM)


def _round_up(v, m):
    return ((v + m - 1) // m) * m


def _lane_dense_classes(n_classes, wf):
    """Smallest padded class count such that wf * ncls_pad is a multiple of 128."""
    unit = 128 // math.gcd(128, wf)
    return _round_up(n_classes, unit)


# ---------------------------------------------------------------------------
# Fused forward kernel
# ---------------------------------------------------------------------------
def _make_fused_kernel(block_dims, head_dims):
    """block_dims: list of (H, W, Cin, Cout) per conv block (input spatial size).
    head_dims: (hf, wf, ncls_pad) of the final spatial map / padded class count.

    Kernel refs (in order):
      x, T_0..T_{B-1}, P_0..P_{B-1}, obo_wx, obo_ws, obo_b,
      fc1_w, fc1_b, fc2_w, fc2_b, out, [pad_i, stage_i]*B
    """
    n_blocks = len(block_dims)
    hf, wf, ncls_pad = head_dims

    def kernel(*refs):
        x_ref = refs[0]
        t_refs = refs[1:1 + n_blocks]
        p_refs = refs[1 + n_blocks:1 + 2 * n_blocks]
        (wx_ref, ws_ref, bobo_ref,
         fc1w_ref, fc1b_ref, fc2w_ref, fc2b_ref) = refs[1 + 2 * n_blocks:
                                                        8 + 2 * n_blocks]
        out_ref = refs[8 + 2 * n_blocks]
        scratch = refs[9 + 2 * n_blocks:]
        pad_refs, stage_refs = scratch[0::2], scratch[1::2]

        n = x_ref.shape[0]

        def pool_slab(y, h, w, c):
            """MaxPool2d(2,2) on a row slab (n*h, w*c) -> (n*(h//2), (w//2)*c)."""
            t = y.reshape(n * h // 2, 2, w * c)
            hp = jnp.maximum(t[:, 0, :], t[:, 1, :])          # pool H (sublanes)
            t = hp.reshape(n * h // 2, w // 2, 2 * c)
            return jnp.maximum(t[:, :, :c], t[:, :, c:]).reshape(
                n * h // 2, (w // 2) * c)                      # pool W (lane groups)

        def conv_block(x_in, blk):
            """Conv3x3(pad=1) + BN2d(train, gamma=1, beta=0) + ReLU + MaxPool2."""
            h, w, cin, cout = block_dims[blk]
            wcin = w * cin
            pad_ref, stage_ref = pad_refs[blk], stage_refs[blk]
            t_ref, p_ref = t_refs[blk], p_refs[blk]

            # Zero only the two halo rows, then write the interior rows.
            zrow = jnp.zeros((n, 1, wcin), jnp.float32)
            pad_ref[:, 0:1, :] = zrow
            pad_ref[:, h + 1:h + 2, :] = zrow
            pad_ref[:, 1:h + 1, :] = x_in.reshape(n, h, wcin)

            # Stage the 3 shifted row bands contiguously along K -> single matmul.
            for dy in range(3):
                stage_ref[:, dy * wcin:(dy + 1) * wcin] = (
                    pad_ref[:, dy:dy + h, :].reshape(n * h, wcin))

            # One K = 3*W*Cin matmul on the MXU, f32 accumulation.  Conv bias is
            # omitted: it cancels exactly under training-mode BatchNorm (beta=0).
            acc = jnp.dot(stage_ref[...], t_ref[...],
                          preferred_element_type=jnp.float32)   # (n*h, w*cout)

            # BatchNorm2d + ReLU in the lane-dense slab.  P folds the (1, w*cout)
            # column sums per channel and re-broadcasts them to every (x, c)
            # column, so no narrow reshapes / lane-sparse vregs are created.
            inv_cnt = 1.0 / float(n * h * w)
            col_s = jnp.sum(acc, axis=0, keepdims=True)
            col_q = jnp.sum(acc * acc, axis=0, keepdims=True)
            mean_r = jnp.dot(col_s, p_ref[...],
                             preferred_element_type=jnp.float32) * inv_cnt
            msq_r = jnp.dot(col_q, p_ref[...],
                            preferred_element_type=jnp.float32) * inv_cnt
            var_r = jnp.maximum(msq_r - mean_r * mean_r, 0.0)
            y = jnp.maximum((acc - mean_r) * jax.lax.rsqrt(var_r + BN_EPS), 0.0)
            return pool_slab(y, h, w, cout)

        # ConvBlock chain; skip = block-0 output, re-pooled once per later block.
        h0, w0, _cin0, cout0 = block_dims[0]
        x = conv_block(x_ref[...], 0)
        skip = x
        sh, sw, sc = h0 // 2, w0 // 2, cout0
        for blk in range(1, n_blocks):
            x = conv_block(x, blk)
            skip = pool_slab(skip, sh, sw, sc)
            sh //= 2
            sw //= 2

        # 1x1 conv over cat((x, skip), channel) + LeakyReLU(0.2).  The concat is
        # folded into two block-diagonal slab matmuls; classes padded lane-dense.
        z = (jnp.dot(x, wx_ref[...], preferred_element_type=jnp.float32)
             + jnp.dot(skip, ws_ref[...], preferred_element_type=jnp.float32)
             + bobo_ref[...])
        z = jnp.where(z > 0, z, LEAKY_SLOPE * z)                # (n*hf, wf*ncls_pad)

        # Flatten (PyTorch NCHW order folded into fc1 rows at pack time) + MLP.
        feat = z.reshape(n, hf * wf * ncls_pad)
        hdn = jnp.dot(feat, fc1w_ref[...],
                      preferred_element_type=jnp.float32) + fc1b_ref[...]
        hdn = jnp.maximum(hdn, 0.0)                             # MLP(160,20): Linear+ReLU
        mean = jnp.mean(hdn, axis=0, keepdims=True)             # BatchNorm1d(20), train
        var = jnp.maximum(jnp.mean(hdn * hdn, axis=0, keepdims=True)
                          - mean * mean, 0.0)
        hdn = (hdn - mean) * jax.lax.rsqrt(var + BN_EPS)
        out = jnp.dot(hdn, fc2w_ref[...],
                      preferred_element_type=jnp.float32) + fc2b_ref[...]
        out_ref[...] = out                                      # (n, out_pad) dense store

    return kernel


# ---------------------------------------------------------------------------
# Wrapper: one boundary transpose + one pallas_call
# ---------------------------------------------------------------------------
def dynamic_cnn_forward(x_nchw, packed):
    n = x_nchw.shape[0]
    block_dims = packed["block_dims"]
    h0, w0, cin0, _ = block_dims[0]

    # Single boundary layout change: NCHW (PyTorch) -> per-image row slabs
    # (n, H, W*Cin).  Everything else runs inside the one fused kernel with
    # VMEM-resident intermediates (no HBM bouncing between stages).
    x = jnp.transpose(x_nchw, (0, 2, 3, 1)).reshape(n, h0, w0 * cin0)
    x = x.astype(jnp.float32)

    kernel = _make_fused_kernel(block_dims, packed["head_dims"])
    inputs = ([x] + list(packed["conv_T"]) + list(packed["bn_fold"]) +
              [packed["obo_wx"], packed["obo_ws"], packed["obo_b"],
               packed["fc1_w"], packed["fc1_b"], packed["fc2_w"], packed["fc2_b"]])

    scratch = []
    for (h, w, cin, _cout) in block_dims:
        scratch.append(pltpu.VMEM((n, h + 2, w * cin), jnp.float32))   # halo-pad rows
        scratch.append(pltpu.VMEM((n * h, 3 * w * cin), jnp.float32))  # K-fused stage

    out = pl.pallas_call(
        kernel,
        out_shape=jax.ShapeDtypeStruct((n, packed["out_pad"]), jnp.float32),
        in_specs=[_vmem_spec()] * len(inputs),
        out_specs=_vmem_spec(),
        scratch_shapes=scratch,
    )(*inputs)
    return out[:, :packed["n_classes"]]


# ---------------------------------------------------------------------------
# Trace-time weight packing
# ---------------------------------------------------------------------------
def _build_conv_toeplitz_fused(w_oihw, w_size):
    """Torch (Cout, Cin, 3, 3) conv weight -> K-fused (3*W*Cin, W*Cout) matrix.

    stage(:, dy*W*Cin + x*Cin + ci) holds padded input row (y+dy) column (x, ci);
    stage @ T performs the full padded 3x3 convolution of a (n*H, .) row slab in
    a single matmul (zero padding along W is implicit in the band structure).
    """
    w_np = np.asarray(w_oihw, dtype=np.float32)
    cout, cin = w_np.shape[0], w_np.shape[1]
    wt = np.transpose(w_np, (2, 3, 1, 0))                   # (dy, dx, ci, co)
    t = np.zeros((3, w_size * cin, w_size * cout), np.float32)
    for dy in range(3):
        for wo in range(w_size):
            for dx in range(3):
                xo = wo + dx - 1
                if 0 <= xo < w_size:
                    t[dy, xo * cin:(xo + 1) * cin,
                      wo * cout:(wo + 1) * cout] = wt[dy, dx]
    return jnp.asarray(t.reshape(3 * w_size * cin, w_size * cout), jnp.float32)


def _bn_fold_matrix(w, cout):
    """(W*Cout, W*Cout) matrix: (col sums) @ P = per-channel total at every (x,c)."""
    idx = np.arange(w * cout)
    p = (idx[:, None] % cout == idx[None, :] % cout).astype(np.float32)
    return jnp.asarray(p)


def pack_params(torch_params, channels_list, n_classes, image_size):
    """Pack PyTorch-layout parameters into kernel-ready operands: K-fused banded
    conv weights, BN fold matrices, block-diagonal split 1x1 weight (folds the
    channel concat), flatten-permuted + lane-dense-padded fc weights."""
    n_blocks = len(channels_list) - 1
    block_dims, conv_t, bn_fold = [], [], []
    h = w = image_size
    for i in range(n_blocks):
        cin, cout = channels_list[i], channels_list[i + 1]
        block_dims.append((h, w, cin, cout))
        conv_t.append(_build_conv_toeplitz_fused(torch_params["conv_w"][i], w))
        bn_fold.append(_bn_fold_matrix(w, cout))
        h //= 2
        w //= 2
    hf, wf = h, w
    cx, cs = channels_list[-1], channels_list[1]
    ncls_pad = _lane_dense_classes(n_classes, wf)            # 10 -> 32 (wf*32 = 128)
    hid = int(np.asarray(torch_params["fc1_w"]).shape[0])    # 20
    hid_pad = _round_up(hid, 128)
    out_pad = _round_up(n_classes, 128)

    # 1x1 conv over cat((x, skip)): split the weight at the concat boundary and
    # expand each half into a block-diagonal slab weight (same x column group).
    wobo = np.asarray(torch_params["obo_w"], np.float32)[:, :, 0, 0]   # (ncls, cx+cs)
    bobo = np.asarray(torch_params["obo_b"], np.float32)
    wx = np.zeros((wf * cx, wf * ncls_pad), np.float32)
    ws = np.zeros((wf * cs, wf * ncls_pad), np.float32)
    brow = np.zeros((1, wf * ncls_pad), np.float32)
    for x in range(wf):
        wx[x * cx:(x + 1) * cx, x * ncls_pad:x * ncls_pad + n_classes] = wobo[:, :cx].T
        ws[x * cs:(x + 1) * cs, x * ncls_pad:x * ncls_pad + n_classes] = wobo[:, cx:].T
        brow[0, x * ncls_pad:x * ncls_pad + n_classes] = bobo

    # fc1: fold PyTorch's NCHW flatten and the class padding into the rows so the
    # kernel consumes the (y, x, class_padded) slab-flattened activation directly.
    w1 = np.asarray(torch_params["fc1_w"], np.float32)        # (hid, ncls*hf*wf)
    w1p = np.zeros((hf, wf, ncls_pad, hid_pad), np.float32)
    w1p[:, :, :n_classes, :hid] = np.transpose(
        w1.reshape(hid, n_classes, hf, wf), (2, 3, 1, 0))
    fc1_w = w1p.reshape(hf * wf * ncls_pad, hid_pad)
    fc1_b = np.zeros((1, hid_pad), np.float32)
    fc1_b[0, :hid] = np.asarray(torch_params["fc1_b"], np.float32)

    w2 = np.asarray(torch_params["fc2_w"], np.float32)        # (ncls, hid)
    fc2_w = np.zeros((hid_pad, out_pad), np.float32)
    fc2_w[:hid, :n_classes] = w2.T
    fc2_b = np.zeros((1, out_pad), np.float32)
    fc2_b[0, :n_classes] = np.asarray(torch_params["fc2_b"], np.float32)

    return {
        "n_classes": n_classes,
        "block_dims": block_dims,
        "head_dims": (hf, wf, ncls_pad),
        "out_pad": out_pad,
        "conv_T": conv_t,
        "bn_fold": bn_fold,
        "obo_wx": jnp.asarray(wx),
        "obo_ws": jnp.asarray(ws),
        "obo_b": jnp.asarray(brow),
        "fc1_w": jnp.asarray(fc1_w),
        "fc1_b": jnp.asarray(fc1_b),
        "fc2_w": jnp.asarray(fc2_w),
        "fc2_b": jnp.asarray(fc2_b),
    }


# ---------------------------------------------------------------------------
# Deterministic synthetic parameters (PyTorch layouts)
# ---------------------------------------------------------------------------
def init_torch_params(key, channels_list, n_classes, image_size, pooling_stride):
    keys = iter(jax.random.split(key, 16))
    p = {"conv_w": [], "conv_b": []}
    for i in range(len(channels_list) - 1):
        cin, cout = channels_list[i], channels_list[i + 1]
        p["conv_w"].append(
            0.1 * jax.random.normal(next(keys), (cout, cin, 3, 3), jnp.float32))
        # Conv bias exists in the module but is cancelled by training-mode BN.
        p["conv_b"].append(
            0.1 * jax.random.normal(next(keys), (cout,), jnp.float32))
    ccat = channels_list[1] + channels_list[-1]
    p["obo_w"] = 0.1 * jax.random.normal(next(keys), (n_classes, ccat, 1, 1),
                                         jnp.float32)
    p["obo_b"] = 0.1 * jax.random.normal(next(keys), (n_classes,), jnp.float32)

    sz = image_size
    for _ in range(len(channels_list) - 1):
        sz = math.floor((sz - 1) / pooling_stride)
        if pooling_stride == 2:
            sz += 1
    mlp_in = sz * sz * n_classes
    p["fc1_w"] = 0.1 * jax.random.normal(next(keys), (20, mlp_in), jnp.float32)
    p["fc1_b"] = 0.1 * jax.random.normal(next(keys), (20,), jnp.float32)
    p["fc2_w"] = 0.1 * jax.random.normal(next(keys), (n_classes, 20), jnp.float32)
    p["fc2_b"] = 0.1 * jax.random.normal(next(keys), (n_classes,), jnp.float32)
    return p


if __name__ == "__main__":
    channels_list = [4, 8, 16]
    n_classes = 10
    image_size = 16
    pooling_stride = 2
    batch = 2

    root = jax.random.PRNGKey(0)
    k_x, k_p = jax.random.split(root)
    x = jax.random.normal(
        k_x, (batch, channels_list[0], image_size, image_size), jnp.float32)
    torch_params = init_torch_params(k_p, channels_list, n_classes,
                                     image_size, pooling_stride)
    packed = pack_params(torch_params, channels_list, n_classes, image_size)

    fwd = jax.jit(lambda inp: dynamic_cnn_forward(inp, packed))
    out = jax.block_until_ready(fwd(x))
    assert out.shape == (batch, n_classes), out.shape
    assert bool(jnp.all(jnp.isfinite(out)))
    print("KERNEL_OK")
</pallas_src>

<mosaic_0001>
module attributes {stable_mosaic.version = 11 : i64} {
  func.func @kernel(%arg0: memref<2x16x64xf32, #tpu.memory_space<vmem>>, %arg1: memref<192x128xf32, #tpu.memory_space<vmem>>, %arg2: memref<192x128xf32, #tpu.memory_space<vmem>>, %arg3: memref<128x128xf32, #tpu.memory_space<vmem>>, %arg4: memref<128x128xf32, #tpu.memory_space<vmem>>, %arg5: memref<64x128xf32, #tpu.memory_space<vmem>>, %arg6: memref<32x128xf32, #tpu.memory_space<vmem>>, %arg7: memref<1x128xf32, #tpu.memory_space<vmem>>, %arg8: memref<512x128xf32, #tpu.memory_space<vmem>>, %arg9: memref<1x128xf32, #tpu.memory_space<vmem>>, %arg10: memref<128x128xf32, #tpu.memory_space<vmem>>, %arg11: memref<1x128xf32, #tpu.memory_space<vmem>>, %arg12: memref<2x128xf32, #tpu.memory_space<vmem>>, %arg13: memref<2x18x64xf32, #tpu.memory_space<vmem>>, %arg14: memref<32x192xf32, #tpu.memory_space<vmem>>, %arg15: memref<2x10x64xf32, #tpu.memory_space<vmem>>, %arg16: memref<16x192xf32, #tpu.memory_space<vmem>>) attributes {dimension_semantics = [], scalar_prefetch = 0 : i64, scratch_operands = 4 : i64, tpu.core_type = #tpu.core_type<tc>} {
    %c0 = arith.constant 0 : index
    %c0_0 = arith.constant 0 : index
    %c0_1 = arith.constant 0 : index
    %0 = vector.load %arg0[%c0, %c0_0, %c0_1] : memref<2x16x64xf32, #tpu.memory_space<vmem>>, vector<2x16x64xf32>
    %cst = arith.constant 0.000000e+00 : f32
    %1 = vector.broadcast %cst : f32 to vector<2x1x64xf32>
    %c0_2 = arith.constant 0 : index
    %c0_3 = arith.constant 0 : index
    %c0_4 = arith.constant 0 : index
    %2 = vector.load %arg13[%c0_2, %c0_3, %c0_4] : memref<2x18x64xf32, #tpu.memory_space<vmem>>, vector<2x1x64xf32>
    tpu.vector_store %arg13[%c0_2, %c0_3, %c0_4], %1 {strides = array<i32>} : memref<2x18x64xf32, #tpu.memory_space<vmem>>, vector<2x1x64xf32>,
    %c0_5 = arith.constant 0 : index
    %c17 = arith.constant 17 : index
    %c0_6 = arith.constant 0 : index
    %3 = vector.load %arg13[%c0_5, %c17, %c0_6] : memref<2x18x64xf32, #tpu.memory_space<vmem>>, vector<2x1x64xf32>
    tpu.vector_store %arg13[%c0_5, %c17, %c0_6], %1 {strides = array<i32>} : memref<2x18x64xf32, #tpu.memory_space<vmem>>, vector<2x1x64xf32>,
    %c0_7 = arith.constant 0 : index
    %c1 = arith.constant 1 : index
    %c0_8 = arith.constant 0 : index
    %4 = vector.load %arg13[%c0_7, %c1, %c0_8] : memref<2x18x64xf32, #tpu.memory_space<vmem>>, vector<2x16x64xf32>
    tpu.vector_store %arg13[%c0_7, %c1, %c0_8], %0 {strides = array<i32>} : memref<2x18x64xf32, #tpu.memory_space<vmem>>, vector<2x16x64xf32>,
    %c0_9 = arith.constant 0 : index
    %c0_10 = arith.constant 0 : index
    %c0_11 = arith.constant 0 : index
    %5 = vector.load %arg13[%c0_9, %c0_10, %c0_11] : memref<2x18x64xf32, #tpu.memory_space<vmem>>, vector<2x16x64xf32>
    %6 = vector.shape_cast %5 : vector<2x16x64xf32> to vector<32x64xf32>
    %c0_12 = arith.constant 0 : index
    %c0_13 = arith.constant 0 : index
    %7 = vector.load %arg14[%c0_12, %c0_13] : memref<32x192xf32, #tpu.memory_space<vmem>>, vector<32x64xf32>
    tpu.vector_store %arg14[%c0_12, %c0_13], %6 {strides = array<i32>} : memref<32x192xf32, #tpu.memory_space<vmem>>, vector<32x64xf32>,
    %c0_14 = arith.constant 0 : index
    %c1_15 = arith.constant 1 : index
    %c0_16 = arith.constant 0 : index
    %8 = vector.load %arg13[%c0_14, %c1_15, %c0_16] : memref<2x18x64xf32, #tpu.memory_space<vmem>>, vector<2x16x64xf32>
    %9 = vector.shape_cast %8 : vector<2x16x64xf32> to vector<32x64xf32>
    %c0_17 = arith.constant 0 : index
    %c64 = arith.constant 64 : index
    %10 = vector.load %arg14[%c0_17, %c64] : memref<32x192xf32, #tpu.memory_space<vmem>>, vector<32x64xf32>
    tpu.vector_store %arg14[%c0_17, %c64], %9 {strides = array<i32>} : memref<32x192xf32, #tpu.memory_space<vmem>>, vector<32x64xf32>,
    %c0_18 = arith.constant 0 : index
    %c2 = arith.constant 2 : index
    %c0_19 = arith.constant 0 : index
    %11 = vector.load %arg13[%c0_18, %c2, %c0_19] : memref<2x18x64xf32, #tpu.memory_space<vmem>>, vector<2x16x64xf32>
    %12 = vector.shape_cast %11 : vector<2x16x64xf32> to vector<32x64xf32>
    %c0_20 = arith.constant 0 : index
    %c128 = arith.constant 128 : index
    %13 = vector.load %arg14[%c0_20, %c128] : memref<32x192xf32, #tpu.memory_space<vmem>>, vector<32x64xf32>
    tpu.vector_store %arg14[%c0_20, %c128], %12 {strides = array<i32>} : memref<32x192xf32, #tpu.memory_space<vmem>>, vector<32x64xf32>,
    %c0_21 = arith.constant 0 : index
    %c0_22 = arith.constant 0 : index
    %14 = vector.load %arg14[%c0_21, %c0_22] : memref<32x192xf32, #tpu.memory_space<vmem>>, vector<32x192xf32>
    %c0_23 = arith.constant 0 : index
    %c0_24 = arith.constant 0 : index
    %15 = vector.load %arg1[%c0_23, %c0_24] : memref<192x128xf32, #tpu.memory_space<vmem>>, vector<192x128xf32>
    %cst_25 = arith.constant dense<0.000000e+00> : vector<32x128xf32>
    %16 = tpu.matmul %14, %15, %cst_25 {dimension_numbers = #tpu.dot_dimension_numbers<[1], [0], [0], [1], [0, 0, 1, 1], [], []>} : vector<32x192xf32>, vector<192x128xf32>, vector<32x128xf32> -> vector<32x128xf32>
    %cst_26 = arith.constant dense<0.000000e+00> : vector<128xf32>
    %17 = vector.multi_reduction <add>, %16, %cst_26 [0] : vector<32x128xf32> to vector<128xf32>
    %18 = vector.shape_cast %17 : vector<128xf32> to vector<1x128xf32>
    %19 = arith.mulf %16, %16 : vector<32x128xf32>
    %cst_27 = arith.constant dense<0.000000e+00> : vector<128xf32>
    %20 = vector.multi_reduction <add>, %19, %cst_27 [0] : vector<32x128xf32> to vector<128xf32>
    %21 = vector.shape_cast %20 : vector<128xf32> to vector<1x128xf32>
    %c0_28 = arith.constant 0 : index
    %c0_29 = arith.constant 0 : index
    %22 = vector.load %arg3[%c0_28, %c0_29] : memref<128x128xf32, #tpu.memory_space<vmem>>, vector<128x128xf32>
    %cst_30 = arith.constant dense<0.000000e+00> : vector<1x128xf32>
    %23 = tpu.matmul %18, %22, %cst_30 {dimension_numbers = #tpu.dot_dimension_numbers<[1], [0], [0], [1], [0, 0, 1, 1], [], []>} : vector<1x128xf32>, vector<128x128xf32>, vector<1x128xf32> -> vector<1x128xf32>
    %cst_31 = arith.constant 0.001953125 : f32
    %24 = vector.broadcast %cst_31 : f32 to vector<1x128xf32>
    %25 = arith.mulf %23, %24 : vector<1x128xf32>
    %c0_32 = arith.constant 0 : index
    %c0_33 = arith.constant 0 : index
    %26 = vector.load %arg3[%c0_32, %c0_33] : memref<128x128xf32, #tpu.memory_space<vmem>>, vector<128x128xf32>
    %cst_34 = arith.constant dense<0.000000e+00> : vector<1x128xf32>
    %27 = tpu.matmul %21, %26, %cst_34 {dimension_numbers = #tpu.dot_dimension_numbers<[1], [0], [0], [1], [0, 0, 1, 1], [], []>} : vector<1x128xf32>, vector<128x128xf32>, vector<1x128xf32> -> vector<1x128xf32>
    %cst_35 = arith.constant 0.001953125 : f32
    %28 = vector.broadcast %cst_35 : f32 to vector<1x128xf32>
    %29 = arith.mulf %27, %28 : vector<1x128xf32>
    %30 = arith.mulf %25, %25 : vector<1x128xf32>
    %31 = arith.subf %29, %30 : vector<1x128xf32>
    %cst_36 = arith.constant 0.000000e+00 : f32
    %32 = vector.broadcast %cst_36 : f32 to vector<1x128xf32>
    %33 = arith.maximumf %31, %32 : vector<1x128xf32>
    %34 = vector.broadcast %25 : vector<1x128xf32> to vector<32x128xf32>
    %35 = arith.subf %16, %34 : vector<32x128xf32>
    %cst_37 = arith.constant 9.99999974E-6 : f32
    %36 = vector.broadcast %cst_37 : f32 to vector<1x128xf32>
    %37 = arith.addf %33, %36 : vector<1x128xf32>
    %38 = math.rsqrt %37 : vector<1x128xf32>
    %39 = vector.broadcast %38 : vector<1x128xf32> to vector<32x128xf32>
    %40 = arith.mulf %35, %39 : vector<32x128xf32>
    %cst_38 = arith.constant 0.000000e+00 : f32
    %41 = vector.broadcast %cst_38 : f32 to vector<32x128xf32>
    %42 = arith.maximumf %40, %41 : vector<32x128xf32>
    %43 = vector.shape_cast %42 : vector<32x128xf32> to vector<16x2x128xf32>
    %44 = vector.extract_strided_slice %43 {offsets = [0, 0, 0], sizes = [16, 1, 128], strides = [1, 1, 1]} : vector<16x2x128xf32> to vector<16x1x128xf32>
    %45 = vector.shape_cast %44 : vector<16x1x128xf32> to vector<16x128xf32>
    %46 = vector.extract_strided_slice %43 {offsets = [0, 1, 0], sizes = [16, 1, 128], strides = [1, 1, 1]} : vector<16x2x128xf32> to vector<16x1x128xf32>
    %47 = vector.shape_cast %46 : vector<16x1x128xf32> to vector<16x128xf32>
    %48 = arith.maximumf %45, %47 : vector<16x128xf32>
    %49 = vector.shape_cast %48 : vector<16x128xf32> to vector<16x8x16xf32>
    %50 = vector.extract_strided_slice %49 {offsets = [0, 0, 0], sizes = [16, 8, 8], strides = [1, 1, 1]} : vector<16x8x16xf32> to vector<16x8x8xf32>
    %51 = vector.extract_strided_slice %49 {offsets = [0, 0, 8], sizes = [16, 8, 8], strides = [1, 1, 1]} : vector<16x8x16xf32> to vector<16x8x8xf32>
    %52 = arith.maximumf %50, %51 : vector<16x8x8xf32>
    %53 = vector.shape_cast %52 : vector<16x8x8xf32> to vector<16x64xf32>
    %cst_39 = arith.constant 0.000000e+00 : f32
    %54 = vector.broadcast %cst_39 : f32 to vector<2x1x64xf32>
    %c0_40 = arith.constant 0 : index
    %c0_41 = arith.constant 0 : index
    %c0_42 = arith.constant 0 : index
    %55 = vector.load %arg15[%c0_40, %c0_41, %c0_42] : memref<2x10x64xf32, #tpu.memory_space<vmem>>, vector<2x1x64xf32>
    tpu.vector_store %arg15[%c0_40, %c0_41, %c0_42], %54 {strides = array<i32>} : memref<2x10x64xf32, #tpu.memory_space<vmem>>, vector<2x1x64xf32>,
    %c0_43 = arith.constant 0 : index
    %c9 = arith.constant 9 : index
    %c0_44 = arith.constant 0 : index
    %56 = vector.load %arg15[%c0_43, %c9, %c0_44] : memref<2x10x64xf32, #tpu.memory_space<vmem>>, vector<2x1x64xf32>
    tpu.vector_store %arg15[%c0_43, %c9, %c0_44], %54 {strides = array<i32>} : memref<2x10x64xf32, #tpu.memory_space<vmem>>, vector<2x1x64xf32>,
    %57 = vector.shape_cast %53 : vector<16x64xf32> to vector<2x8x64xf32>
    %c0_45 = arith.constant 0 : index
    %c1_46 = arith.constant 1 : index
    %c0_47 = arith.constant 0 : index
    %58 = vector.load %arg15[%c0_45, %c1_46, %c0_47] : memref<2x10x64xf32, #tpu.memory_space<vmem>>, vector<2x8x64xf32>
    tpu.vector_store %arg15[%c0_45, %c1_46, %c0_47], %57 {strides = array<i32>} : memref<2x10x64xf32, #tpu.memory_space<vmem>>, vector<2x8x64xf32>,
    %c0_48 = arith.constant 0 : index
    %c0_49 = arith.constant 0 : index
    %c0_50 = arith.constant 0 : index
    %59 = vector.load %arg15[%c0_48, %c0_49, %c0_50] : memref<2x10x64xf32, #tpu.memory_space<vmem>>, vector<2x8x64xf32>
    %60 = vector.shape_cast %59 : vector<2x8x64xf32> to vector<16x64xf32>
    %c0_51 = arith.constant 0 : index
    %c0_52 = arith.constant 0 : index
    %61 = vector.load %arg16[%c0_51, %c0_52] : memref<16x192xf32, #tpu.memory_space<vmem>>, vector<16x64xf32>
    tpu.vector_store %arg16[%c0_51, %c0_52], %60 {strides = array<i32>} : memref<16x192xf32, #tpu.memory_space<vmem>>, vector<16x64xf32>,
    %c0_53 = arith.constant 0 : index
    %c1_54 = arith.constant 1 : index
    %c0_55 = arith.constant 0 : index
    %62 = vector.load %arg15[%c0_53, %c1_54, %c0_55] : memref<2x10x64xf32, #tpu.memory_space<vmem>>, vector<2x8x64xf32>
    %63 = vector.shape_cast %62 : vector<2x8x64xf32> to vector<16x64xf32>
    %c0_56 = arith.constant 0 : index
    %c64_57 = arith.constant 64 : index
    %64 = vector.load %arg16[%c0_56, %c64_57] : memref<16x192xf32, #tpu.memory_space<vmem>>, vector<16x64xf32>
    tpu.vector_store %arg16[%c0_56, %c64_57], %63 {strides = array<i32>} : memref<16x192xf32, #tpu.memory_space<vmem>>, vector<16x64xf32>,
    %c0_58 = arith.constant 0 : index
    %c2_59 = arith.constant 2 : index
    %c0_60 = arith.constant 0 : index
    %65 = vector.load %arg15[%c0_58, %c2_59, %c0_60] : memref<2x10x64xf32, #tpu.memory_space<vmem>>, vector<2x8x64xf32>
    %66 = vector.shape_cast %65 : vector<2x8x64xf32> to vector<16x64xf32>
    %c0_61 = arith.constant 0 : index
    %c128_62 = arith.constant 128 : index
    %67 = vector.load %arg16[%c0_61, %c128_62] : memref<16x192xf32, #tpu.memory_space<vmem>>, vector<16x64xf32>
    tpu.vector_store %arg16[%c0_61, %c128_62], %66 {strides = array<i32>} : memref<16x192xf32, #tpu.memory_space<vmem>>, vector<16x64xf32>,
    %c0_63 = arith.constant 0 : index
    %c0_64 = arith.constant 0 : index
    %68 = vector.load %arg16[%c0_63, %c0_64] : memref<16x192xf32, #tpu.memory_space<vmem>>, vector<16x192xf32>
    %c0_65 = arith.constant 0 : index
    %c0_66 = arith.constant 0 : index
    %69 = vector.load %arg2[%c0_65, %c0_66] : memref<192x128xf32, #tpu.memory_space<vmem>>, vector<192x128xf32>
    %cst_67 = arith.constant dense<0.000000e+00> : vector<16x128xf32>
    %70 = tpu.matmul %68, %69, %cst_67 {dimension_numbers = #tpu.dot_dimension_numbers<[1], [0], [0], [1], [0, 0, 1, 1], [], []>} : vector<16x192xf32>, vector<192x128xf32>, vector<16x128xf32> -> vector<16x128xf32>
    %cst_68 = arith.constant dense<0.000000e+00> : vector<128xf32>
    %71 = vector.multi_reduction <add>, %70, %cst_68 [0] : vector<16x128xf32> to vector<128xf32>
    %72 = vector.shape_cast %71 : vector<128xf32> to vector<1x128xf32>
    %73 = arith.mulf %70, %70 : vector<16x128xf32>
    %cst_69 = arith.constant dense<0.000000e+00> : vector<128xf32>
    %74 = vector.multi_reduction <add>, %73, %cst_69 [0] : vector<16x128xf32> to vector<128xf32>
    %75 = vector.shape_cast %74 : vector<128xf32> to vector<1x128xf32>
    %c0_70 = arith.constant 0 : index
    %c0_71 = arith.constant 0 : index
    %76 = vector.load %arg4[%c0_70, %c0_71] : memref<128x128xf32, #tpu.memory_space<vmem>>, vector<128x128xf32>
    %cst_72 = arith.constant dense<0.000000e+00> : vector<1x128xf32>
    %77 = tpu.matmul %72, %76, %cst_72 {dimension_numbers = #tpu.dot_dimension_numbers<[1], [0], [0], [1], [0, 0, 1, 1], [], []>} : vector<1x128xf32>, vector<128x128xf32>, vector<1x128xf32> -> vector<1x128xf32>
    %cst_73 = arith.constant 7.812500e-03 : f32
    %78 = vector.broadcast %cst_73 : f32 to vector<1x128xf32>
    %79 = arith.mulf %77, %78 : vector<1x128xf32>
    %c0_74 = arith.constant 0 : index
    %c0_75 = arith.constant 0 : index
    %80 = vector.load %arg4[%c0_74, %c0_75] : memref<128x128xf32, #tpu.memory_space<vmem>>, vector<128x128xf32>
    %cst_76 = arith.constant dense<0.000000e+00> : vector<1x128xf32>
    %81 = tpu.matmul %75, %80, %cst_76 {dimension_numbers = #tpu.dot_dimension_numbers<[1], [0], [0], [1], [0, 0, 1, 1], [], []>} : vector<1x128xf32>, vector<128x128xf32>, vector<1x128xf32> -> vector<1x128xf32>
    %cst_77 = arith.constant 7.812500e-03 : f32
    %82 = vector.broadcast %cst_77 : f32 to vector<1x128xf32>
    %83 = arith.mulf %81, %82 : vector<1x128xf32>
    %84 = arith.mulf %79, %79 : vector<1x128xf32>
    %85 = arith.subf %83, %84 : vector<1x128xf32>
    %cst_78 = arith.constant 0.000000e+00 : f32
    %86 = vector.broadcast %cst_78 : f32 to vector<1x128xf32>
    %87 = arith.maximumf %85, %86 : vector<1x128xf32>
    %88 = vector.broadcast %79 : vector<1x128xf32> to vector<16x128xf32>
    %89 = arith.subf %70, %88 : vector<16x128xf32>
    %cst_79 = arith.constant 9.99999974E-6 : f32
    %90 = vector.broadcast %cst_79 : f32 to vector<1x128xf32>
    %91 = arith.addf %87, %90 : vector<1x128xf32>
    %92 = math.rsqrt %91 : vector<1x128xf32>
    %93 = vector.broadcast %92 : vector<1x128xf32> to vector<16x128xf32>
    %94 = arith.mulf %89, %93 : vector<16x128xf32>
    %cst_80 = arith.constant 0.000000e+00 : f32
    %95 = vector.broadcast %cst_80 : f32 to vector<16x128xf32>
    %96 = arith.maximumf %94, %95 : vector<16x128xf32>
    %97 = vector.shape_cast %96 : vector<16x128xf32> to vector<8x2x128xf32>
    %98 = vector.extract_strided_slice %97 {offsets = [0, 0, 0], sizes = [8, 1, 128], strides = [1, 1, 1]} : vector<8x2x128xf32> to vector<8x1x128xf32>
    %99 = vector.shape_cast %98 : vector<8x1x128xf32> to vector<8x128xf32>
    %100 = vector.extract_strided_slice %97 {offsets = [0, 1, 0], sizes = [8, 1, 128], strides = [1, 1, 1]} : vector<8x2x128xf32> to vector<8x1x128xf32>
    %101 = vector.shape_cast %100 : vector<8x1x128xf32> to vector<8x128xf32>
    %102 = arith.maximumf %99, %101 : vector<8x128xf32>
    %103 = vector.shape_cast %102 : vector<8x128xf32> to vector<8x4x32xf32>
    %104 = vector.extract_strided_slice %103 {offsets = [0, 0, 0], sizes = [8, 4, 16], strides = [1, 1, 1]} : vector<8x4x32xf32> to vector<8x4x16xf32>
    %105 = vector.extract_strided_slice %103 {offsets = [0, 0, 16], sizes = [8, 4, 16], strides = [1, 1, 1]} : vector<8x4x32xf32> to vector<8x4x16xf32>
    %106 = arith.maximumf %104, %105 : vector<8x4x16xf32>
    %107 = vector.shape_cast %106 : vector<8x4x16xf32> to vector<8x64xf32>
    %108 = vector.shape_cast %53 : vector<16x64xf32> to vector<8x2x64xf32>
    %109 = vector.extract_strided_slice %108 {offsets = [0, 0, 0], sizes = [8, 1, 64], strides = [1, 1, 1]} : vector<8x2x64xf32> to vector<8x1x64xf32>
    %110 = vector.shape_cast %109 : vector<8x1x64xf32> to vector<8x64xf32>
    %111 = vector.extract_strided_slice %108 {offsets = [0, 1, 0], sizes = [8, 1, 64], strides = [1, 1, 1]} : vector<8x2x64xf32> to vector<8x1x64xf32>
    %112 = vector.shape_cast %111 : vector<8x1x64xf32> to vector<8x64xf32>
    %113 = arith.maximumf %110, %112 : vector<8x64xf32>
    %114 = vector.shape_cast %113 : vector<8x64xf32> to vector<8x4x16xf32>
    %115 = vector.extract_strided_slice %114 {offsets = [0, 0, 0], sizes = [8, 4, 8], strides = [1, 1, 1]} : vector<8x4x16xf32> to vector<8x4x8xf32>
    %116 = vector.extract_strided_slice %114 {offsets = [0, 0, 8], sizes = [8, 4, 8], strides = [1, 1, 1]} : vector<8x4x16xf32> to vector<8x4x8xf32>
    %117 = arith.maximumf %115, %116 : vector<8x4x8xf32>
    %118 = vector.shape_cast %117 : vector<8x4x8xf32> to vector<8x32xf32>
    %c0_81 = arith.constant 0 : index
    %c0_82 = arith.constant 0 : index
    %119 = vector.load %arg5[%c0_81, %c0_82] : memref<64x128xf32, #tpu.memory_space<vmem>>, vector<64x128xf32>
    %cst_83 = arith.constant dense<0.000000e+00> : vector<8x128xf32>
    %120 = tpu.matmul %107, %119, %cst_83 {dimension_numbers = #tpu.dot_dimension_numbers<[1], [0], [0], [1], [0, 0, 1, 1], [], []>} : vector<8x64xf32>, vector<64x128xf32>, vector<8x128xf32> -> vector<8x128xf32>
    %c0_84 = arith.constant 0 : index
    %c0_85 = arith.constant 0 : index
    %121 = vector.load %arg6[%c0_84, %c0_85] : memref<32x128xf32, #tpu.memory_space<vmem>>, vector<32x128xf32>
    %cst_86 = arith.constant dense<0.000000e+00> : vector<8x128xf32>
    %122 = tpu.matmul %118, %121, %cst_86 {dimension_numbers = #tpu.dot_dimension_numbers<[1], [0], [0], [1], [0, 0, 1, 1], [], []>} : vector<8x32xf32>, vector<32x128xf32>, vector<8x128xf32> -> vector<8x128xf32>
    %123 = arith.addf %120, %122 : vector<8x128xf32>
    %c0_87 = arith.constant 0 : index
    %c0_88 = arith.constant 0 : index
    %124 = vector.load %arg7[%c0_87, %c0_88] : memref<1x128xf32, #tpu.memory_space<vmem>>, vector<1x128xf32>
    %125 = vector.broadcast %124 : vector<1x128xf32> to vector<8x128xf32>
    %126 = arith.addf %123, %125 : vector<8x128xf32>
    %cst_89 = arith.constant 0.000000e+00 : f32
    %127 = vector.broadcast %cst_89 : f32 to vector<8x128xf32>
    %128 = arith.cmpf ogt, %126, %127 : vector<8x128xf32>
    %cst_90 = arith.constant 2.000000e-01 : f32
    %129 = vector.broadcast %cst_90 : f32 to vector<8x128xf32>
    %130 = arith.mulf %129, %126 : vector<8x128xf32>
    %131 = arith.select %128, %126, %130 : vector<8x128xi1>, vector<8x128xf32>
    %132 = vector.shape_cast %131 : vector<8x128xf32> to vector<2x512xf32>
    %c0_91 = arith.constant 0 : index
    %c0_92 = arith.constant 0 : index
    %133 = vector.load %arg8[%c0_91, %c0_92] : memref<512x128xf32, #tpu.memory_space<vmem>>, vector<512x128xf32>
    %cst_93 = arith.constant dense<0.000000e+00> : vector<2x128xf32>
    %134 = tpu.matmul %132, %133, %cst_93 {dimension_numbers = #tpu.dot_dimension_numbers<[1], [0], [0], [1], [0, 0, 1, 1], [], []>} : vector<2x512xf32>, vector<512x128xf32>, vector<2x128xf32> -> vector<2x128xf32>
    %c0_94 = arith.constant 0 : index
    %c0_95 = arith.constant 0 : index
    %135 = vector.load %arg9[%c0_94, %c0_95] : memref<1x128xf32, #tpu.memory_space<vmem>>, vector<1x128xf32>
    %136 = vector.broadcast %135 : vector<1x128xf32> to vector<2x128xf32>
    %137 = arith.addf %134, %136 : vector<2x128xf32>
    %cst_96 = arith.constant 0.000000e+00 : f32
    %138 = vector.broadcast %cst_96 : f32 to vector<2x128xf32>
    %139 = arith.maximumf %137, %138 : vector<2x128xf32>
    %cst_97 = arith.constant dense<0.000000e+00> : vector<128xf32>
    %140 = vector.multi_reduction <add>, %139, %cst_97 [0] : vector<2x128xf32> to vector<128xf32>
    %141 = vector.shape_cast %140 : vector<128xf32> to vector<1x128xf32>
    %cst_98 = arith.constant 2.000000e+00 : f32
    %142 = vector.broadcast %cst_98 : f32 to vector<1x128xf32>
    %143 = arith.divf %141, %142 : vector<1x128xf32>
    %144 = arith.mulf %139, %139 : vector<2x128xf32>
    %cst_99 = arith.constant dense<0.000000e+00> : vector<128xf32>
    %145 = vector.multi_reduction <add>, %144, %cst_99 [0] : vector<2x128xf32> to vector<128xf32>
    %146 = vector.shape_cast %145 : vector<128xf32> to vector<1x128xf32>
    %cst_100 = arith.constant 2.000000e+00 : f32
    %147 = vector.broadcast %cst_100 : f32 to vector<1x128xf32>
    %148 = arith.divf %146, %147 : vector<1x128xf32>
    %149 = arith.mulf %143, %143 : vector<1x128xf32>
    %150 = arith.subf %148, %149 : vector<1x128xf32>
    %cst_101 = arith.constant 0.000000e+00 : f32
    %151 = vector.broadcast %cst_101 : f32 to vector<1x128xf32>
    %152 = arith.maximumf %150, %151 : vector<1x128xf32>
    %153 = vector.broadcast %143 : vector<1x128xf32> to vector<2x128xf32>
    %154 = arith.subf %139, %153 : vector<2x128xf32>
    %cst_102 = arith.constant 9.99999974E-6 : f32
    %155 = vector.broadcast %cst_102 : f32 to vector<1x128xf32>
    %156 = arith.addf %152, %155 : vector<1x128xf32>
    %157 = math.rsqrt %156 : vector<1x128xf32>
    %158 = vector.broadcast %157 : vector<1x128xf32> to vector<2x128xf32>
    %159 = arith.mulf %154, %158 : vector<2x128xf32>
    %c0_103 = arith.constant 0 : index
    %c0_104 = arith.constant 0 : index
    %160 = vector.load %arg10[%c0_103, %c0_104] : memref<128x128xf32, #tpu.memory_space<vmem>>, vector<128x128xf32>
    %cst_105 = arith.constant dense<0.000000e+00> : vector<2x128xf32>
    %161 = tpu.matmul %159, %160, %cst_105 {dimension_numbers = #tpu.dot_dimension_numbers<[1], [0], [0], [1], [0, 0, 1, 1], [], []>} : vector<2x128xf32>, vector<128x128xf32>, vector<2x128xf32> -> vector<2x128xf32>
    %c0_106 = arith.constant 0 : index
    %c0_107 = arith.constant 0 : index
    %162 = vector.load %arg11[%c0_106, %c0_107] : memref<1x128xf32, #tpu.memory_space<vmem>>, vector<1x128xf32>
    %163 = vector.broadcast %162 : vector<1x128xf32> to vector<2x128xf32>
    %164 = arith.addf %161, %163 : vector<2x128xf32>
    %c0_108 = arith.constant 0 : index
    %c0_109 = arith.constant 0 : index
    %165 = vector.load %arg12[%c0_108, %c0_109] : memref<2x128xf32, #tpu.memory_space<vmem>>, vector<2x128xf32>
    tpu.vector_store %arg12[%c0_108, %c0_109], %164 {strides = array<i32>} : memref<2x128xf32, #tpu.memory_space<vmem>>, vector<2x128xf32>,
    return
  }
}

</mosaic_0001>

<llo_original>
// kernel: _lambda_.1
$region0: #{_lambda_.1}
  #allocation0 [shape = 'u32[]', space=smem, size = 0x4, offset = 0x4, fixed_abs, tag = 'smem constant byte address 0x4 - core index']
  #allocation1 [shape = 'u32[144,128]{1,0:T(1,128)}', space=vmem, size = 0x12000, scoped, tag = 'internal scratch']
  #allocation2 [shape = 'f32[2,18,64]{2,1,0:T(8,128)}', space=vmem, size = 0x6000, scoped, tag = 'scratch operand']
  #allocation3 [shape = 'f32[32,192]{1,0:T(8,128)}', space=vmem, size = 0x8000, scoped, tag = 'scratch operand']
  #allocation4 [shape = 'f32[2,10,64]{2,1,0:T(8,128)}', space=vmem, size = 0x4000, scoped, tag = 'scratch operand']
  #allocation5 [shape = 'f32[16,192]{1,0:T(8,128)}', space=vmem, size = 0x4000, scoped, tag = 'scratch operand']
  %s0 = inlined_call_operand.vmem [shape: f32[2,16,64], index: 0, kind: input, shape index: {}]
  %s1 = inlined_call_operand.vmem [shape: f32[192,128], index: 1, kind: input, shape index: {}]
  %s2 = inlined_call_operand.vmem [shape: f32[192,128], index: 2, kind: input, shape index: {}]
  %s3 = inlined_call_operand.hbm [shape: f32[128,128], index: 3, kind: input, shape index: {}]
  %s4 = inlined_call_operand.hbm [shape: f32[128,128], index: 4, kind: input, shape index: {}]
  %s5 = inlined_call_operand.hbm [shape: f32[64,128], index: 5, kind: input, shape index: {}]
  %s6 = inlined_call_operand.vmem [shape: f32[32,128], index: 6, kind: input, shape index: {}]
  %s7 = inlined_call_operand.vmem [shape: f32[1,128], index: 7, kind: input, shape index: {}]
  %s8 = inlined_call_operand.hbm [shape: f32[512,128], index: 8, kind: input, shape index: {}]
  %s9 = inlined_call_operand.vmem [shape: f32[1,128], index: 9, kind: input, shape index: {}]
  %s10 = inlined_call_operand.hbm [shape: f32[128,128], index: 10, kind: input, shape index: {}]
  %s11 = inlined_call_operand.vmem [shape: f32[1,128], index: 11, kind: input, shape index: {}]
  %s12 = inlined_call_operand.hbm [shape: f32[2,128], index: 12, kind: output, shape index: {}]
  %s13 = sld [smem:[#allocation0]]
  $region78: #{_lambda_.1} parent=0
    _
  %s15 = ssub.s32 1, %s13
  %s16 = scalar_select 0, %s15, %s13
  $region1: #{_lambda_.1} parent=0
    #allocation6 [shape = 'u8[65536]{0}', space=vmem, size = 0x10000, scoped, tag = 'input window, operand 3, single buffered']
    #allocation7 [shape = 's32[1]{0}', space=sflag, size = 0x4, scoped, tag = 'scoped memory for _lambda_.1']
    #allocation8 [shape = 's32[1]{0}', space=sflag, size = 0x4, scoped, tag = 'scoped memory for _lambda_.1']
    #allocation9 [shape = 'u8[65536]{0}', space=vmem, size = 0x10000, scoped, tag = 'input window, operand 4, single buffered']
    #allocation10 [shape = 's32[1]{0}', space=sflag, size = 0x4, scoped, tag = 'scoped memory for _lambda_.1']
    #allocation11 [shape = 'u8[32768]{0}', space=vmem, size = 0x8000, scoped, tag = 'input window, operand 5, single buffered']
    #allocation12 [shape = 'u8[262144]{0}', space=vmem, size = 0x40000, scoped, tag = 'input window, operand 8, single buffered']
    #allocation13 [shape = 's32[1]{0}', space=sflag, size = 0x4, scoped, tag = 'scoped memory for _lambda_.1']
    #allocation14 [shape = 'u8[65536]{0}', space=vmem, size = 0x10000, scoped, tag = 'input window, operand 10, single buffered']
    #allocation15 [shape = 'u8[1024]{0}', space=vmem, size = 0x400, scoped, tag = 'output window, operand 0, single buffered']
    %17 = vsyncpa [#allocation7], 0
    %18 = vsyncpa [#allocation10], 0
    %19 = vsyncpa [#allocation13], 0
    %20 = vsyncpa [#allocation8], 0
    // Predicated region
    $region2: #{_lambda_.1} parent=1 // pred_check
      _
    $region3: #{_lambda_.1} parent=1 // pred_check_branch
      %22 = sbr.rel (0) target = $region5
    $region4: #{_lambda_.1} parent=1 // pred_region
      _
    $region5: #{_lambda_.1} parent=1 // pred_fallthru
      _
    // Predicated region
    $region6: #{_lambda_.1} parent=1 // pred_check
      _
    $region7: #{_lambda_.1} parent=1 // pred_check_branch
      %24 = sbr.rel (0) target = $region9
    $region8: #{_lambda_.1} parent=1 // pred_region
      _
    $region9: #{_lambda_.1} parent=1 // pred_fallthru
      _
    // Predicated region
    $region10: #{_lambda_.1} parent=1 // pred_check
      _
    $region11: #{_lambda_.1} parent=1 // pred_check_branch
      %26 = sbr.rel (0) target = $region13
    $region12: #{_lambda_.1} parent=1 // pred_region
      _
    $region13: #{_lambda_.1} parent=1 // pred_fallthru
      _
    // Predicated region
    $region14: #{_lambda_.1} parent=1 // pred_check
      _
    $region15: #{_lambda_.1} parent=1 // pred_check_branch
      %28 = sbr.rel (0) target = $region17
    $region16: #{_lambda_.1} parent=1 // pred_region
      %s30 = ssub.s32 2048, 2048
      %31 = vsyncadd [#allocation7], %s30
      %s32 = sshll.u32 [#allocation6], 4
      %s33 = int_to_ptr.vmem [resolvable:$true] %s32
      %38 = dma.hbm_to_vmem [thread:$0]  %s3, 2048, %s33, [#allocation7], 128, 128, 8
    $region17: #{_lambda_.1} parent=1 // pred_fallthru
      _
    // Predicated region
    $region18: #{_lambda_.1} parent=1 // pred_check
      _
    $region19: #{_lambda_.1} parent=1 // pred_check_branch
      %40 = sbr.rel (0) target = $region21
    $region20: #{_lambda_.1} parent=1 // pred_region
      %s42 = ssub.s32 2048, 2048
      %43 = vsyncadd [#allocation10], %s42
      %s44 = sshll.u32 [#allocation9], 4
      %s45 = int_to_ptr.vmem [resolvable:$true] %s44
      %50 = dma.hbm_to_vmem [thread:$0]  %s4, 2048, %s45, [#allocation10], 128, 128, 8
    $region21: #{_lambda_.1} parent=1 // pred_fallthru
      _
    // Predicated region
    $region22: #{_lambda_.1} parent=1 // pred_check
      _
    $region23: #{_lambda_.1} parent=1 // pred_check_branch
      %52 = sbr.rel (0) target = $region25
    $region24: #{_lambda_.1} parent=1 // pred_region
      %s54 = ssub.s32 1024, 1024
      %55 = vsyncadd [#allocation10], %s54
      %s56 = sshll.u32 [#allocation11], 4
      %s57 = int_to_ptr.vmem [resolvable:$true] %s56
      %62 = dma.hbm_to_vmem [thread:$0]  %s5, 1024, %s57, [#allocation10], 128, 128, 8
    $region25: #{_lambda_.1} parent=1 // pred_fallthru
      _
    // Predicated region
    $region26: #{_lambda_.1} parent=1 // pred_check
      _
    $region27: #{_lambda_.1} parent=1 // pred_check_branch
      %64 = sbr.rel (0) target = $region29
    $region28: #{_lambda_.1} parent=1 // pred_region
      _
    $region29: #{_lambda_.1} parent=1 // pred_fallthru
      _
    // Predicated region
    $region30: #{_lambda_.1} parent=1 // pred_check
      _
    $region31: #{_lambda_.1} parent=1 // pred_check_branch
      %66 = sbr.rel (0) target = $region33
    $region32: #{_lambda_.1} parent=1 // pred_region
      _
    $region33: #{_lambda_.1} parent=1 // pred_fallthru
      _
    // Predicated region
    $region34: #{_lambda_.1} parent=1 // pred_check
      _
    $region35: #{_lambda_.1} parent=1 // pred_check_branch
      %68 = sbr.rel (0) target = $region37
    $region36: #{_lambda_.1} parent=1 // pred_region
      %s70 = ssub.s32 8192, 8192
      %71 = vsyncadd [#allocation13], %s70
      %s72 = sshll.u32 [#allocation12], 4
      %s73 = int_to_ptr.vmem [resolvable:$true] %s72
      %78 = dma.hbm_to_vmem [thread:$0]  %s8, 8192, %s73, [#allocation13], 128, 128, 8
    $region37: #{_lambda_.1} parent=1 // pred_fallthru
      _
    // Predicated region
    $region38: #{_lambda_.1} parent=1 // pred_check
      _
    $region39: #{_lambda_.1} parent=1 // pred_check_branch
      %80 = sbr.rel (0) target = $region41
    $region40: #{_lambda_.1} parent=1 // pred_region
      _
    $region41: #{_lambda_.1} parent=1 // pred_fallthru
      _
    // Predicated region
    $region42: #{_lambda_.1} parent=1 // pred_check
      _
    $region43: #{_lambda_.1} parent=1 // pred_check_branch
      %82 = sbr.rel (0) target = $region45
    $region44: #{_lambda_.1} parent=1 // pred_region
      %s84 = ssub.s32 2048, 2048
      %85 = vsyncadd [#allocation13], %s84
      %s86 = sshll.u32 [#allocation14], 4
      %s87 = int_to_ptr.vmem [resolvable:$true] %s86
      %92 = dma.hbm_to_vmem [thread:$0]  %s10, 2048, %s87, [#allocation13], 128, 128, 8
    $region45: #{_lambda_.1} parent=1 // pred_fallthru
      _
    // Predicated region
    $region46: #{_lambda_.1} parent=1 // pred_check
      _
    $region47: #{_lambda_.1} parent=1 // pred_check_branch
      %94 = sbr.rel (0) target = $region49
    $region48: #{_lambda_.1} parent=1 // pred_region
      _
    $region49: #{_lambda_.1} parent=1 // pred_fallthru
      _
    // Predicated region
    $region50: #{_lambda_.1} parent=1 // pred_check
      _
    $region51: #{_lambda_.1} parent=1 // pred_check_branch
      %96 = sbr.rel (0) target = $region53
    $region52: #{_lambda_.1} parent=1 // pred_region
      %97 = dma.done [#allocation7], 2048
    $region53: #{_lambda_.1} parent=1 // pred_fallthru
      _
    // Predicated region
    $region54: #{_lambda_.1} parent=1 // pred_check
      _
    $region55: #{_lambda_.1} parent=1 // pred_check_branch
      %99 = sbr.rel (0) target = $region57
    $region56: #{_lambda_.1} parent=1 // pred_region
      %100 = dma.done [#allocation10], 2048
    $region57: #{_lambda_.1} parent=1 // pred_fallthru
      _
    // Predicated region
    $region58: #{_lambda_.1} parent=1 // pred_check
      _
    $region59: #{_lambda_.1} parent=1 // pred_check_branch
      %102 = sbr.rel (0) target = $region61
    $region60: #{_lambda_.1} parent=1 // pred_region
      %103 = dma.done [#allocation10], 1024
    $region61: #{_lambda_.1} parent=1 // pred_fallthru
      _
    // Predicated region
    $region62: #{_lambda_.1} parent=1 // pred_check
      _
    $region63: #{_lambda_.1} parent=1 // pred_check_branch
      %105 = sbr.rel (0) target = $region65
    $region64: #{_lambda_.1} parent=1 // pred_region
      %106 = dma.done [#allocation13], 8192
    $region65: #{_lambda_.1} parent=1 // pred_fallthru
      _
    // Predicated region
    $region66: #{_lambda_.1} parent=1 // pred_check
      _
    $region67: #{_lambda_.1} parent=1 // pred_check_branch
      %108 = sbr.rel (0) target = $region69
    $region68: #{_lambda_.1} parent=1 // pred_region
      %109 = dma.done [#allocation13], 2048
    $region69: #{_lambda_.1} parent=1 // pred_fallthru
      _
    %v110 = vld [vmem:[%s0] sm:$0xff]
    %v111 = vld [vmem:[%s0 + $0x8] sm:$0xff]
    %v112 = vld [vmem:[%s0 + $0x10] sm:$0xff]
    %v113 = vld [vmem:[%s0 + $0x18] sm:$0xff]
    %vm114 = vcmask 516096
    %115 = vst.msk [vmem:[#allocation2] sm:$0x1] %vm114, 0.0
    %116 = vst.msk [vmem:[#allocation2 + $0x18] sm:$0x1] %vm114, 0.0
    %117 = vst.msk [vmem:[#allocation2 + $0x11] sm:$0x1] %vm114, 0.0
    %118 = vst.msk [vmem:[#allocation2 + $0x29] sm:$0x1] %vm114, 0.0
    %vm119 = vcmask 523264
    %120 = vst.msk [vmem:[#allocation2 + $0x1] sm:$0xff] %vm119, %v110
    %121 = vst.msk [vmem:[#allocation2 + $0x9] sm:$0xff] %vm119, %v111
    %122 = vst.msk [vmem:[#allocation2 + $0x19] sm:$0xff] %vm119, %v112
    %123 = vst.msk [vmem:[#allocation2 + $0x21] sm:$0xff] %vm119, %v113
    %v124 = vld [vmem:[#allocation2] sm:$0xff]
    %v125 = vld [vmem:[#allocation2 + $0x8] sm:$0xff]
    %v126 = vld [vmem:[#allocation2 + $0x18] sm:$0xff]
    %v127 = vld [vmem:[#allocation2 + $0x20] sm:$0xff]
    %128 = vst.msk [vmem:[#allocation3] sm:$0xff] %vm119, %v124
    %129 = vst.msk [vmem:[#allocation3 + $0x10] sm:$0xff] %vm119, %v125
    %130 = vst.msk [vmem:[#allocation3 + $0x20] sm:$0xff] %vm119, %v126
    %131 = vst.msk [vmem:[#allocation3 + $0x30] sm:$0xff] %vm119, %v127
    %v132 = vld [vmem:[#allocation2 + $0x1] sm:$0xff]
    %v133 = vld [vmem:[#allocation2 + $0x9] sm:$0xff]
    %v134 = vld [vmem:[#allocation2 + $0x19] sm:$0xff]
    %v135 = vld [vmem:[#allocation2 + $0x21] sm:$0xff]
    %140 = vrot.lane.b32.xlu0 %v132, 64
    %v141 = vpop.permute.xlu0 %140
    %142 = vrot.lane.b32.xlu0 %v133, 64
    %v143 = vpop.permute.xlu0 %142
    %144 = vrot.lane.b32.xlu0 %v134, 64
    %v145 = vpop.permute.xlu0 %144
    %146 = vrot.lane.b32.xlu0 %v135, 64
    %v147 = vpop.permute.xlu0 %146
    %vm152 = vcmask 1048064
    %153 = vst.msk [vmem:[#allocation3] sm:$0xff] %vm152, %v141
    %154 = vst.msk [vmem:[#allocation3 + $0x10] sm:$0xff] %vm152, %v143
    %155 = vst.msk [vmem:[#allocation3 + $0x20] sm:$0xff] %vm152, %v145
    %156 = vst.msk [vmem:[#allocation3 + $0x30] sm:$0xff] %vm152, %v147
    %v157 = vld [vmem:[#allocation2 + $0x2] sm:$0xff]
    %v158 = vld [vmem:[#allocation2 + $0xa] sm:$0xff]
    %v159 = vld [vmem:[#allocation2 + $0x1a] sm:$0xff]
    %v160 = vld [vmem:[#allocation2 + $0x22] sm:$0xff]
    %161 = vst.msk [vmem:[#allocation3 + $0x8] sm:$0xff] %vm119, %v157
    %162 = vst.msk [vmem:[#allocation3 + $0x18] sm:$0xff] %vm119, %v158
    %163 = vst.msk [vmem:[#allocation3 + $0x28] sm:$0xff] %vm119, %v159
    %164 = vst.msk [vmem:[#allocation3 + $0x38] sm:$0xff] %vm119, %v160
    %v165 = vld [vmem:[#allocation3] sm:$0xff]
    %v166 = vld [vmem:[#allocation3 + $0x8] sm:$0xff]
    %v167 = vld [vmem:[#allocation3 + $0x10] sm:$0xff]
    %v168 = vld [vmem:[#allocation3 + $0x18] sm:$0xff]
    %v169 = vld [vmem:[#allocation3 + $0x20] sm:$0xff]
    %v170 = vld [vmem:[#allocation3 + $0x28] sm:$0xff]
    %v171 = vld [vmem:[#allocation3 + $0x30] sm:$0xff]
    %v172 = vld [vmem:[#allocation3 + $0x38] sm:$0xff]
    %v173 = vld [vmem:[%s1] sm:$0xff]
    %v174 = vld [vmem:[%s1 + $0x8] sm:$0xff]
    %v175 = vld [vmem:[%s1 + $0x10] sm:$0xff]
    %v176 = vld [vmem:[%s1 + $0x18] sm:$0xff]
    %v177 = vld [vmem:[%s1 + $0x20] sm:$0xff]
    %v178 = vld [vmem:[%s1 + $0x28] sm:$0xff]
    %v179 = vld [vmem:[%s1 + $0x30] sm:$0xff]
    %v180 = vld [vmem:[%s1 + $0x38] sm:$0xff]
    %v181 = vld [vmem:[%s1 + $0x40] sm:$0xff]
    %v182 = vld [vmem:[%s1 + $0x48] sm:$0xff]
    %v183 = vld [vmem:[%s1 + $0x50] sm:$0xff]
    %v184 = vld [vmem:[%s1 + $0x58] sm:$0xff]
    %v185 = vld [vmem:[%s1 + $0x60] sm:$0xff]
    %v186 = vld [vmem:[%s1 + $0x68] sm:$0xff]
    %v187 = vld [vmem:[%s1 + $0x70] sm:$0xff]
    %v188 = vld [vmem:[%s1 + $0x78] sm:$0xff]
    %v189 = vld [vmem:[%s1 + $0x80] sm:$0xff]
    %v190 = vld [vmem:[%s1 + $0x88] sm:$0xff]
    %v191 = vld [vmem:[%s1 + $0x90] sm:$0xff]
    %v192 = vld [vmem:[%s1 + $0x98] sm:$0xff]
    %v193 = vld [vmem:[%s1 + $0xa0] sm:$0xff]
    %v194 = vld [vmem:[%s1 + $0xa8] sm:$0xff]
    %v195 = vld [vmem:[%s1 + $0xb0] sm:$0xff]
    %v196 = vld [vmem:[%s1 + $0xb8] sm:$0xff]
    %v198 = vsel %vm119, %v166, 0
    %v201 = vsel %vm119, %v168, 0
    %v204 = vsel %vm119, %v170, 0
    %v207 = vsel %vm119, %v172, 0
    %209 = vmatprep.subr.mxu0 0.0
    %210 = vmatpush1.msra.mxu0 %v173
    %211 = vmatprep.subr.mxu0 0.0
    %212 = vmatpush1.msra.mxu0 %v174
    %213 = vmatprep.subr.mxu0 0.0
    %214 = vmatpush1.msra.mxu0 %v175
    %215 = vmatprep.subr.mxu0 0.0
    %216 = vmatpush1.msra.mxu0 %v176
    %217 = vmatprep.subr.mxu0 0.0
    %218 = vmatpush1.msra.mxu0 %v177
    %219 = vmatprep.subr.mxu0 0.0
    %220 = vmatpush1.msra.mxu0 %v178
    %221 = vmatprep.subr.mxu0 0.0
    %222 = vmatpush1.msra.mxu0 %v179
    %223 = vmatprep.subr.mxu0 0.0
    %224 = vmatpush1.msra.mxu0 %v180
    %225 = vmatprep.subr.mxu0 0.0
    %226 = vmatpush1.msra.mxu0 %v181
    %227 = vmatprep.subr.mxu0 0.0
    %228 = vmatpush1.msra.mxu0 %v182
    %229 = vmatprep.subr.mxu0 0.0
    %230 = vmatpush1.msra.mxu0 %v183
    %231 = vmatprep.subr.mxu0 0.0
    %232 = vmatpush1.msra.mxu0 %v184
    %233 = vmatprep.subr.mxu0 0.0
    %234 = vmatpush1.msra.mxu0 %v185
    %235 = vmatprep.subr.mxu0 0.0
    %236 = vmatpush1.msra.mxu0 %v186
    %237 = vmatprep.subr.mxu0 0.0
    %238 = vmatpush1.msra.mxu0 %v187
    %239 = vmatprep.subr.mxu0 0.0
    %240 = vmatpush1.msra.mxu0 %v188
    %241 = vmatprep.subr.mxu0 0.0
    %242 = vmatpush1.msra.mxu0 %v189
    %243 = vmatprep.subr.mxu0 0.0
    %244 = vmatpush1.msra.mxu0 %v190
    %245 = vmatprep.subr.mxu0 0.0
    %246 = vmatpush1.msra.mxu0 %v191
    %247 = vmatprep.subr.mxu0 0.0
    %248 = vmatpush1.msra.mxu0 %v192
    %249 = vmatprep.subr.mxu0 0.0
    %250 = vmatpush1.msra.mxu0 %v193
    %251 = vmatprep.subr.mxu0 0.0
    %252 = vmatpush1.msra.mxu0 %v194
    %253 = vmatprep.subr.mxu0 0.0
    %254 = vmatpush1.msra.mxu0 %v195
    %255 = vmatprep.subr.mxu0 0.0
    %256 = vmatpush1.msra.mxu0 %v196
    %257 = vmatprep.subr.mxu0 0.0
    %258 = vmatpush1.msra.mxu0 0.0
    %259 = vmatprep.subr.mxu0 0.0
    %260 = vmatpush1.msra.mxu0 0.0
    %261 = vmatprep.subr.mxu0 0.0
    %262 = vmatpush1.msra.mxu0 0.0
    %263 = vmatprep.subr.mxu0 0.0
    %264 = vmatpush1.msra.mxu0 0.0
    %265 = vmatprep.subr.mxu0 0.0
    %266 = vmatpush1.msra.mxu0 0.0
    %267 = vmatprep.subr.mxu0 0.0
    %268 = vmatpush1.msra.mxu0 0.0
    %269 = vmatprep.subr.mxu0 0.0
    %270 = vmatpush1.msra.mxu0 0.0
    %271 = vmatprep.subr.mxu0 0.0
    %272 = vmatpush1.msra.mxu0 0.0
    %273 = vmatprep.mubr.f32.mxu0 %v198
    %274 = vmatmul.mubr.f32.gmra.mrb[0].mxu0 %v165
    %v275 = vpop.f32.mrb[0].mxu0
    %v276 = vadd.f32 0.0, %v275
    %v277 = vpop.f32.mrb[0].mxu0
    %278 = vmatprep.mubr.f32.mxu0 %v201
    %279 = vmatmul.mubr.f32.gmra.mrb[0].mxu0 %v167
    %v280 = vpop.f32.mrb[0].mxu0
    %v281 = vadd.f32 0.0, %v280
    %v282 = vpop.f32.mrb[0].mxu0
    %283 = vmatprep.mubr.f32.mxu0 %v204
    %284 = vmatmul.mubr.f32.gmra.mrb[0].mxu0 %v169
    %v285 = vpop.f32.mrb[0].mxu0
    %v286 = vadd.f32 0.0, %v285
    %v287 = vpop.f32.mrb[0].mxu0
    %288 = vmatprep.mubr.f32.mxu0 %v207
    %289 = vmatmul.mubr.f32.gmra.mrb[0].mxu0 %v171
    %v290 = vpop.f32.mrb[0].mxu0
    %v291 = vadd.f32 0.0, %v290
    %v292 = vpop.f32.mrb[0].mxu0
    %293 = vdwg.mxu0
    %v294 = vadd.f32 %v276, %v281
    %v295 = vadd.f32 %v294, %v286
    %v296 = vadd.f32 %v295, %v291
    %v297 = vrot.slane %v296, 4
    %v298 = vadd.f32 %v296, %v297
    %v299 = vrot.slane %v298, 2
    %v300 = vadd.f32 %v298, %v299
    %v301 = vrot.slane %v300, 1
    %v302 = vadd.f32 %v300, %v301
    %v303 = vmul.f32 %v276, %v276
    %v304 = vmul.f32 %v281, %v281
    %v305 = vmul.f32 %v286, %v286
    %v306 = vmul.f32 %v291, %v291
    %v307 = vadd.f32 %v303, %v304
    %v308 = vadd.f32 %v307, %v305
    %v309 = vadd.f32 %v308, %v306
    %v310 = vrot.slane %v309, 4
    %v311 = vadd.f32 %v309, %v310
    %v312 = vrot.slane %v311, 2
    %v313 = vadd.f32 %v311, %v312
    %v314 = vrot.slane %v313, 1
    %v315 = vadd.f32 %v313, %v314
    %v316 = vld [vmem:[#allocation6] sm:$0xff]
    %v317 = vld [vmem:[#allocation6 + $0x8] sm:$0xff]
    %v318 = vld [vmem:[#allocation6 + $0x10] sm:$0xff]
    %v319 = vld [vmem:[#allocation6 + $0x18] sm:$0xff]
    %v320 = vld [vmem:[#allocation6 + $0x20] sm:$0xff]
    %v321 = vld [vmem:[#allocation6 + $0x28] sm:$0xff]
    %v322 = vld [vmem:[#allocation6 + $0x30] sm:$0xff]
    %v323 = vld [vmem:[#allocation6 + $0x38] sm:$0xff]
    %v324 = vld [vmem:[#allocation6 + $0x40] sm:$0xff]
    %v325 = vld [vmem:[#allocation6 + $0x48] sm:$0xff]
    %v326 = vld [vmem:[#allocation6 + $0x50] sm:$0xff]
    %v327 = vld [vmem:[#allocation6 + $0x58] sm:$0xff]
    %v328 = vld [vmem:[#allocation6 + $0x60] sm:$0xff]
    %v329 = vld [vmem:[#allocation6 + $0x68] sm:$0xff]
    %v330 = vld [vmem:[#allocation6 + $0x70] sm:$0xff]
    %v331 = vld [vmem:[#allocation6 + $0x78] sm:$0xff]
    %332 = vmatprep.subr.mxu0 0.0
    %333 = vmatpush1.msra.mxu0 %v316
    %334 = vmatprep.subr.mxu0 0.0
    %335 = vmatpush1.msra.mxu0 %v317
    %336 = vmatprep.subr.mxu0 0.0
    %337 = vmatpush1.msra.mxu0 %v318
    %338 = vmatprep.subr.mxu0 0.0
    %339 = vmatpush1.msra.mxu0 %v319
    %340 = vmatprep.subr.mxu0 0.0
    %341 = vmatpush1.msra.mxu0 %v320
    %342 = vmatprep.subr.mxu0 0.0
    %343 = vmatpush1.msra.mxu0 %v321
    %344 = vmatprep.subr.mxu0 0.0
    %345 = vmatpush1.msra.mxu0 %v322
    %346 = vmatprep.subr.mxu0 0.0
    %347 = vmatpush1.msra.mxu0 %v323
    %348 = vmatprep.subr.mxu0 0.0
    %349 = vmatpush1.msra.mxu0 %v324
    %350 = vmatprep.subr.mxu0 0.0
    %351 = vmatpush1.msra.mxu0 %v325
    %352 = vmatprep.subr.mxu0 0.0
    %353 = vmatpush1.msra.mxu0 %v326
    %354 = vmatprep.subr.mxu0 0.0
    %355 = vmatpush1.msra.mxu0 %v327
    %356 = vmatprep.subr.mxu0 0.0
    %357 = vmatpush1.msra.mxu0 %v328
    %358 = vmatprep.subr.mxu0 0.0
    %359 = vmatpush1.msra.mxu0 %v329
    %360 = vmatprep.subr.mxu0 0.0
    %361 = vmatpush1.msra.mxu0 %v330
    %362 = vmatprep.subr.mxu0 0.0
    %363 = vmatpush1.msra.mxu0 %v331
    %364 = vmatprep.subr.mxu0 0.0
    %365 = vmatpush1.msra.mxu0 0.0
    %366 = vmatprep.subr.mxu0 0.0
    %367 = vmatpush1.msra.mxu0 0.0
    %368 = vmatprep.subr.mxu0 0.0
    %369 = vmatpush1.msra.mxu0 0.0
    %370 = vmatprep.subr.mxu0 0.0
    %371 = vmatpush1.msra.mxu0 0.0
    %372 = vmatprep.subr.mxu0 0.0
    %373 = vmatpush1.msra.mxu0 0.0
    %374 = vmatprep.subr.mxu0 0.0
    %375 = vmatpush1.msra.mxu0 0.0
    %376 = vmatprep.subr.mxu0 0.0
    %377 = vmatpush1.msra.mxu0 0.0
    %378 = vmatprep.subr.mxu0 0.0
    %379 = vmatpush1.msra.mxu0 0.0
    %380 = vmatprep.subr.mxu0 0.0
    %381 = vmatpush1.msra.mxu0 0.0
    %382 = vmatprep.subr.mxu0 0.0
    %383 = vmatpush1.msra.mxu0 0.0
    %384 = vmatprep.subr.mxu0 0.0
    %385 = vmatpush1.msra.mxu0 0.0
    %386 = vmatprep.subr.mxu0 0.0
    %387 = vmatpush1.msra.mxu0 0.0
    %388 = vmatprep.subr.mxu0 0.0
    %389 = vmatpush1.msra.mxu0 0.0
    %390 = vmatprep.subr.mxu0 0.0
    %391 = vmatpush1.msra.mxu0 0.0
    %392 = vmatprep.subr.mxu0 0.0
    %393 = vmatpush1.msra.mxu0 0.0
    %394 = vmatprep.subr.mxu0 0.0
    %395 = vmatpush1.msra.mxu0 0.0
    %396 = vmatprep.mubr.f32.mxu0 0.0
    %397 = vmatmul.mubr.f32.gmra.mrb[0].mxu0 %v302
    %v398 = vpop.f32.mrb[0].mxu0
    %v399 = vadd.f32 0.0, %v398
    %v400 = vpop.f32.mrb[0].mxu0
    %401 = vdwg.mxu0
    %v402 = vmul.f32 %v399, 0.001953125
    %403 = vmatprep.subr.mxu0 0.0
    %404 = vmatpush1.msra.mxu0 %v316
    %405 = vmatprep.subr.mxu0 0.0
    %406 = vmatpush1.msra.mxu0 %v317
    %407 = vmatprep.subr.mxu0 0.0
    %408 = vmatpush1.msra.mxu0 %v318
    %409 = vmatprep.subr.mxu0 0.0
    %410 = vmatpush1.msra.mxu0 %v319
    %411 = vmatprep.subr.mxu0 0.0
    %412 = vmatpush1.msra.mxu0 %v320
    %413 = vmatprep.subr.mxu0 0.0
    %414 = vmatpush1.msra.mxu0 %v321
    %415 = vmatprep.subr.mxu0 0.0
    %416 = vmatpush1.msra.mxu0 %v322
    %417 = vmatprep.subr.mxu0 0.0
    %418 = vmatpush1.msra.mxu0 %v323
    %419 = vmatprep.subr.mxu0 0.0
    %420 = vmatpush1.msra.mxu0 %v324
    %421 = vmatprep.subr.mxu0 0.0
    %422 = vmatpush1.msra.mxu0 %v325
    %423 = vmatprep.subr.mxu0 0.0
    %424 = vmatpush1.msra.mxu0 %v326
    %425 = vmatprep.subr.mxu0 0.0
    %426 = vmatpush1.msra.mxu0 %v327
    %427 = vmatprep.subr.mxu0 0.0
    %428 = vmatpush1.msra.mxu0 %v328
    %429 = vmatprep.subr.mxu0 0.0
    %430 = vmatpush1.msra.mxu0 %v329
    %431 = vmatprep.subr.mxu0 0.0
    %432 = vmatpush1.msra.mxu0 %v330
    %433 = vmatprep.subr.mxu0 0.0
    %434 = vmatpush1.msra.mxu0 %v331
    %435 = vmatprep.subr.mxu0 0.0
    %436 = vmatpush1.msra.mxu0 0.0
    %437 = vmatprep.subr.mxu0 0.0
    %438 = vmatpush1.msra.mxu0 0.0
    %439 = vmatprep.subr.mxu0 0.0
    %440 = vmatpush1.msra.mxu0 0.0
    %441 = vmatprep.subr.mxu0 0.0
    %442 = vmatpush1.msra.mxu0 0.0
    %443 = vmatprep.subr.mxu0 0.0
    %444 = vmatpush1.msra.mxu0 0.0
    %445 = vmatprep.subr.mxu0 0.0
    %446 = vmatpush1.msra.mxu0 0.0
    %447 = vmatprep.subr.mxu0 0.0
    %448 = vmatpush1.msra.mxu0 0.0
    %449 = vmatprep.subr.mxu0 0.0
    %450 = vmatpush1.msra.mxu0 0.0
    %451 = vmatprep.subr.mxu0 0.0
    %452 = vmatpush1.msra.mxu0 0.0
    %453 = vmatprep.subr.mxu0 0.0
    %454 = vmatpush1.msra.mxu0 0.0
    %455 = vmatprep.subr.mxu0 0.0
    %456 = vmatpush1.msra.mxu0 0.0
    %457 = vmatprep.subr.mxu0 0.0
    %458 = vmatpush1.msra.mxu0 0.0
    %459 = vmatprep.subr.mxu0 0.0
    %460 = vmatpush1.msra.mxu0 0.0
    %461 = vmatprep.subr.mxu0 0.0
    %462 = vmatpush1.msra.mxu0 0.0
    %463 = vmatprep.subr.mxu0 0.0
    %464 = vmatpush1.msra.mxu0 0.0
    %465 = vmatprep.subr.mxu0 0.0
    %466 = vmatpush1.msra.mxu0 0.0
    %467 = vmatprep.mubr.f32.mxu0 0.0
    %468 = vmatmul.mubr.f32.gmra.mrb[0].mxu0 %v315
    %v469 = vpop.f32.mrb[0].mxu0
    %v470 = vadd.f32 0.0, %v469
    %v471 = vpop.f32.mrb[0].mxu0
    %472 = vdwg.mxu0
    %v473 = vmul.f32 %v470, 0.001953125
    %v474 = vmul.f32 %v402, %v402
    %v475 = vsub.f32 %v473, %v474
    %v476 = vmax.f32 %v475, 0.0
    %v477 = vlaneseq
    %v478 = vshrl.u32 %v477, 7
    %v479 = vsub.s32 0, %v478
    %v480 = vrot.slane %v402, %v479
    %v481 = vsub.f32 %v276, %v480
    %v482 = vsub.f32 %v281, %v480
    %v483 = vsub.f32 %v286, %v480
    %v484 = vsub.f32 %v291, %v480
    %v485 = vadd.f32 %v476, 1e-05
    %v486 = vrsqrt.pop %v485
    %v487 = vlaneseq
    %v488 = vshrl.u32 %v487, 7
    %v489 = vsub.s32 0, %v488
    %v490 = vrot.slane %v486, %v489
    %v491 = vmul.f32 %v481, %v490
    %v492 = vmul.f32 %v482, %v490
    %v493 = vmul.f32 %v483, %v490
    %v494 = vmul.f32 %v484, %v490
    %v495 = vmax.f32 %v491, 0.0
    %v496 = vmax.f32 %v492, 0.0
    %v497 = vmax.f32 %v493, 0.0
    %v498 = vmax.f32 %v494, 0.0
    %v503 = vcombine.high %v495, %v495
    %v505 = vunpack.c.l.s4 1983009808
    %v506 = vunpack.c.0.s8 %v505
    %v507 = vlaneseq
    %v508 = vshrl.u32 %v507, 7
    %v509 = vsub.s32 %v506, %v508
    %v510 = vrot.slane %v495, %v509
    %v512 = vunpack.c.l.s4 1983009808
    %v513 = vunpack.c.0.s8 %v512
    %v514 = vlaneseq
    %v515 = vshrl.u32 %v514, 7
    %v516 = vsub.s32 %v513, %v515
    %v517 = vrot.slane %v503, %v516
    %v518 = vcombine.high %v510, %v510
    %v519 = vcombine.high %v517, %v517
    %v520 = vcombine.high %v496, %v496
    %v522 = vunpack.c.l.s4 1983009808
    %v523 = vunpack.c.0.s8 %v522
    %v524 = vlaneseq
    %v525 = vshrl.u32 %v524, 7
    %v526 = vsub.s32 %v523, %v525
    %v527 = vrot.slane %v496, %v526
    %v529 = vunpack.c.l.s4 1983009808
    %v530 = vunpack.c.0.s8 %v529
    %v531 = vlaneseq
    %v532 = vshrl.u32 %v531, 7
    %v533 = vsub.s32 %v530, %v532
    %v534 = vrot.slane %v520, %v533
    %v535 = vcombine.high %v527, %v527
    %v536 = vcombine.high %v534, %v534
    %v537 = vcombine.high %v497, %v497
    %v539 = vunpack.c.l.s4 1983009808
    %v540 = vunpack.c.0.s8 %v539
    %v541 = vlaneseq
    %v542 = vshrl.u32 %v541, 7
    %v543 = vsub.s32 %v540, %v542
    %v544 = vrot.slane %v497, %v543
    %v546 = vunpack.c.l.s4 1983009808
    %v547 = vunpack.c.0.s8 %v546
    %v548 = vlaneseq
    %v549 = vshrl.u32 %v548, 7
    %v550 = vsub.s32 %v547, %v549
    %v551 = vrot.slane %v537, %v550
    %v552 = vcombine.high %v544, %v544
    %v553 = vcombine.high %v551, %v551
    %v554 = vcombine.high %v498, %v498
    %v556 = vunpack.c.l.s4 1983009808
    %v557 = vunpack.c.0.s8 %v556
    %v558 = vlaneseq
    %v559 = vshrl.u32 %v558, 7
    %v560 = vsub.s32 %v557, %v559
    %v561 = vrot.slane %v498, %v560
    %v563 = vunpack.c.l.s4 1983009808
    %v564 = vunpack.c.0.s8 %v563
    %v565 = vlaneseq
    %v566 = vshrl.u32 %v565, 7
    %v567 = vsub.s32 %v564, %v566
    %v568 = vrot.slane %v554, %v567
    %v569 = vcombine.high %v561, %v561
    %v570 = vcombine.high %v568, %v568
    %v587 = vrot.slane %v510, 7
    %v588 = vrot.slane %v587, 2
    %v589 = vrot.slane %v518, 7
    %v590 = vrot.slane %v589, 2
    %v591 = vrot.slane %v517, 7
    %v592 = vrot.slane %v591, 2
    %v593 = vrot.slane %v519, 7
    %v594 = vrot.slane %v593, 2
    %v595 = vrot.slane %v527, 7
    %v596 = vrot.slane %v595, 2
    %v597 = vrot.slane %v535, 7
    %v598 = vrot.slane %v597, 2
    %v599 = vrot.slane %v534, 7
    %v600 = vrot.slane %v599, 2
    %v601 = vrot.slane %v536, 7
    %v602 = vrot.slane %v601, 2
    %v603 = vrot.slane %v544, 7
    %v604 = vrot.slane %v603, 2
    %v605 = vrot.slane %v552, 7
    %v606 = vrot.slane %v605, 2
    %v607 = vrot.slane %v551, 7
    %v608 = vrot.slane %v607, 2
    %v609 = vrot.slane %v553, 7
    %v610 = vrot.slane %v609, 2
    %v611 = vrot.slane %v561, 7
    %v612 = vrot.slane %v611, 2
    %v613 = vrot.slane %v569, 7
    %v614 = vrot.slane %v613, 2
    %v615 = vrot.slane %v568, 7
    %v616 = vrot.slane %v615, 2
    %v617 = vrot.slane %v570, 7
    %v618 = vrot.slane %v617, 2
    %v635 = vmax.f32 %v510, %v588
    %v636 = vmax.f32 %v518, %v590
    %v637 = vmax.f32 %v517, %v592
    %v638 = vmax.f32 %v519, %v594
    %v639 = vmax.f32 %v527, %v596
    %v640 = vmax.f32 %v535, %v598
    %v641 = vmax.f32 %v534, %v600
    %v642 = vmax.f32 %v536, %v602
    %v643 = vmax.f32 %v544, %v604
    %v644 = vmax.f32 %v552, %v606
    %v645 = vmax.f32 %v551, %v608
    %v646 = vmax.f32 %v553, %v610
    %v647 = vmax.f32 %v561, %v612
    %v648 = vmax.f32 %v569, %v614
    %v649 = vmax.f32 %v568, %v616
    %v650 = vmax.f32 %v570, %v618
    %667 = vrot.lane.b32.xlu0 %v635, 112
    %v668 = vpop.permute.xlu0 %667
    %669 = vrot.lane.b32.xlu0 %v636, 112
    %v670 = vpop.permute.xlu0 %669
    %671 = vrot.lane.b32.xlu0 %v637, 112
    %v672 = vpop.permute.xlu0 %671
    %673 = vrot.lane.b32.xlu0 %v638, 112
    %v674 = vpop.permute.xlu0 %673
    %675 = vrot.lane.b32.xlu0 %v639, 112
    %v676 = vpop.permute.xlu0 %675
    %677 = vrot.lane.b32.xlu0 %v640, 112
    %v678 = vpop.permute.xlu0 %677
    %679 = vrot.lane.b32.xlu0 %v641, 112
    %v680 = vpop.permute.xlu0 %679
    %681 = vrot.lane.b32.xlu0 %v642, 112
    %v682 = vpop.permute.xlu0 %681
    %683 = vrot.lane.b32.xlu0 %v643, 112
    %v684 = vpop.permute.xlu0 %683
    %685 = vrot.lane.b32.xlu0 %v644, 112
    %v686 = vpop.permute.xlu0 %685
    %687 = vrot.lane.b32.xlu0 %v645, 112
    %v688 = vpop.permute.xlu0 %687
    %689 = vrot.lane.b32.xlu0 %v646, 112
    %v690 = vpop.permute.xlu0 %689
    %691 = vrot.lane.b32.xlu0 %v647, 112
    %v692 = vpop.permute.xlu0 %691
    %693 = vrot.lane.b32.xlu0 %v648, 112
    %v694 = vpop.permute.xlu0 %693
    %695 = vrot.lane.b32.xlu0 %v649, 112
    %v696 = vpop.permute.xlu0 %695
    %697 = vrot.lane.b32.xlu0 %v650, 112
    %v698 = vpop.permute.xlu0 %697
    %699 = vrot.lane.b32.xlu0 %v635, 96
    %v700 = vpop.permute.xlu0 %699
    %701 = vrot.lane.b32.xlu0 %v636, 96
    %v702 = vpop.permute.xlu0 %701
    %703 = vrot.lane.b32.xlu0 %v637, 96
    %v704 = vpop.permute.xlu0 %703
    %705 = vrot.lane.b32.xlu0 %v638, 96
    %v706 = vpop.permute.xlu0 %705
    %707 = vrot.lane.b32.xlu0 %v639, 96
    %v708 = vpop.permute.xlu0 %707
    %709 = vrot.lane.b32.xlu0 %v640, 96
    %v710 = vpop.permute.xlu0 %709
    %711 = vrot.lane.b32.xlu0 %v641, 96
    %v712 = vpop.permute.xlu0 %711
    %713 = vrot.lane.b32.xlu0 %v642, 96
    %v714 = vpop.permute.xlu0 %713
    %715 = vrot.lane.b32.xlu0 %v643, 96
    %v716 = vpop.permute.xlu0 %715
    %717 = vrot.lane.b32.xlu0 %v644, 96
    %v718 = vpop.permute.xlu0 %717
    %719 = vrot.lane.b32.xlu0 %v645, 96
    %v720 = vpop.permute.xlu0 %719
    %721 = vrot.lane.b32.xlu0 %v646, 96
    %v722 = vpop.permute.xlu0 %721
    %723 = vrot.lane.b32.xlu0 %v647, 96
    %v724 = vpop.permute.xlu0 %723
    %725 = vrot.lane.b32.xlu0 %v648, 96
    %v726 = vpop.permute.xlu0 %725
    %727 = vrot.lane.b32.xlu0 %v649, 96
    %v728 = vpop.permute.xlu0 %727
    %729 = vrot.lane.b32.xlu0 %v650, 96
    %v730 = vpop.permute.xlu0 %729
    %731 = vrot.lane.b32.xlu0 %v635, 80
    %v732 = vpop.permute.xlu0 %731
    %733 = vrot.lane.b32.xlu0 %v636, 80
    %v734 = vpop.permute.xlu0 %733
    %735 = vrot.lane.b32.xlu0 %v637, 80
    %v736 = vpop.permute.xlu0 %735
    %737 = vrot.lane.b32.xlu0 %v638, 80
    %v738 = vpop.permute.xlu0 %737
    %739 = vrot.lane.b32.xlu0 %v639, 80
    %v740 = vpop.permute.xlu0 %739
    %741 = vrot.lane.b32.xlu0 %v640, 80
    %v742 = vpop.permute.xlu0 %741
    %743 = vrot.lane.b32.xlu0 %v641, 80
    %v744 = vpop.permute.xlu0 %743
    %745 = vrot.lane.b32.xlu0 %v642, 80
    %v746 = vpop.permute.xlu0 %745
    %747 = vrot.lane.b32.xlu0 %v643, 80
    %v748 = vpop.permute.xlu0 %747
    %749 = vrot.lane.b32.xlu0 %v644, 80
    %v750 = vpop.permute.xlu0 %749
    %751 = vrot.lane.b32.xlu0 %v645, 80
    %v752 = vpop.permute.xlu0 %751
    %753 = vrot.lane.b32.xlu0 %v646, 80
    %v754 = vpop.permute.xlu0 %753
    %755 = vrot.lane.b32.xlu0 %v647, 80
    %v756 = vpop.permute.xlu0 %755
    %757 = vrot.lane.b32.xlu0 %v648, 80
    %v758 = vpop.permute.xlu0 %757
    %759 = vrot.lane.b32.xlu0 %v649, 80
    %v760 = vpop.permute.xlu0 %759
    %761 = vrot.lane.b32.xlu0 %v650, 80
    %v762 = vpop.permute.xlu0 %761
    %763 = vrot.lane.b32.xlu0 %v635, 64
    %v764 = vpop.permute.xlu0 %763
    %765 = vrot.lane.b32.xlu0 %v636, 64
    %v766 = vpop.permute.xlu0 %765
    %767 = vrot.lane.b32.xlu0 %v637, 64
    %v768 = vpop.permute.xlu0 %767
    %769 = vrot.lane.b32.xlu0 %v638, 64
    %v770 = vpop.permute.xlu0 %769
    %771 = vrot.lane.b32.xlu0 %v639, 64
    %v772 = vpop.permute.xlu0 %771
    %773 = vrot.lane.b32.xlu0 %v640, 64
    %v774 = vpop.permute.xlu0 %773
    %775 = vrot.lane.b32.xlu0 %v641, 64
    %v776 = vpop.permute.xlu0 %775
    %777 = vrot.lane.b32.xlu0 %v642, 64
    %v778 = vpop.permute.xlu0 %777
    %779 = vrot.lane.b32.xlu0 %v643, 64
    %v780 = vpop.permute.xlu0 %779
    %781 = vrot.lane.b32.xlu0 %v644, 64
    %v782 = vpop.permute.xlu0 %781
    %783 = vrot.lane.b32.xlu0 %v645, 64
    %v784 = vpop.permute.xlu0 %783
    %785 = vrot.lane.b32.xlu0 %v646, 64
    %v786 = vpop.permute.xlu0 %785
    %787 = vrot.lane.b32.xlu0 %v647, 64
    %v788 = vpop.permute.xlu0 %787
    %789 = vrot.lane.b32.xlu0 %v648, 64
    %v790 = vpop.permute.xlu0 %789
    %791 = vrot.lane.b32.xlu0 %v649, 64
    %v792 = vpop.permute.xlu0 %791
    %793 = vrot.lane.b32.xlu0 %v650, 64
    %v794 = vpop.permute.xlu0 %793
    %795 = vrot.lane.b32.xlu0 %v635, 48
    %v796 = vpop.permute.xlu0 %795
    %797 = vrot.lane.b32.xlu0 %v636, 48
    %v798 = vpop.permute.xlu0 %797
    %799 = vrot.lane.b32.xlu0 %v637, 48
    %v800 = vpop.permute.xlu0 %799
    %801 = vrot.lane.b32.xlu0 %v638, 48
    %v802 = vpop.permute.xlu0 %801
    %803 = vrot.lane.b32.xlu0 %v639, 48
    %v804 = vpop.permute.xlu0 %803
    %805 = vrot.lane.b32.xlu0 %v640, 48
    %v806 = vpop.permute.xlu0 %805
    %807 = vrot.lane.b32.xlu0 %v641, 48
    %v808 = vpop.permute.xlu0 %807
    %809 = vrot.lane.b32.xlu0 %v642, 48
    %v810 = vpop.permute.xlu0 %809
    %811 = vrot.lane.b32.xlu0 %v643, 48
    %v812 = vpop.permute.xlu0 %811
    %813 = vrot.lane.b32.xlu0 %v644, 48
    %v814 = vpop.permute.xlu0 %813
    %815 = vrot.lane.b32.xlu0 %v645, 48
    %v816 = vpop.permute.xlu0 %815
    %817 = vrot.lane.b32.xlu0 %v646, 48
    %v818 = vpop.permute.xlu0 %817
    %819 = vrot.lane.b32.xlu0 %v647, 48
    %v820 = vpop.permute.xlu0 %819
    %821 = vrot.lane.b32.xlu0 %v648, 48
    %v822 = vpop.permute.xlu0 %821
    %823 = vrot.lane.b32.xlu0 %v649, 48
    %v824 = vpop.permute.xlu0 %823
    %825 = vrot.lane.b32.xlu0 %v650, 48
    %v826 = vpop.permute.xlu0 %825
    %827 = vrot.lane.b32.xlu0 %v635, 32
    %v828 = vpop.permute.xlu0 %827
    %829 = vrot.lane.b32.xlu0 %v636, 32
    %v830 = vpop.permute.xlu0 %829
    %831 = vrot.lane.b32.xlu0 %v637, 32
    %v832 = vpop.permute.xlu0 %831
    %833 = vrot.lane.b32.xlu0 %v638, 32
    %v834 = vpop.permute.xlu0 %833
    %835 = vrot.lane.b32.xlu0 %v639, 32
    %v836 = vpop.permute.xlu0 %835
    %837 = vrot.lane.b32.xlu0 %v640, 32
    %v838 = vpop.permute.xlu0 %837
    %839 = vrot.lane.b32.xlu0 %v641, 32
    %v840 = vpop.permute.xlu0 %839
    %841 = vrot.lane.b32.xlu0 %v642, 32
    %v842 = vpop.permute.xlu0 %841
    %843 = vrot.lane.b32.xlu0 %v643, 32
    %v844 = vpop.permute.xlu0 %843
    %845 = vrot.lane.b32.xlu0 %v644, 32
    %v846 = vpop.permute.xlu0 %845
    %847 = vrot.lane.b32.xlu0 %v645, 32
    %v848 = vpop.permute.xlu0 %847
    %849 = vrot.lane.b32.xlu0 %v646, 32
    %v850 = vpop.permute.xlu0 %849
    %851 = vrot.lane.b32.xlu0 %v647, 32
    %v852 = vpop.permute.xlu0 %851
    %853 = vrot.lane.b32.xlu0 %v648, 32
    %v854 = vpop.permute.xlu0 %853
    %855 = vrot.lane.b32.xlu0 %v649, 32
    %v856 = vpop.permute.xlu0 %855
    %857 = vrot.lane.b32.xlu0 %v650, 32
    %v858 = vpop.permute.xlu0 %857
    %859 = vrot.lane.b32.xlu0 %v635, 16
    %v860 = vpop.permute.xlu0 %859
    %861 = vrot.lane.b32.xlu0 %v636, 16
    %v862 = vpop.permute.xlu0 %861
    %863 = vrot.lane.b32.xlu0 %v637, 16
    %v864 = vpop.permute.xlu0 %863
    %865 = vrot.lane.b32.xlu0 %v638, 16
    %v866 = vpop.permute.xlu0 %865
    %867 = vrot.lane.b32.xlu0 %v639, 16
    %v868 = vpop.permute.xlu0 %867
    %869 = vrot.lane.b32.xlu0 %v640, 16
    %v870 = vpop.permute.xlu0 %869
    %871 = vrot.lane.b32.xlu0 %v641, 16
    %v872 = vpop.permute.xlu0 %871
    %873 = vrot.lane.b32.xlu0 %v642, 16
    %v874 = vpop.permute.xlu0 %873
    %875 = vrot.lane.b32.xlu0 %v643, 16
    %v876 = vpop.permute.xlu0 %875
    %877 = vrot.lane.b32.xlu0 %v644, 16
    %v878 = vpop.permute.xlu0 %877
    %879 = vrot.lane.b32.xlu0 %v645, 16
    %v880 = vpop.permute.xlu0 %879
    %881 = vrot.lane.b32.xlu0 %v646, 16
    %v882 = vpop.permute.xlu0 %881
    %883 = vrot.lane.b32.xlu0 %v647, 16
    %v884 = vpop.permute.xlu0 %883
    %885 = vrot.lane.b32.xlu0 %v648, 16
    %v886 = vpop.permute.xlu0 %885
    %887 = vrot.lane.b32.xlu0 %v649, 16
    %v888 = vpop.permute.xlu0 %887
    %889 = vrot.lane.b32.xlu0 %v650, 16
    %v890 = vpop.permute.xlu0 %889
    %vm891 = vcmask 1042434
    %vm892 = vcmask 1044484
    %v893 = vsel %vm892, %v635, %v635
    %vm894 = vcmask 1046534
    %v895 = vsel %vm894, %v635, %v893
    %v896 = vrot.slane %v636, 7
    %vm897 = vcmask 1041409
    %v898 = vsel %vm897, %v896, %v895
    %vm899 = vcmask 1043459
    %v900 = vsel %vm899, %v896, %v898
    %vm901 = vcmask 1045509
    %v902 = vsel %vm901, %v896, %v900
    %vm903 = vcmask 1047559
    %v904 = vsel %vm903, %v896, %v902
    %v905 = vsel %vm892, %v637, %v637
    %v906 = vsel %vm894, %v637, %v905
    %v907 = vrot.slane %v638, 7
    %v908 = vsel %vm897, %v907, %v906
    %v909 = vsel %vm899, %v907, %v908
    %v910 = vsel %vm901, %v907, %v909
    %v911 = vsel %vm903, %v907, %v910
    %v912 = vsel %vm892, %v639, %v639
    %v913 = vsel %vm894, %v639, %v912
    %v914 = vrot.slane %v640, 7
    %v915 = vsel %vm897, %v914, %v913
    %v916 = vsel %vm899, %v914, %v915
    %v917 = vsel %vm901, %v914, %v916
    %v918 = vsel %vm903, %v914, %v917
    %v919 = vsel %vm892, %v641, %v641
    %v920 = vsel %vm894, %v641, %v919
    %v921 = vrot.slane %v642, 7
    %v922 = vsel %vm897, %v921, %v920
    %v923 = vsel %vm899, %v921, %v922
    %v924 = vsel %vm901, %v921, %v923
    %v925 = vsel %vm903, %v921, %v924
    %v926 = vsel %vm892, %v643, %v643
    %v927 = vsel %vm894, %v643, %v926
    %v928 = vrot.slane %v644, 7
    %v929 = vsel %vm897, %v928, %v927
    %v930 = vsel %vm899, %v928, %v929
    %v931 = vsel %vm901, %v928, %v930
    %v932 = vsel %vm903, %v928, %v931
    %v933 = vsel %vm892, %v645, %v645
    %v934 = vsel %vm894, %v645, %v933
    %v935 = vrot.slane %v646, 7
    %v936 = vsel %vm897, %v935, %v934
    %v937 = vsel %vm899, %v935, %v936
    %v938 = vsel %vm901, %v935, %v937
    %v939 = vsel %vm903, %v935, %v938
    %v940 = vsel %vm892, %v647, %v647
    %v941 = vsel %vm894, %v647, %v940
    %v942 = vrot.slane %v648, 7
    %v943 = vsel %vm897, %v942, %v941
    %v944 = vsel %vm899, %v942, %v943
    %v945 = vsel %vm901, %v942, %v944
    %v946 = vsel %vm903, %v942, %v945
    %v947 = vsel %vm892, %v649, %v649
    %v948 = vsel %vm894, %v649, %v947
    %v949 = vrot.slane %v650, 7
    %v950 = vsel %vm897, %v949, %v948
    %v951 = vsel %vm899, %v949, %v950
    %v952 = vsel %vm901, %v949, %v951
    %v953 = vsel %vm903, %v949, %v952
    %v954 = vsel %vm892, %v668, %v668
    %v955 = vsel %vm894, %v668, %v954
    %v956 = vrot.slane %v670, 7
    %v957 = vsel %vm897, %v956, %v955
    %v958 = vsel %vm899, %v956, %v957
    %v959 = vsel %vm901, %v956, %v958
    %v960 = vsel %vm903, %v956, %v959
    %v961 = vsel %vm892, %v672, %v672
    %v962 = vsel %vm894, %v672, %v961
    %v963 = vrot.slane %v674, 7
    %v964 = vsel %vm897, %v963, %v962
    %v965 = vsel %vm899, %v963, %v964
    %v966 = vsel %vm901, %v963, %v965
    %v967 = vsel %vm903, %v963, %v966
    %v968 = vsel %vm892, %v676, %v676
    %v969 = vsel %vm894, %v676, %v968
    %v970 = vrot.slane %v678, 7
    %v971 = vsel %vm897, %v970, %v969
    %v972 = vsel %vm899, %v970, %v971
    %v973 = vsel %vm901, %v970, %v972
    %v974 = vsel %vm903, %v970, %v973
    %v975 = vsel %vm892, %v680, %v680
    %v976 = vsel %vm894, %v680, %v975
    %v977 = vrot.slane %v682, 7
    %v978 = vsel %vm897, %v977, %v976
    %v979 = vsel %vm899, %v977, %v978
    %v980 = vsel %vm901, %v977, %v979
    %v981 = vsel %vm903, %v977, %v980
    %v982 = vsel %vm892, %v684, %v684
    %v983 = vsel %vm894, %v684, %v982
    %v984 = vrot.slane %v686, 7
    %v985 = vsel %vm897, %v984, %v983
    %v986 = vsel %vm899, %v984, %v985
    %v987 = vsel %vm901, %v984, %v986
    %v988 = vsel %vm903, %v984, %v987
    %v989 = vsel %vm892, %v688, %v688
    %v990 = vsel %vm894, %v688, %v989
    %v991 = vrot.slane %v690, 7
    %v992 = vsel %vm897, %v991, %v990
    %v993 = vsel %vm899, %v991, %v992
    %v994 = vsel %vm901, %v991, %v993
    %v995 = vsel %vm903, %v991, %v994
    %v996 = vsel %vm892, %v692, %v692
    %v997 = vsel %vm894, %v692, %v996
    %v998 = vrot.slane %v694, 7
    %v999 = vsel %vm897, %v998, %v997
    %v1000 = vsel %vm899, %v998, %v999
    %v1001 = vsel %vm901, %v998, %v1000
    %v1002 = vsel %vm903, %v998, %v1001
    %v1003 = vsel %vm892, %v696, %v696
    %v1004 = vsel %vm894, %v696, %v1003
    %v1005 = vrot.slane %v698, 7
    %v1006 = vsel %vm897, %v1005, %v1004
    %v1007 = vsel %vm899, %v1005, %v1006
    %v1008 = vsel %vm901, %v1005, %v1007
    %v1009 = vsel %vm903, %v1005, %v1008
    %v1010 = vsel %vm892, %v700, %v700
    %v1011 = vsel %vm894, %v700, %v1010
    %v1012 = vrot.slane %v702, 7
    %v1013 = vsel %vm897, %v1012, %v1011
    %v1014 = vsel %vm899, %v1012, %v1013
    %v1015 = vsel %vm901, %v1012, %v1014
    %v1016 = vsel %vm903, %v1012, %v1015
    %v1017 = vsel %vm892, %v704, %v704
    %v1018 = vsel %vm894, %v704, %v1017
    %v1019 = vrot.slane %v706, 7
    %v1020 = vsel %vm897, %v1019, %v1018
    %v1021 = vsel %vm899, %v1019, %v1020
    %v1022 = vsel %vm901, %v1019, %v1021
    %v1023 = vsel %vm903, %v1019, %v1022
    %v1024 = vsel %vm892, %v708, %v708
    %v1025 = vsel %vm894, %v708, %v1024
    %v1026 = vrot.slane %v710, 7
    %v1027 = vsel %vm897, %v1026, %v1025
    %v1028 = vsel %vm899, %v1026, %v1027
    %v1029 = vsel %vm901, %v1026, %v1028
    %v1030 = vsel %vm903, %v1026, %v1029
    %v1031 = vsel %vm892, %v712, %v712
    %v1032 = vsel %vm894, %v712, %v1031
    %v1033 = vrot.slane %v714, 7
    %v1034 = vsel %vm897, %v1033, %v1032
    %v1035 = vsel %vm899, %v1033, %v1034
    %v1036 = vsel %vm901, %v1033, %v1035
    %v1037 = vsel %vm903, %v1033, %v1036
    %v1038 = vsel %vm892, %v716, %v716
    %v1039 = vsel %vm894, %v716, %v1038
    %v1040 = vrot.slane %v718, 7
    %v1041 = vsel %vm897, %v1040, %v1039
    %v1042 = vsel %vm899, %v1040, %v1041
    %v1043 = vsel %vm901, %v1040, %v1042
    %v1044 = vsel %vm903, %v1040, %v1043
    %v1045 = vsel %vm892, %v720, %v720
    %v1046 = vsel %vm894, %v720, %v1045
    %v1047 = vrot.slane %v722, 7
    %v1048 = vsel %vm897, %v1047, %v1046
    %v1049 = vsel %vm899, %v1047, %v1048
    %v1050 = vsel %vm901, %v1047, %v1049
    %v1051 = vsel %vm903, %v1047, %v1050
    %v1052 = vsel %vm892, %v724, %v724
    %v1053 = vsel %vm894, %v724, %v1052
    %v1054 = vrot.slane %v726, 7
    %v1055 = vsel %vm897, %v1054, %v1053
    %v1056 = vsel %vm899, %v1054, %v1055
    %v1057 = vsel %vm901, %v1054, %v1056
    %v1058 = vsel %vm903, %v1054, %v1057
    %v1059 = vsel %vm892, %v728, %v728
    %v1060 = vsel %vm894, %v728, %v1059
    %v1061 = vrot.slane %v730, 7
    %v1062 = vsel %vm897, %v1061, %v1060
    %v1063 = vsel %vm899, %v1061, %v1062
    %v1064 = vsel %vm901, %v1061, %v1063
    %v1065 = vsel %vm903, %v1061, %v1064
    %v1066 = vsel %vm892, %v732, %v732
    %v1067 = vsel %vm894, %v732, %v1066
    %v1068 = vrot.slane %v734, 7
    %v1069 = vsel %vm897, %v1068, %v1067
    %v1070 = vsel %vm899, %v1068, %v1069
    %v1071 = vsel %vm901, %v1068, %v1070
    %v1072 = vsel %vm903, %v1068, %v1071
    %v1073 = vsel %vm892, %v736, %v736
    %v1074 = vsel %vm894, %v736, %v1073
    %v1075 = vrot.slane %v738, 7
    %v1076 = vsel %vm897, %v1075, %v1074
    %v1077 = vsel %vm899, %v1075, %v1076
    %v1078 = vsel %vm901, %v1075, %v1077
    %v1079 = vsel %vm903, %v1075, %v1078
    %v1080 = vsel %vm892, %v740, %v740
    %v1081 = vsel %vm894, %v740, %v1080
    %v1082 = vrot.slane %v742, 7
    %v1083 = vsel %vm897, %v1082, %v1081
    %v1084 = vsel %vm899, %v1082, %v1083
    %v1085 = vsel %vm901, %v1082, %v1084
    %v1086 = vsel %vm903, %v1082, %v1085
    %v1087 = vsel %vm892, %v744, %v744
    %v1088 = vsel %vm894, %v744, %v1087
    %v1089 = vrot.slane %v746, 7
    %v1090 = vsel %vm897, %v1089, %v1088
    %v1091 = vsel %vm899, %v1089, %v1090
    %v1092 = vsel %vm901, %v1089, %v1091
    %v1093 = vsel %vm903, %v1089, %v1092
    %v1094 = vsel %vm892, %v748, %v748
    %v1095 = vsel %vm894, %v748, %v1094
    %v1096 = vrot.slane %v750, 7
    %v1097 = vsel %vm897, %v1096, %v1095
    %v1098 = vsel %vm899, %v1096, %v1097
    %v1099 = vsel %vm901, %v1096, %v1098
    %v1100 = vsel %vm903, %v1096, %v1099
    %v1101 = vsel %vm892, %v752, %v752
    %v1102 = vsel %vm894, %v752, %v1101
    %v1103 = vrot.slane %v754, 7
    %v1104 = vsel %vm897, %v1103, %v1102
    %v1105 = vsel %vm899, %v1103, %v1104
    %v1106 = vsel %vm901, %v1103, %v1105
    %v1107 = vsel %vm903, %v1103, %v1106
    %v1108 = vsel %vm892, %v756, %v756
    %v1109 = vsel %vm894, %v756, %v1108
    %v1110 = vrot.slane %v758, 7
    %v1111 = vsel %vm897, %v1110, %v1109
    %v1112 = vsel %vm899, %v1110, %v1111
    %v1113 = vsel %vm901, %v1110, %v1112
    %v1114 = vsel %vm903, %v1110, %v1113
    %v1115 = vsel %vm892, %v760, %v760
    %v1116 = vsel %vm894, %v760, %v1115
    %v1117 = vrot.slane %v762, 7
    %v1118 = vsel %vm897, %v1117, %v1116
    %v1119 = vsel %vm899, %v1117, %v1118
    %v1120 = vsel %vm901, %v1117, %v1119
    %v1121 = vsel %vm903, %v1117, %v1120
    %v1122 = vsel %vm892, %v764, %v764
    %v1123 = vsel %vm894, %v764, %v1122
    %v1124 = vrot.slane %v766, 7
    %v1125 = vsel %vm897, %v1124, %v1123
    %v1126 = vsel %vm899, %v1124, %v1125
    %v1127 = vsel %vm901, %v1124, %v1126
    %v1128 = vsel %vm903, %v1124, %v1127
    %v1129 = vsel %vm892, %v768, %v768
    %v1130 = vsel %vm894, %v768, %v1129
    %v1131 = vrot.slane %v770, 7
    %v1132 = vsel %vm897, %v1131, %v1130
    %v1133 = vsel %vm899, %v1131, %v1132
    %v1134 = vsel %vm901, %v1131, %v1133
    %v1135 = vsel %vm903, %v1131, %v1134
    %v1136 = vsel %vm892, %v772, %v772
    %v1137 = vsel %vm894, %v772, %v1136
    %v1138 = vrot.slane %v774, 7
    %v1139 = vsel %vm897, %v1138, %v1137
    %v1140 = vsel %vm899, %v1138, %v1139
    %v1141 = vsel %vm901, %v1138, %v1140
    %v1142 = vsel %vm903, %v1138, %v1141
    %v1143 = vsel %vm892, %v776, %v776
    %v1144 = vsel %vm894, %v776, %v1143
    %v1145 = vrot.slane %v778, 7
    %v1146 = vsel %vm897, %v1145, %v1144
    %v1147 = vsel %vm899, %v1145, %v1146
    %v1148 = vsel %vm901, %v1145, %v1147
    %v1149 = vsel %vm903, %v1145, %v1148
    %v1150 = vsel %vm892, %v780, %v780
    %v1151 = vsel %vm894, %v780, %v1150
    %v1152 = vrot.slane %v782, 7
    %v1153 = vsel %vm897, %v1152, %v1151
    %v1154 = vsel %vm899, %v1152, %v1153
    %v1155 = vsel %vm901, %v1152, %v1154
    %v1156 = vsel %vm903, %v1152, %v1155
    %v1157 = vsel %vm892, %v784, %v784
    %v1158 = vsel %vm894, %v784, %v1157
    %v1159 = vrot.slane %v786, 7
    %v1160 = vsel %vm897, %v1159, %v1158
    %v1161 = vsel %vm899, %v1159, %v1160
    %v1162 = vsel %vm901, %v1159, %v1161
    %v1163 = vsel %vm903, %v1159, %v1162
    %v1164 = vsel %vm892, %v788, %v788
    %v1165 = vsel %vm894, %v788, %v1164
    %v1166 = vrot.slane %v790, 7
    %v1167 = vsel %vm897, %v1166, %v1165
    %v1168 = vsel %vm899, %v1166, %v1167
    %v1169 = vsel %vm901, %v1166, %v1168
    %v1170 = vsel %vm903, %v1166, %v1169
    %v1171 = vsel %vm892, %v792, %v792
    %v1172 = vsel %vm894, %v792, %v1171
    %v1173 = vrot.slane %v794, 7
    %v1174 = vsel %vm897, %v1173, %v1172
    %v1175 = vsel %vm899, %v1173, %v1174
    %v1176 = vsel %vm901, %v1173, %v1175
    %v1177 = vsel %vm903, %v1173, %v1176
    %v1178 = vsel %vm892, %v796, %v796
    %v1179 = vsel %vm894, %v796, %v1178
    %v1180 = vrot.slane %v798, 7
    %v1181 = vsel %vm897, %v1180, %v1179
    %v1182 = vsel %vm899, %v1180, %v1181
    %v1183 = vsel %vm901, %v1180, %v1182
    %v1184 = vsel %vm903, %v1180, %v1183
    %v1185 = vsel %vm892, %v800, %v800
    %v1186 = vsel %vm894, %v800, %v1185
    %v1187 = vrot.slane %v802, 7
    %v1188 = vsel %vm897, %v1187, %v1186
    %v1189 = vsel %vm899, %v1187, %v1188
    %v1190 = vsel %vm901, %v1187, %v1189
    %v1191 = vsel %vm903, %v1187, %v1190
    %v1192 = vsel %vm892, %v804, %v804
    %v1193 = vsel %vm894, %v804, %v1192
    %v1194 = vrot.slane %v806, 7
    %v1195 = vsel %vm897, %v1194, %v1193
    %v1196 = vsel %vm899, %v1194, %v1195
    %v1197 = vsel %vm901, %v1194, %v1196
    %v1198 = vsel %vm903, %v1194, %v1197
    %v1199 = vsel %vm892, %v808, %v808
    %v1200 = vsel %vm894, %v808, %v1199
    %v1201 = vrot.slane %v810, 7
    %v1202 = vsel %vm897, %v1201, %v1200
    %v1203 = vsel %vm899, %v1201, %v1202
    %v1204 = vsel %vm901, %v1201, %v1203
    %v1205 = vsel %vm903, %v1201, %v1204
    %v1206 = vsel %vm892, %v812, %v812
    %v1207 = vsel %vm894, %v812, %v1206
    %v1208 = vrot.slane %v814, 7
    %v1209 = vsel %vm897, %v1208, %v1207
    %v1210 = vsel %vm899, %v1208, %v1209
    %v1211 = vsel %vm901, %v1208, %v1210
    %v1212 = vsel %vm903, %v1208, %v1211
    %v1213 = vsel %vm892, %v816, %v816
    %v1214 = vsel %vm894, %v816, %v1213
    %v1215 = vrot.slane %v818, 7
    %v1216 = vsel %vm897, %v1215, %v1214
    %v1217 = vsel %vm899, %v1215, %v1216
    %v1218 = vsel %vm901, %v1215, %v1217
    %v1219 = vsel %vm903, %v1215, %v1218
    %v1220 = vsel %vm892, %v820, %v820
    %v1221 = vsel %vm894, %v820, %v1220
    %v1222 = vrot.slane %v822, 7
    %v1223 = vsel %vm897, %v1222, %v1221
    %v1224 = vsel %vm899, %v1222, %v1223
    %v1225 = vsel %vm901, %v1222, %v1224
    %v1226 = vsel %vm903, %v1222, %v1225
    %v1227 = vsel %vm892, %v824, %v824
    %v1228 = vsel %vm894, %v824, %v1227
    %v1229 = vrot.slane %v826, 7
    %v1230 = vsel %vm897, %v1229, %v1228
    %v1231 = vsel %vm899, %v1229, %v1230
    %v1232 = vsel %vm901, %v1229, %v1231
    %v1233 = vsel %vm903, %v1229, %v1232
    %v1234 = vsel %vm892, %v828, %v828
    %v1235 = vsel %vm894, %v828, %v1234
    %v1236 = vrot.slane %v830, 7
    %v1237 = vsel %vm897, %v1236, %v1235
    %v1238 = vsel %vm899, %v1236, %v1237
    %v1239 = vsel %vm901, %v1236, %v1238
    %v1240 = vsel %vm903, %v1236, %v1239
    %v1241 = vsel %vm892, %v832, %v832
    %v1242 = vsel %vm894, %v832, %v1241
    %v1243 = vrot.slane %v834, 7
    %v1244 = vsel %vm897, %v1243, %v1242
    %v1245 = vsel %vm899, %v1243, %v1244
    %v1246 = vsel %vm901, %v1243, %v1245
    %v1247 = vsel %vm903, %v1243, %v1246
    %v1248 = vsel %vm892, %v836, %v836
    %v1249 = vsel %vm894, %v836, %v1248
    %v1250 = vrot.slane %v838, 7
    %v1251 = vsel %vm897, %v1250, %v1249
    %v1252 = vsel %vm899, %v1250, %v1251
    %v1253 = vsel %vm901, %v1250, %v1252
    %v1254 = vsel %vm903, %v1250, %v1253
    %v1255 = vsel %vm892, %v840, %v840
    %v1256 = vsel %vm894, %v840, %v1255
    %v1257 = vrot.slane %v842, 7
    %v1258 = vsel %vm897, %v1257, %v1256
    %v1259 = vsel %vm899, %v1257, %v1258
    %v1260 = vsel %vm901, %v1257, %v1259
    %v1261 = vsel %vm903, %v1257, %v1260
    %v1262 = vsel %vm892, %v844, %v844
    %v1263 = vsel %vm894, %v844, %v1262
    %v1264 = vrot.slane %v846, 7
    %v1265 = vsel %vm897, %v1264, %v1263
    %v1266 = vsel %vm899, %v1264, %v1265
    %v1267 = vsel %vm901, %v1264, %v1266
    %v1268 = vsel %vm903, %v1264, %v1267
    %v1269 = vsel %vm892, %v848, %v848
    %v1270 = vsel %vm894, %v848, %v1269
    %v1271 = vrot.slane %v850, 7
    %v1272 = vsel %vm897, %v1271, %v1270
    %v1273 = vsel %vm899, %v1271, %v1272
    %v1274 = vsel %vm901, %v1271, %v1273
    %v1275 = vsel %vm903, %v1271, %v1274
    %v1276 = vsel %vm892, %v852, %v852
    %v1277 = vsel %vm894, %v852, %v1276
    %v1278 = vrot.slane %v854, 7
    %v1279 = vsel %vm897, %v1278, %v1277
    %v1280 = vsel %vm899, %v1278, %v1279
    %v1281 = vsel %vm901, %v1278, %v1280
    %v1282 = vsel %vm903, %v1278, %v1281
    %v1283 = vsel %vm892, %v856, %v856
    %v1284 = vsel %vm894, %v856, %v1283
    %v1285 = vrot.slane %v858, 7
    %v1286 = vsel %vm897, %v1285, %v1284
    %v1287 = vsel %vm899, %v1285, %v1286
    %v1288 = vsel %vm901, %v1285, %v1287
    %v1289 = vsel %vm903, %v1285, %v1288
    %v1290 = vsel %vm892, %v860, %v860
    %v1291 = vsel %vm894, %v860, %v1290
    %v1292 = vrot.slane %v862, 7
    %v1293 = vsel %vm897, %v1292, %v1291
    %v1294 = vsel %vm899, %v1292, %v1293
    %v1295 = vsel %vm901, %v1292, %v1294
    %v1296 = vsel %vm903, %v1292, %v1295
    %v1297 = vsel %vm892, %v864, %v864
    %v1298 = vsel %vm894, %v864, %v1297
    %v1299 = vrot.slane %v866, 7
    %v1300 = vsel %vm897, %v1299, %v1298
    %v1301 = vsel %vm899, %v1299, %v1300
    %v1302 = vsel %vm901, %v1299, %v1301
    %v1303 = vsel %vm903, %v1299, %v1302
    %v1304 = vsel %vm892, %v868, %v868
    %v1305 = vsel %vm894, %v868, %v1304
    %v1306 = vrot.slane %v870, 7
    %v1307 = vsel %vm897, %v1306, %v1305
    %v1308 = vsel %vm899, %v1306, %v1307
    %v1309 = vsel %vm901, %v1306, %v1308
    %v1310 = vsel %vm903, %v1306, %v1309
    %v1311 = vsel %vm892, %v872, %v872
    %v1312 = vsel %vm894, %v872, %v1311
    %v1313 = vrot.slane %v874, 7
    %v1314 = vsel %vm897, %v1313, %v1312
    %v1315 = vsel %vm899, %v1313, %v1314
    %v1316 = vsel %vm901, %v1313, %v1315
    %v1317 = vsel %vm903, %v1313, %v1316
    %v1318 = vsel %vm892, %v876, %v876
    %v1319 = vsel %vm894, %v876, %v1318
    %v1320 = vrot.slane %v878, 7
    %v1321 = vsel %vm897, %v1320, %v1319
    %v1322 = vsel %vm899, %v1320, %v1321
    %v1323 = vsel %vm901, %v1320, %v1322
    %v1324 = vsel %vm903, %v1320, %v1323
    %v1325 = vsel %vm892, %v880, %v880
    %v1326 = vsel %vm894, %v880, %v1325
    %v1327 = vrot.slane %v882, 7
    %v1328 = vsel %vm897, %v1327, %v1326
    %v1329 = vsel %vm899, %v1327, %v1328
    %v1330 = vsel %vm901, %v1327, %v1329
    %v1331 = vsel %vm903, %v1327, %v1330
    %v1332 = vsel %vm892, %v884, %v884
    %v1333 = vsel %vm894, %v884, %v1332
    %v1334 = vrot.slane %v886, 7
    %v1335 = vsel %vm897, %v1334, %v1333
    %v1336 = vsel %vm899, %v1334, %v1335
    %v1337 = vsel %vm901, %v1334, %v1336
    %v1338 = vsel %vm903, %v1334, %v1337
    %v1339 = vsel %vm892, %v888, %v888
    %v1340 = vsel %vm894, %v888, %v1339
    %v1341 = vrot.slane %v890, 7
    %v1342 = vsel %vm897, %v1341, %v1340
    %v1343 = vsel %vm899, %v1341, %v1342
    %v1344 = vsel %vm901, %v1341, %v1343
    %v1345 = vsel %vm903, %v1341, %v1344
    %v1410 = vcombine.low %v904, %v960
    %v1412 = vunpack.c.l.s4 1934713408
    %v1413 = vunpack.c.0.s8 %v1412
    %v1414 = vlaneseq
    %v1415 = vshrl.u32 %v1414, 7
    %v1416 = vsub.s32 %v1413, %v1415
    %v1417 = vrot.slane %v1410, %v1416
    %v1418 = vcombine.high %v1417, 0.0
    %v1419 = vcombine.low %v1016, %v1072
    %v1421 = vunpack.c.l.s4 1934713408
    %v1422 = vunpack.c.0.s8 %v1421
    %v1423 = vlaneseq
    %v1424 = vshrl.u32 %v1423, 7
    %v1425 = vsub.s32 %v1422, %v1424
    %v1426 = vrot.slane %v1419, %v1425
    %v1427 = vcombine.high %v1426, 0.0
    %v1428 = vcombine.low %v1128, %v1184
    %v1430 = vunpack.c.l.s4 1934713408
    %v1431 = vunpack.c.0.s8 %v1430
    %v1432 = vlaneseq
    %v1433 = vshrl.u32 %v1432, 7
    %v1434 = vsub.s32 %v1431, %v1433
    %v1435 = vrot.slane %v1428, %v1434
    %v1436 = vcombine.high %v1435, 0.0
    %v1437 = vcombine.low %v1240, %v1296
    %v1439 = vunpack.c.l.s4 1934713408
    %v1440 = vunpack.c.0.s8 %v1439
    %v1441 = vlaneseq
    %v1442 = vshrl.u32 %v1441, 7
    %v1443 = vsub.s32 %v1440, %v1442
    %v1444 = vrot.slane %v1437, %v1443
    %v1445 = vcombine.high %v1444, 0.0
    %v1446 = vcombine.low %v911, %v967
    %v1448 = vunpack.c.l.s4 1934713408
    %v1449 = vunpack.c.0.s8 %v1448
    %v1450 = vlaneseq
    %v1451 = vshrl.u32 %v1450, 7
    %v1452 = vsub.s32 %v1449, %v1451
    %v1453 = vrot.slane %v1446, %v1452
    %v1454 = vcombine.high %v1453, 0.0
    %v1455 = vcombine.low %v1023, %v1079
    %v1457 = vunpack.c.l.s4 1934713408
    %v1458 = vunpack.c.0.s8 %v1457
    %v1459 = vlaneseq
    %v1460 = vshrl.u32 %v1459, 7
    %v1461 = vsub.s32 %v1458, %v1460
    %v1462 = vrot.slane %v1455, %v1461
    %v1463 = vcombine.high %v1462, 0.0
    %v1464 = vcombine.low %v1135, %v1191
    %v1466 = vunpack.c.l.s4 1934713408
    %v1467 = vunpack.c.0.s8 %v1466
    %v1468 = vlaneseq
    %v1469 = vshrl.u32 %v1468, 7
    %v1470 = vsub.s32 %v1467, %v1469
    %v1471 = vrot.slane %v1464, %v1470
    %v1472 = vcombine.high %v1471, 0.0
    %v1473 = vcombine.low %v1247, %v1303
    %v1475 = vunpack.c.l.s4 1934713408
    %v1476 = vunpack.c.0.s8 %v1475
    %v1477 = vlaneseq
    %v1478 = vshrl.u32 %v1477, 7
    %v1479 = vsub.s32 %v1476, %v1478
    %v1480 = vrot.slane %v1473, %v1479
    %v1481 = vcombine.high %v1480, 0.0
    %v1482 = vcombine.low %v918, %v974
    %v1484 = vunpack.c.l.s4 1934713408
    %v1485 = vunpack.c.0.s8 %v1484
    %v1486 = vlaneseq
    %v1487 = vshrl.u32 %v1486, 7
    %v1488 = vsub.s32 %v1485, %v1487
    %v1489 = vrot.slane %v1482, %v1488
    %v1490 = vcombine.high %v1489, 0.0
    %v1491 = vcombine.low %v1030, %v1086
    %v1493 = vunpack.c.l.s4 1934713408
    %v1494 = vunpack.c.0.s8 %v1493
    %v1495 = vlaneseq
    %v1496 = vshrl.u32 %v1495, 7
    %v1497 = vsub.s32 %v1494, %v1496
    %v1498 = vrot.slane %v1491, %v1497
    %v1499 = vcombine.high %v1498, 0.0
    %v1500 = vcombine.low %v1142, %v1198
    %v1502 = vunpack.c.l.s4 1934713408
    %v1503 = vunpack.c.0.s8 %v1502
    %v1504 = vlaneseq
    %v1505 = vshrl.u32 %v1504, 7
    %v1506 = vsub.s32 %v1503, %v1505
    %v1507 = vrot.slane %v1500, %v1506
    %v1508 = vcombine.high %v1507, 0.0
    %v1509 = vcombine.low %v1254, %v1310
    %v1511 = vunpack.c.l.s4 1934713408
    %v1512 = vunpack.c.0.s8 %v1511
    %v1513 = vlaneseq
    %v1514 = vshrl.u32 %v1513, 7
    %v1515 = vsub.s32 %v1512, %v1514
    %v1516 = vrot.slane %v1509, %v1515
    %v1517 = vcombine.high %v1516, 0.0
    %v1518 = vcombine.low %v925, %v981
    %v1520 = vunpack.c.l.s4 1934713408
    %v1521 = vunpack.c.0.s8 %v1520
    %v1522 = vlaneseq
    %v1523 = vshrl.u32 %v1522, 7
    %v1524 = vsub.s32 %v1521, %v1523
    %v1525 = vrot.slane %v1518, %v1524
    %v1526 = vcombine.high %v1525, 0.0
    %v1527 = vcombine.low %v1037, %v1093
    %v1529 = vunpack.c.l.s4 1934713408
    %v1530 = vunpack.c.0.s8 %v1529
    %v1531 = vlaneseq
    %v1532 = vshrl.u32 %v1531, 7
    %v1533 = vsub.s32 %v1530, %v1532
    %v1534 = vrot.slane %v1527, %v1533
    %v1535 = vcombine.high %v1534, 0.0
    %v1536 = vcombine.low %v1149, %v1205
    %v1538 = vunpack.c.l.s4 1934713408
    %v1539 = vunpack.c.0.s8 %v1538
    %v1540 = vlaneseq
    %v1541 = vshrl.u32 %v1540, 7
    %v1542 = vsub.s32 %v1539, %v1541
    %v1543 = vrot.slane %v1536, %v1542
    %v1544 = vcombine.high %v1543, 0.0
    %v1545 = vcombine.low %v1261, %v1317
    %v1547 = vunpack.c.l.s4 1934713408
    %v1548 = vunpack.c.0.s8 %v1547
    %v1549 = vlaneseq
    %v1550 = vshrl.u32 %v1549, 7
    %v1551 = vsub.s32 %v1548, %v1550
    %v1552 = vrot.slane %v1545, %v1551
    %v1553 = vcombine.high %v1552, 0.0
    %v1554 = vcombine.low %v932, %v988
    %v1556 = vunpack.c.l.s4 1934713408
    %v1557 = vunpack.c.0.s8 %v1556
    %v1558 = vlaneseq
    %v1559 = vshrl.u32 %v1558, 7
    %v1560 = vsub.s32 %v1557, %v1559
    %v1561 = vrot.slane %v1554, %v1560
    %v1562 = vcombine.high %v1561, 0.0
    %v1563 = vcombine.low %v1044, %v1100
    %v1565 = vunpack.c.l.s4 1934713408
    %v1566 = vunpack.c.0.s8 %v1565
    %v1567 = vlaneseq
    %v1568 = vshrl.u32 %v1567, 7
    %v1569 = vsub.s32 %v1566, %v1568
    %v1570 = vrot.slane %v1563, %v1569
    %v1571 = vcombine.high %v1570, 0.0
    %v1572 = vcombine.low %v1156, %v1212
    %v1574 = vunpack.c.l.s4 1934713408
    %v1575 = vunpack.c.0.s8 %v1574
    %v1576 = vlaneseq
    %v1577 = vshrl.u32 %v1576, 7
    %v1578 = vsub.s32 %v1575, %v1577
    %v1579 = vrot.slane %v1572, %v1578
    %v1580 = vcombine.high %v1579, 0.0
    %v1581 = vcombine.low %v1268, %v1324
    %v1583 = vunpack.c.l.s4 1934713408
    %v1584 = vunpack.c.0.s8 %v1583
    %v1585 = vlaneseq
    %v1586 = vshrl.u32 %v1585, 7
    %v1587 = vsub.s32 %v1584, %v1586
    %v1588 = vrot.slane %v1581, %v1587
    %v1589 = vcombine.high %v1588, 0.0
    %v1590 = vcombine.low %v939, %v995
    %v1592 = vunpack.c.l.s4 1934713408
    %v1593 = vunpack.c.0.s8 %v1592
    %v1594 = vlaneseq
    %v1595 = vshrl.u32 %v1594, 7
    %v1596 = vsub.s32 %v1593, %v1595
    %v1597 = vrot.slane %v1590, %v1596
    %v1598 = vcombine.high %v1597, 0.0
    %v1599 = vcombine.low %v1051, %v1107
    %v1601 = vunpack.c.l.s4 1934713408
    %v1602 = vunpack.c.0.s8 %v1601
    %v1603 = vlaneseq
    %v1604 = vshrl.u32 %v1603, 7
    %v1605 = vsub.s32 %v1602, %v1604
    %v1606 = vrot.slane %v1599, %v1605
    %v1607 = vcombine.high %v1606, 0.0
    %v1608 = vcombine.low %v1163, %v1219
    %v1610 = vunpack.c.l.s4 1934713408
    %v1611 = vunpack.c.0.s8 %v1610
    %v1612 = vlaneseq
    %v1613 = vshrl.u32 %v1612, 7
    %v1614 = vsub.s32 %v1611, %v1613
    %v1615 = vrot.slane %v1608, %v1614
    %v1616 = vcombine.high %v1615, 0.0
    %v1617 = vcombine.low %v1275, %v1331
    %v1619 = vunpack.c.l.s4 1934713408
    %v1620 = vunpack.c.0.s8 %v1619
    %v1621 = vlaneseq
    %v1622 = vshrl.u32 %v1621, 7
    %v1623 = vsub.s32 %v1620, %v1622
    %v1624 = vrot.slane %v1617, %v1623
    %v1625 = vcombine.high %v1624, 0.0
    %v1626 = vcombine.low %v946, %v1002
    %v1628 = vunpack.c.l.s4 1934713408
    %v1629 = vunpack.c.0.s8 %v1628
    %v1630 = vlaneseq
    %v1631 = vshrl.u32 %v1630, 7
    %v1632 = vsub.s32 %v1629, %v1631
    %v1633 = vrot.slane %v1626, %v1632
    %v1634 = vcombine.high %v1633, 0.0
    %v1635 = vcombine.low %v1058, %v1114
    %v1637 = vunpack.c.l.s4 1934713408
    %v1638 = vunpack.c.0.s8 %v1637
    %v1639 = vlaneseq
    %v1640 = vshrl.u32 %v1639, 7
    %v1641 = vsub.s32 %v1638, %v1640
    %v1642 = vrot.slane %v1635, %v1641
    %v1643 = vcombine.high %v1642, 0.0
    %v1644 = vcombine.low %v1170, %v1226
    %v1646 = vunpack.c.l.s4 1934713408
    %v1647 = vunpack.c.0.s8 %v1646
    %v1648 = vlaneseq
    %v1649 = vshrl.u32 %v1648, 7
    %v1650 = vsub.s32 %v1647, %v1649
    %v1651 = vrot.slane %v1644, %v1650
    %v1652 = vcombine.high %v1651, 0.0
    %v1653 = vcombine.low %v1282, %v1338
    %v1655 = vunpack.c.l.s4 1934713408
    %v1656 = vunpack.c.0.s8 %v1655
    %v1657 = vlaneseq
    %v1658 = vshrl.u32 %v1657, 7
    %v1659 = vsub.s32 %v1656, %v1658
    %v1660 = vrot.slane %v1653, %v1659
    %v1661 = vcombine.high %v1660, 0.0
    %v1662 = vcombine.low %v953, %v1009
    %v1664 = vunpack.c.l.s4 1934713408
    %v1665 = vunpack.c.0.s8 %v1664
    %v1666 = vlaneseq
    %v1667 = vshrl.u32 %v1666, 7
    %v1668 = vsub.s32 %v1665, %v1667
    %v1669 = vrot.slane %v1662, %v1668
    %v1670 = vcombine.high %v1669, 0.0
    %v1671 = vcombine.low %v1065, %v1121
    %v1673 = vunpack.c.l.s4 1934713408
    %v1674 = vunpack.c.0.s8 %v1673
    %v1675 = vlaneseq
    %v1676 = vshrl.u32 %v1675, 7
    %v1677 = vsub.s32 %v1674, %v1676
    %v1678 = vrot.slane %v1671, %v1677
    %v1679 = vcombine.high %v1678, 0.0
    %v1680 = vcombine.low %v1177, %v1233
    %v1682 = vunpack.c.l.s4 1934713408
    %v1683 = vunpack.c.0.s8 %v1682
    %v1684 = vlaneseq
    %v1685 = vshrl.u32 %v1684, 7
    %v1686 = vsub.s32 %v1683, %v1685
    %v1687 = vrot.slane %v1680, %v1686
    %v1688 = vcombine.high %v1687, 0.0
    %v1689 = vcombine.low %v1289, %v1345
    %v1691 = vunpack.c.l.s4 1934713408
    %v1692 = vunpack.c.0.s8 %v1691
    %v1693 = vlaneseq
    %v1694 = vshrl.u32 %v1693, 7
    %v1695 = vsub.s32 %v1692, %v1694
    %v1696 = vrot.slane %v1689, %v1695
    %v1697 = vcombine.high %v1696, 0.0
    %1762 = vrot.lane.b32.xlu0 %v1417, 120
    %v1763 = vpop.permute.xlu0 %1762
    %1764 = vrot.lane.b32.xlu0 %v1426, 120
    %v1765 = vpop.permute.xlu0 %1764
    %1766 = vrot.lane.b32.xlu0 %v1435, 120
    %v1767 = vpop.permute.xlu0 %1766
    %1768 = vrot.lane.b32.xlu0 %v1444, 120
    %v1769 = vpop.permute.xlu0 %1768
    %1770 = vrot.lane.b32.xlu0 %v1418, 120
    %v1771 = vpop.permute.xlu0 %1770
    %1772 = vrot.lane.b32.xlu0 %v1427, 120
    %v1773 = vpop.permute.xlu0 %1772
    %1774 = vrot.lane.b32.xlu0 %v1436, 120
    %v1775 = vpop.permute.xlu0 %1774
    %1776 = vrot.lane.b32.xlu0 %v1445, 120
    %v1777 = vpop.permute.xlu0 %1776
    %1778 = vrot.lane.b32.xlu0 %v1453, 120
    %v1779 = vpop.permute.xlu0 %1778
    %1780 = vrot.lane.b32.xlu0 %v1462, 120
    %v1781 = vpop.permute.xlu0 %1780
    %1782 = vrot.lane.b32.xlu0 %v1471, 120
    %v1783 = vpop.permute.xlu0 %1782
    %1784 = vrot.lane.b32.xlu0 %v1480, 120
    %v1785 = vpop.permute.xlu0 %1784
    %1786 = vrot.lane.b32.xlu0 %v1454, 120
    %v1787 = vpop.permute.xlu0 %1786
    %1788 = vrot.lane.b32.xlu0 %v1463, 120
    %v1789 = vpop.permute.xlu0 %1788
    %1790 = vrot.lane.b32.xlu0 %v1472, 120
    %v1791 = vpop.permute.xlu0 %1790
    %1792 = vrot.lane.b32.xlu0 %v1481, 120
    %v1793 = vpop.permute.xlu0 %1792
    %1794 = vrot.lane.b32.xlu0 %v1489, 120
    %v1795 = vpop.permute.xlu0 %1794
    %1796 = vrot.lane.b32.xlu0 %v1498, 120
    %v1797 = vpop.permute.xlu0 %1796
    %1798 = vrot.lane.b32.xlu0 %v1507, 120
    %v1799 = vpop.permute.xlu0 %1798
    %1800 = vrot.lane.b32.xlu0 %v1516, 120
    %v1801 = vpop.permute.xlu0 %1800
    %1802 = vrot.lane.b32.xlu0 %v1490, 120
    %v1803 = vpop.permute.xlu0 %1802
    %1804 = vrot.lane.b32.xlu0 %v1499, 120
    %v1805 = vpop.permute.xlu0 %1804
    %1806 = vrot.lane.b32.xlu0 %v1508, 120
    %v1807 = vpop.permute.xlu0 %1806
    %1808 = vrot.lane.b32.xlu0 %v1517, 120
    %v1809 = vpop.permute.xlu0 %1808
    %1810 = vrot.lane.b32.xlu0 %v1525, 120
    %v1811 = vpop.permute.xlu0 %1810
    %1812 = vrot.lane.b32.xlu0 %v1534, 120
    %v1813 = vpop.permute.xlu0 %1812
    %1814 = vrot.lane.b32.xlu0 %v1543, 120
    %v1815 = vpop.permute.xlu0 %1814
    %1816 = vrot.lane.b32.xlu0 %v1552, 120
    %v1817 = vpop.permute.xlu0 %1816
    %1818 = vrot.lane.b32.xlu0 %v1526, 120
    %v1819 = vpop.permute.xlu0 %1818
    %1820 = vrot.lane.b32.xlu0 %v1535, 120
    %v1821 = vpop.permute.xlu0 %1820
    %1822 = vrot.lane.b32.xlu0 %v1544, 120
    %v1823 = vpop.permute.xlu0 %1822
    %1824 = vrot.lane.b32.xlu0 %v1553, 120
    %v1825 = vpop.permute.xlu0 %1824
    %1826 = vrot.lane.b32.xlu0 %v1561, 120
    %v1827 = vpop.permute.xlu0 %1826
    %1828 = vrot.lane.b32.xlu0 %v1570, 120
    %v1829 = vpop.permute.xlu0 %1828
    %1830 = vrot.lane.b32.xlu0 %v1579, 120
    %v1831 = vpop.permute.xlu0 %1830
    %1832 = vrot.lane.b32.xlu0 %v1588, 120
    %v1833 = vpop.permute.xlu0 %1832
    %1834 = vrot.lane.b32.xlu0 %v1562, 120
    %v1835 = vpop.permute.xlu0 %1834
    %1836 = vrot.lane.b32.xlu0 %v1571, 120
    %v1837 = vpop.permute.xlu0 %1836
    %1838 = vrot.lane.b32.xlu0 %v1580, 120
    %v1839 = vpop.permute.xlu0 %1838
    %1840 = vrot.lane.b32.xlu0 %v1589, 120
    %v1841 = vpop.permute.xlu0 %1840
    %1842 = vrot.lane.b32.xlu0 %v1597, 120
    %v1843 = vpop.permute.xlu0 %1842
    %1844 = vrot.lane.b32.xlu0 %v1606, 120
    %v1845 = vpop.permute.xlu0 %1844
    %1846 = vrot.lane.b32.xlu0 %v1615, 120
    %v1847 = vpop.permute.xlu0 %1846
    %1848 = vrot.lane.b32.xlu0 %v1624, 120
    %v1849 = vpop.permute.xlu0 %1848
    %1850 = vrot.lane.b32.xlu0 %v1598, 120
    %v1851 = vpop.permute.xlu0 %1850
    %1852 = vrot.lane.b32.xlu0 %v1607, 120
    %v1853 = vpop.permute.xlu0 %1852
    %1854 = vrot.lane.b32.xlu0 %v1616, 120
    %v1855 = vpop.permute.xlu0 %1854
    %1856 = vrot.lane.b32.xlu0 %v1625, 120
    %v1857 = vpop.permute.xlu0 %1856
    %1858 = vrot.lane.b32.xlu0 %v1633, 120
    %v1859 = vpop.permute.xlu0 %1858
    %1860 = vrot.lane.b32.xlu0 %v1642, 120
    %v1861 = vpop.permute.xlu0 %1860
    %1862 = vrot.lane.b32.xlu0 %v1651, 120
    %v1863 = vpop.permute.xlu0 %1862
    %1864 = vrot.lane.b32.xlu0 %v1660, 120
    %v1865 = vpop.permute.xlu0 %1864
    %1866 = vrot.lane.b32.xlu0 %v1634, 120
    %v1867 = vpop.permute.xlu0 %1866
    %1868 = vrot.lane.b32.xlu0 %v1643, 120
    %v1869 = vpop.permute.xlu0 %1868
    %1870 = vrot.lane.b32.xlu0 %v1652, 120
    %v1871 = vpop.permute.xlu0 %1870
    %1872 = vrot.lane.b32.xlu0 %v1661, 120
    %v1873 = vpop.permute.xlu0 %1872
    %1874 = vrot.lane.b32.xlu0 %v1669, 120
    %v1875 = vpop.permute.xlu0 %1874
    %1876 = vrot.lane.b32.xlu0 %v1678, 120
    %v1877 = vpop.permute.xlu0 %1876
    %1878 = vrot.lane.b32.xlu0 %v1687, 120
    %v1879 = vpop.permute.xlu0 %1878
    %1880 = vrot.lane.b32.xlu0 %v1696, 120
    %v1881 = vpop.permute.xlu0 %1880
    %1882 = vrot.lane.b32.xlu0 %v1670, 120
    %v1883 = vpop.permute.xlu0 %1882
    %1884 = vrot.lane.b32.xlu0 %v1679, 120
    %v1885 = vpop.permute.xlu0 %1884
    %1886 = vrot.lane.b32.xlu0 %v1688, 120
    %v1887 = vpop.permute.xlu0 %1886
    %1888 = vrot.lane.b32.xlu0 %v1697, 120
    %v1889 = vpop.permute.xlu0 %1888
    %v1954 = vmax.f32 %v1417, %v1763
    %v1955 = vmax.f32 %v1426, %v1765
    %v1956 = vmax.f32 %v1435, %v1767
    %v1957 = vmax.f32 %v1444, %v1769
    %v1958 = vmax.f32 %v1418, %v1771
    %v1959 = vmax.f32 %v1427, %v1773
    %v1960 = vmax.f32 %v1436, %v1775
    %v1961 = vmax.f32 %v1445, %v1777
    %v1962 = vmax.f32 %v1453, %v1779
    %v1963 = vmax.f32 %v1462, %v1781
    %v1964 = vmax.f32 %v1471, %v1783
    %v1965 = vmax.f32 %v1480, %v1785
    %v1966 = vmax.f32 %v1454, %v1787
    %v1967 = vmax.f32 %v1463, %v1789
    %v1968 = vmax.f32 %v1472, %v1791
    %v1969 = vmax.f32 %v1481, %v1793
    %v1970 = vmax.f32 %v1489, %v1795
    %v1971 = vmax.f32 %v1498, %v1797
    %v1972 = vmax.f32 %v1507, %v1799
    %v1973 = vmax.f32 %v1516, %v1801
    %v1974 = vmax.f32 %v1490, %v1803
    %v1975 = vmax.f32 %v1499, %v1805
    %v1976 = vmax.f32 %v1508, %v1807
    %v1977 = vmax.f32 %v1517, %v1809
    %v1978 = vmax.f32 %v1525, %v1811
    %v1979 = vmax.f32 %v1534, %v1813
    %v1980 = vmax.f32 %v1543, %v1815
    %v1981 = vmax.f32 %v1552, %v1817
    %v1982 = vmax.f32 %v1526, %v1819
    %v1983 = vmax.f32 %v1535, %v1821
    %v1984 = vmax.f32 %v1544, %v1823
    %v1985 = vmax.f32 %v1553, %v1825
    %v1986 = vmax.f32 %v1561, %v1827
    %v1987 = vmax.f32 %v1570, %v1829
    %v1988 = vmax.f32 %v1579, %v1831
    %v1989 = vmax.f32 %v1588, %v1833
    %v1990 = vmax.f32 %v1562, %v1835
    %v1991 = vmax.f32 %v1571, %v1837
    %v1992 = vmax.f32 %v1580, %v1839
    %v1993 = vmax.f32 %v1589, %v1841
    %v1994 = vmax.f32 %v1597, %v1843
    %v1995 = vmax.f32 %v1606, %v1845
    %v1996 = vmax.f32 %v1615, %v1847
    %v1997 = vmax.f32 %v1624, %v1849
    %v1998 = vmax.f32 %v1598, %v1851
    %v1999 = vmax.f32 %v1607, %v1853
    %v2000 = vmax.f32 %v1616, %v1855
    %v2001 = vmax.f32 %v1625, %v1857
    %v2002 = vmax.f32 %v1633, %v1859
    %v2003 = vmax.f32 %v1642, %v1861
    %v2004 = vmax.f32 %v1651, %v1863
    %v2005 = vmax.f32 %v1660, %v1865
    %v2006 = vmax.f32 %v1634, %v1867
    %v2007 = vmax.f32 %v1643, %v1869
    %v2008 = vmax.f32 %v1652, %v1871
    %v2009 = vmax.f32 %v1661, %v1873
    %v2010 = vmax.f32 %v1669, %v1875
    %v2011 = vmax.f32 %v1678, %v1877
    %v2012 = vmax.f32 %v1687, %v1879
    %v2013 = vmax.f32 %v1696, %v1881
    %v2014 = vmax.f32 %v1670, %v1883
    %v2015 = vmax.f32 %v1679, %v1885
    %v2016 = vmax.f32 %v1688, %v1887
    %v2017 = vmax.f32 %v1697, %v1889
    %2018 = vst.msk [vmem:[#allocation4] sm:$0x1] %vm114, 0.0
    %2019 = vst.msk [vmem:[#allocation4 + $0x10] sm:$0x1] %vm114, 0.0
    %2020 = vst.msk [vmem:[#allocation4 + $0x9] sm:$0x1] %vm114, 0.0
    %2021 = vst.msk [vmem:[#allocation4 + $0x19] sm:$0x1] %vm114, 0.0
    %v2022 = vcombine.low %v1954, %v1958
    %v2024 = vunpack.c.l.s4 1934713408
    %v2025 = vunpack.c.0.s8 %v2024
    %v2026 = vlaneseq
    %v2027 = vshrl.u32 %v2026, 7
    %v2028 = vsub.s32 %v2025, %v2027
    %v2029 = vrot.slane %v2022, %v2028
    %v2030 = vcombine.high %v2029, 0.0
    %v2031 = vcombine.low %v1962, %v1966
    %v2033 = vunpack.c.l.s4 1934713408
    %v2034 = vunpack.c.0.s8 %v2033
    %v2035 = vlaneseq
    %v2036 = vshrl.u32 %v2035, 7
    %v2037 = vsub.s32 %v2034, %v2036
    %v2038 = vrot.slane %v2031, %v2037
    %v2039 = vcombine.high %v2038, 0.0
    %v2040 = vcombine.low %v1970, %v1974
    %v2042 = vunpack.c.l.s4 1934713408
    %v2043 = vunpack.c.0.s8 %v2042
    %v2044 = vlaneseq
    %v2045 = vshrl.u32 %v2044, 7
    %v2046 = vsub.s32 %v2043, %v2045
    %v2047 = vrot.slane %v2040, %v2046
    %v2048 = vcombine.high %v2047, 0.0
    %v2049 = vcombine.low %v1978, %v1982
    %v2051 = vunpack.c.l.s4 1934713408
    %v2052 = vunpack.c.0.s8 %v2051
    %v2053 = vlaneseq
    %v2054 = vshrl.u32 %v2053, 7
    %v2055 = vsub.s32 %v2052, %v2054
    %v2056 = vrot.slane %v2049, %v2055
    %v2057 = vcombine.high %v2056, 0.0
    %v2058 = vcombine.low %v1955, %v1959
    %v2060 = vunpack.c.l.s4 1934713408
    %v2061 = vunpack.c.0.s8 %v2060
    %v2062 = vlaneseq
    %v2063 = vshrl.u32 %v2062, 7
    %v2064 = vsub.s32 %v2061, %v2063
    %v2065 = vrot.slane %v2058, %v2064
    %v2066 = vcombine.high %v2065, 0.0
    %v2067 = vcombine.low %v1963, %v1967
    %v2069 = vunpack.c.l.s4 1934713408
    %v2070 = vunpack.c.0.s8 %v2069
    %v2071 = vlaneseq
    %v2072 = vshrl.u32 %v2071, 7
    %v2073 = vsub.s32 %v2070, %v2072
    %v2074 = vrot.slane %v2067, %v2073
    %v2075 = vcombine.high %v2074, 0.0
    %v2076 = vcombine.low %v1971, %v1975
    %v2078 = vunpack.c.l.s4 1934713408
    %v2079 = vunpack.c.0.s8 %v2078
    %v2080 = vlaneseq
    %v2081 = vshrl.u32 %v2080, 7
    %v2082 = vsub.s32 %v2079, %v2081
    %v2083 = vrot.slane %v2076, %v2082
    %v2084 = vcombine.high %v2083, 0.0
    %v2085 = vcombine.low %v1979, %v1983
    %v2087 = vunpack.c.l.s4 1934713408
    %v2088 = vunpack.c.0.s8 %v2087
    %v2089 = vlaneseq
    %v2090 = vshrl.u32 %v2089, 7
    %v2091 = vsub.s32 %v2088, %v2090
    %v2092 = vrot.slane %v2085, %v2091
    %v2093 = vcombine.high %v2092, 0.0
    %v2094 = vcombine.low %v1956, %v1960
    %v2096 = vunpack.c.l.s4 1934713408
    %v2097 = vunpack.c.0.s8 %v2096
    %v2098 = vlaneseq
    %v2099 = vshrl.u32 %v2098, 7
    %v2100 = vsub.s32 %v2097, %v2099
    %v2101 = vrot.slane %v2094, %v2100
    %v2102 = vcombine.high %v2101, 0.0
    %v2103 = vcombine.low %v1964, %v1968
    %v2105 = vunpack.c.l.s4 1934713408
    %v2106 = vunpack.c.0.s8 %v2105
    %v2107 = vlaneseq
    %v2108 = vshrl.u32 %v2107, 7
    %v2109 = vsub.s32 %v2106, %v2108
    %v2110 = vrot.slane %v2103, %v2109
    %v2111 = vcombine.high %v2110, 0.0
    %v2112 = vcombine.low %v1972, %v1976
    %v2114 = vunpack.c.l.s4 1934713408
    %v2115 = vunpack.c.0.s8 %v2114
    %v2116 = vlaneseq
    %v2117 = vshrl.u32 %v2116, 7
    %v2118 = vsub.s32 %v2115, %v2117
    %v2119 = vrot.slane %v2112, %v2118
    %v2120 = vcombine.high %v2119, 0.0
    %v2121 = vcombine.low %v1980, %v1984
    %v2123 = vunpack.c.l.s4 1934713408
    %v2124 = vunpack.c.0.s8 %v2123
    %v2125 = vlaneseq
    %v2126 = vshrl.u32 %v2125, 7
    %v2127 = vsub.s32 %v2124, %v2126
    %v2128 = vrot.slane %v2121, %v2127
    %v2129 = vcombine.high %v2128, 0.0
    %v2130 = vcombine.low %v1957, %v1961
    %v2132 = vunpack.c.l.s4 1934713408
    %v2133 = vunpack.c.0.s8 %v2132
    %v2134 = vlaneseq
    %v2135 = vshrl.u32 %v2134, 7
    %v2136 = vsub.s32 %v2133, %v2135
    %v2137 = vrot.slane %v2130, %v2136
    %v2138 = vcombine.high %v2137, 0.0
    %v2139 = vcombine.low %v1965, %v1969
    %v2141 = vunpack.c.l.s4 1934713408
    %v2142 = vunpack.c.0.s8 %v2141
    %v2143 = vlaneseq
    %v2144 = vshrl.u32 %v2143, 7
    %v2145 = vsub.s32 %v2142, %v2144
    %v2146 = vrot.slane %v2139, %v2145
    %v2147 = vcombine.high %v2146, 0.0
    %v2148 = vcombine.low %v1973, %v1977
    %v2150 = vunpack.c.l.s4 1934713408
    %v2151 = vunpack.c.0.s8 %v2150
    %v2152 = vlaneseq
    %v2153 = vshrl.u32 %v2152, 7
    %v2154 = vsub.s32 %v2151, %v2153
    %v2155 = vrot.slane %v2148, %v2154
    %v2156 = vcombine.high %v2155, 0.0
    %v2157 = vcombine.low %v1981, %v1985
    %v2159 = vunpack.c.l.s4 1934713408
    %v2160 = vunpack.c.0.s8 %v2159
    %v2161 = vlaneseq
    %v2162 = vshrl.u32 %v2161, 7
    %v2163 = vsub.s32 %v2160, %v2162
    %v2164 = vrot.slane %v2157, %v2163
    %v2165 = vcombine.high %v2164, 0.0
    %v2166 = vcombine.low %v1986, %v1990
    %v2168 = vunpack.c.l.s4 1934713408
    %v2169 = vunpack.c.0.s8 %v2168
    %v2170 = vlaneseq
    %v2171 = vshrl.u32 %v2170, 7
    %v2172 = vsub.s32 %v2169, %v2171
    %v2173 = vrot.slane %v2166, %v2172
    %v2174 = vcombine.high %v2173, 0.0
    %v2175 = vcombine.low %v1994, %v1998
    %v2177 = vunpack.c.l.s4 1934713408
    %v2178 = vunpack.c.0.s8 %v2177
    %v2179 = vlaneseq
    %v2180 = vshrl.u32 %v2179, 7
    %v2181 = vsub.s32 %v2178, %v2180
    %v2182 = vrot.slane %v2175, %v2181
    %v2183 = vcombine.high %v2182, 0.0
    %v2184 = vcombine.low %v2002, %v2006
    %v2186 = vunpack.c.l.s4 1934713408
    %v2187 = vunpack.c.0.s8 %v2186
    %v2188 = vlaneseq
    %v2189 = vshrl.u32 %v2188, 7
    %v2190 = vsub.s32 %v2187, %v2189
    %v2191 = vrot.slane %v2184, %v2190
    %v2192 = vcombine.high %v2191, 0.0
    %v2193 = vcombine.low %v2010, %v2014
    %v2195 = vunpack.c.l.s4 1934713408
    %v2196 = vunpack.c.0.s8 %v2195
    %v2197 = vlaneseq
    %v2198 = vshrl.u32 %v2197, 7
    %v2199 = vsub.s32 %v2196, %v2198
    %v2200 = vrot.slane %v2193, %v2199
    %v2201 = vcombine.high %v2200, 0.0
    %v2202 = vcombine.low %v1987, %v1991
    %v2204 = vunpack.c.l.s4 1934713408
    %v2205 = vunpack.c.0.s8 %v2204
    %v2206 = vlaneseq
    %v2207 = vshrl.u32 %v2206, 7
    %v2208 = vsub.s32 %v2205, %v2207
    %v2209 = vrot.slane %v2202, %v2208
    %v2210 = vcombine.high %v2209, 0.0
    %v2211 = vcombine.low %v1995, %v1999
    %v2213 = vunpack.c.l.s4 1934713408
    %v2214 = vunpack.c.0.s8 %v2213
    %v2215 = vlaneseq
    %v2216 = vshrl.u32 %v2215, 7
    %v2217 = vsub.s32 %v2214, %v2216
    %v2218 = vrot.slane %v2211, %v2217
    %v2219 = vcombine.high %v2218, 0.0
    %v2220 = vcombine.low %v2003, %v2007
    %v2222 = vunpack.c.l.s4 1934713408
    %v2223 = vunpack.c.0.s8 %v2222
    %v2224 = vlaneseq
    %v2225 = vshrl.u32 %v2224, 7
    %v2226 = vsub.s32 %v2223, %v2225
    %v2227 = vrot.slane %v2220, %v2226
    %v2228 = vcombine.high %v2227, 0.0
    %v2229 = vcombine.low %v2011, %v2015
    %v2231 = vunpack.c.l.s4 1934713408
    %v2232 = vunpack.c.0.s8 %v2231
    %v2233 = vlaneseq
    %v2234 = vshrl.u32 %v2233, 7
    %v2235 = vsub.s32 %v2232, %v2234
    %v2236 = vrot.slane %v2229, %v2235
    %v2237 = vcombine.high %v2236, 0.0
    %v2238 = vcombine.low %v1988, %v1992
    %v2240 = vunpack.c.l.s4 1934713408
    %v2241 = vunpack.c.0.s8 %v2240
    %v2242 = vlaneseq
    %v2243 = vshrl.u32 %v2242, 7
    %v2244 = vsub.s32 %v2241, %v2243
    %v2245 = vrot.slane %v2238, %v2244
    %v2246 = vcombine.high %v2245, 0.0
    %v2247 = vcombine.low %v1996, %v2000
    %v2249 = vunpack.c.l.s4 1934713408
    %v2250 = vunpack.c.0.s8 %v2249
    %v2251 = vlaneseq
    %v2252 = vshrl.u32 %v2251, 7
    %v2253 = vsub.s32 %v2250, %v2252
    %v2254 = vrot.slane %v2247, %v2253
    %v2255 = vcombine.high %v2254, 0.0
    %v2256 = vcombine.low %v2004, %v2008
    %v2258 = vunpack.c.l.s4 1934713408
    %v2259 = vunpack.c.0.s8 %v2258
    %v2260 = vlaneseq
    %v2261 = vshrl.u32 %v2260, 7
    %v2262 = vsub.s32 %v2259, %v2261
    %v2263 = vrot.slane %v2256, %v2262
    %v2264 = vcombine.high %v2263, 0.0
    %v2265 = vcombine.low %v2012, %v2016
    %v2267 = vunpack.c.l.s4 1934713408
    %v2268 = vunpack.c.0.s8 %v2267
    %v2269 = vlaneseq
    %v2270 = vshrl.u32 %v2269, 7
    %v2271 = vsub.s32 %v2268, %v2270
    %v2272 = vrot.slane %v2265, %v2271
    %v2273 = vcombine.high %v2272, 0.0
    %v2274 = vcombine.low %v1989, %v1993
    %v2276 = vunpack.c.l.s4 1934713408
    %v2277 = vunpack.c.0.s8 %v2276
    %v2278 = vlaneseq
    %v2279 = vshrl.u32 %v2278, 7
    %v2280 = vsub.s32 %v2277, %v2279
    %v2281 = vrot.slane %v2274, %v2280
    %v2282 = vcombine.high %v2281, 0.0
    %v2283 = vcombine.low %v1997, %v2001
    %v2285 = vunpack.c.l.s4 1934713408
    %v2286 = vunpack.c.0.s8 %v2285
    %v2287 = vlaneseq
    %v2288 = vshrl.u32 %v2287, 7
    %v2289 = vsub.s32 %v2286, %v2288
    %v2290 = vrot.slane %v2283, %v2289
    %v2291 = vcombine.high %v2290, 0.0
    %v2292 = vcombine.low %v2005, %v2009
    %v2294 = vunpack.c.l.s4 1934713408
    %v2295 = vunpack.c.0.s8 %v2294
    %v2296 = vlaneseq
    %v2297 = vshrl.u32 %v2296, 7
    %v2298 = vsub.s32 %v2295, %v2297
    %v2299 = vrot.slane %v2292, %v2298
    %v2300 = vcombine.high %v2299, 0.0
    %v2301 = vcombine.low %v2013, %v2017
    %v2303 = vunpack.c.l.s4 1934713408
    %v2304 = vunpack.c.0.s8 %v2303
    %v2305 = vlaneseq
    %v2306 = vshrl.u32 %v2305, 7
    %v2307 = vsub.s32 %v2304, %v2306
    %v2308 = vrot.slane %v2301, %v2307
    %v2309 = vcombine.high %v2308, 0.0
    %v2318 = vcombine.low %v2029, %v2038
    %v2319 = vcombine.low %v2047, %v2056
    %v2321 = vunpack.c.l.s4 1983009808
    %v2322 = vunpack.c.0.s8 %v2321
    %v2323 = vlaneseq
    %v2324 = vshrl.u32 %v2323, 7
    %v2325 = vsub.s32 %v2322, %v2324
    %v2326 = vrot.slane %v2318, %v2325
    %v2328 = vunpack.c.l.s4 1983009808
    %v2329 = vunpack.c.0.s8 %v2328
    %v2330 = vlaneseq
    %v2331 = vshrl.u32 %v2330, 7
    %v2332 = vsub.s32 %v2329, %v2331
    %v2333 = vrot.slane %v2319, %v2332
    %v2334 = vcombine.low %v2326, %v2333
    %v2335 = vcombine.low %v2173, %v2182
    %v2336 = vcombine.low %v2191, %v2200
    %v2338 = vunpack.c.l.s4 1983009808
    %v2339 = vunpack.c.0.s8 %v2338
    %v2340 = vlaneseq
    %v2341 = vshrl.u32 %v2340, 7
    %v2342 = vsub.s32 %v2339, %v2341
    %v2343 = vrot.slane %v2335, %v2342
    %v2345 = vunpack.c.l.s4 1983009808
    %v2346 = vunpack.c.0.s8 %v2345
    %v2347 = vlaneseq
    %v2348 = vshrl.u32 %v2347, 7
    %v2349 = vsub.s32 %v2346, %v2348
    %v2350 = vrot.slane %v2336, %v2349
    %v2351 = vcombine.low %v2343, %v2350
    %v2362 = vcombine.low %v2030, %v2039
    %v2363 = vcombine.low %v2048, %v2057
    %v2365 = vunpack.c.l.s4 1983009808
    %v2366 = vunpack.c.0.s8 %v2365
    %v2367 = vlaneseq
    %v2368 = vshrl.u32 %v2367, 7
    %v2369 = vsub.s32 %v2366, %v2368
    %v2370 = vrot.slane %v2362, %v2369
    %v2372 = vunpack.c.l.s4 1983009808
    %v2373 = vunpack.c.0.s8 %v2372
    %v2374 = vlaneseq
    %v2375 = vshrl.u32 %v2374, 7
    %v2376 = vsub.s32 %v2373, %v2375
    %v2377 = vrot.slane %v2363, %v2376
    %v2378 = vcombine.low %v2370, %v2377
    %v2379 = vcombine.low %v2174, %v2183
    %v2380 = vcombine.low %v2192, %v2201
    %v2382 = vunpack.c.l.s4 1983009808
    %v2383 = vunpack.c.0.s8 %v2382
    %v2384 = vlaneseq
    %v2385 = vshrl.u32 %v2384, 7
    %v2386 = vsub.s32 %v2383, %v2385
    %v2387 = vrot.slane %v2379, %v2386
    %v2389 = vunpack.c.l.s4 1983009808
    %v2390 = vunpack.c.0.s8 %v2389
    %v2391 = vlaneseq
    %v2392 = vshrl.u32 %v2391, 7
    %v2393 = vsub.s32 %v2390, %v2392
    %v2394 = vrot.slane %v2380, %v2393
    %v2395 = vcombine.low %v2387, %v2394
    %2396 = vrot.lane.b32.xlu0 %v2378, 8
    %v2397 = vpop.permute.xlu0 %2396
    %2398 = vrot.lane.b32.xlu0 %v2395, 8
    %v2399 = vpop.permute.xlu0 %2398
    %v2410 = vcombine.low %v2065, %v2074
    %v2411 = vcombine.low %v2083, %v2092
    %v2413 = vunpack.c.l.s4 1983009808
    %v2414 = vunpack.c.0.s8 %v2413
    %v2415 = vlaneseq
    %v2416 = vshrl.u32 %v2415, 7
    %v2417 = vsub.s32 %v2414, %v2416
    %v2418 = vrot.slane %v2410, %v2417
    %v2420 = vunpack.c.l.s4 1983009808
    %v2421 = vunpack.c.0.s8 %v2420
    %v2422 = vlaneseq
    %v2423 = vshrl.u32 %v2422, 7
    %v2424 = vsub.s32 %v2421, %v2423
    %v2425 = vrot.slane %v2411, %v2424
    %v2426 = vcombine.low %v2418, %v2425
    %v2427 = vcombine.low %v2209, %v2218
    %v2428 = vcombine.low %v2227, %v2236
    %v2430 = vunpack.c.l.s4 1983009808
    %v2431 = vunpack.c.0.s8 %v2430
    %v2432 = vlaneseq
    %v2433 = vshrl.u32 %v2432, 7
    %v2434 = vsub.s32 %v2431, %v2433
    %v2435 = vrot.slane %v2427, %v2434
    %v2437 = vunpack.c.l.s4 1983009808
    %v2438 = vunpack.c.0.s8 %v2437
    %v2439 = vlaneseq
    %v2440 = vshrl.u32 %v2439, 7
    %v2441 = vsub.s32 %v2438, %v2440
    %v2442 = vrot.slane %v2428, %v2441
    %v2443 = vcombine.low %v2435, %v2442
    %2444 = vrot.lane.b32.xlu0 %v2426, 16
    %v2445 = vpop.permute.xlu0 %2444
    %2446 = vrot.lane.b32.xlu0 %v2443, 16
    %v2447 = vpop.permute.xlu0 %2446
    %v2458 = vcombine.low %v2066, %v2075
    %v2459 = vcombine.low %v2084, %v2093
    %v2461 = vunpack.c.l.s4 1983009808
    %v2462 = vunpack.c.0.s8 %v2461
    %v2463 = vlaneseq
    %v2464 = vshrl.u32 %v2463, 7
    %v2465 = vsub.s32 %v2462, %v2464
    %v2466 = vrot.slane %v2458, %v2465
    %v2468 = vunpack.c.l.s4 1983009808
    %v2469 = vunpack.c.0.s8 %v2468
    %v2470 = vlaneseq
    %v2471 = vshrl.u32 %v2470, 7
    %v2472 = vsub.s32 %v2469, %v2471
    %v2473 = vrot.slane %v2459, %v2472
    %v2474 = vcombine.low %v2466, %v2473
    %v2475 = vcombine.low %v2210, %v2219
    %v2476 = vcombine.low %v2228, %v2237
    %v2478 = vunpack.c.l.s4 1983009808
    %v2479 = vunpack.c.0.s8 %v2478
    %v2480 = vlaneseq
    %v2481 = vshrl.u32 %v2480, 7
    %v2482 = vsub.s32 %v2479, %v2481
    %v2483 = vrot.slane %v2475, %v2482
    %v2485 = vunpack.c.l.s4 1983009808
    %v2486 = vunpack.c.0.s8 %v2485
    %v2487 = vlaneseq
    %v2488 = vshrl.u32 %v2487, 7
    %v2489 = vsub.s32 %v2486, %v2488
    %v2490 = vrot.slane %v2476, %v2489
    %v2491 = vcombine.low %v2483, %v2490
    %2492 = vrot.lane.b32.xlu0 %v2474, 24
    %v2493 = vpop.permute.xlu0 %2492
    %2494 = vrot.lane.b32.xlu0 %v2491, 24
    %v2495 = vpop.permute.xlu0 %2494
    %v2506 = vcombine.low %v2101, %v2110
    %v2507 = vcombine.low %v2119, %v2128
    %v2509 = vunpack.c.l.s4 1983009808
    %v2510 = vunpack.c.0.s8 %v2509
    %v2511 = vlaneseq
    %v2512 = vshrl.u32 %v2511, 7
    %v2513 = vsub.s32 %v2510, %v2512
    %v2514 = vrot.slane %v2506, %v2513
    %v2516 = vunpack.c.l.s4 1983009808
    %v2517 = vunpack.c.0.s8 %v2516
    %v2518 = vlaneseq
    %v2519 = vshrl.u32 %v2518, 7
    %v2520 = vsub.s32 %v2517, %v2519
    %v2521 = vrot.slane %v2507, %v2520
    %v2522 = vcombine.low %v2514, %v2521
    %v2523 = vcombine.low %v2245, %v2254
    %v2524 = vcombine.low %v2263, %v2272
    %v2526 = vunpack.c.l.s4 1983009808
    %v2527 = vunpack.c.0.s8 %v2526
    %v2528 = vlaneseq
    %v2529 = vshrl.u32 %v2528, 7
    %v2530 = vsub.s32 %v2527, %v2529
    %v2531 = vrot.slane %v2523, %v2530
    %v2533 = vunpack.c.l.s4 1983009808
    %v2534 = vunpack.c.0.s8 %v2533
    %v2535 = vlaneseq
    %v2536 = vshrl.u32 %v2535, 7
    %v2537 = vsub.s32 %v2534, %v2536
    %v2538 = vrot.slane %v2524, %v2537
    %v2539 = vcombine.low %v2531, %v2538
    %2540 = vrot.lane.b32.xlu0 %v2522, 32
    %v2541 = vpop.permute.xlu0 %2540
    %2542 = vrot.lane.b32.xlu0 %v2539, 32
    %v2543 = vpop.permute.xlu0 %2542
    %v2554 = vcombine.low %v2102, %v2111
    %v2555 = vcombine.low %v2120, %v2129
    %v2557 = vunpack.c.l.s4 1983009808
    %v2558 = vunpack.c.0.s8 %v2557
    %v2559 = vlaneseq
    %v2560 = vshrl.u32 %v2559, 7
    %v2561 = vsub.s32 %v2558, %v2560
    %v2562 = vrot.slane %v2554, %v2561
    %v2564 = vunpack.c.l.s4 1983009808
    %v2565 = vunpack.c.0.s8 %v2564
    %v2566 = vlaneseq
    %v2567 = vshrl.u32 %v2566, 7
    %v2568 = vsub.s32 %v2565, %v2567
    %v2569 = vrot.slane %v2555, %v2568
    %v2570 = vcombine.low %v2562, %v2569
    %v2571 = vcombine.low %v2246, %v2255
    %v2572 = vcombine.low %v2264, %v2273
    %v2574 = vunpack.c.l.s4 1983009808
    %v2575 = vunpack.c.0.s8 %v2574
    %v2576 = vlaneseq
    %v2577 = vshrl.u32 %v2576, 7
    %v2578 = vsub.s32 %v2575, %v2577
    %v2579 = vrot.slane %v2571, %v2578
    %v2581 = vunpack.c.l.s4 1983009808
    %v2582 = vunpack.c.0.s8 %v2581
    %v2583 = vlaneseq
    %v2584 = vshrl.u32 %v2583, 7
    %v2585 = vsub.s32 %v2582, %v2584
    %v2586 = vrot.slane %v2572, %v2585
    %v2587 = vcombine.low %v2579, %v2586
    %2588 = vrot.lane.b32.xlu0 %v2570, 40
    %v2589 = vpop.permute.xlu0 %2588
    %2590 = vrot.lane.b32.xlu0 %v2587, 40
    %v2591 = vpop.permute.xlu0 %2590
    %v2602 = vcombine.low %v2137, %v2146
    %v2603 = vcombine.low %v2155, %v2164
    %v2605 = vunpack.c.l.s4 1983009808
    %v2606 = vunpack.c.0.s8 %v2605
    %v2607 = vlaneseq
    %v2608 = vshrl.u32 %v2607, 7
    %v2609 = vsub.s32 %v2606, %v2608
    %v2610 = vrot.slane %v2602, %v2609
    %v2612 = vunpack.c.l.s4 1983009808
    %v2613 = vunpack.c.0.s8 %v2612
    %v2614 = vlaneseq
    %v2615 = vshrl.u32 %v2614, 7
    %v2616 = vsub.s32 %v2613, %v2615
    %v2617 = vrot.slane %v2603, %v2616
    %v2618 = vcombine.low %v2610, %v2617
    %v2619 = vcombine.low %v2281, %v2290
    %v2620 = vcombine.low %v2299, %v2308
    %v2622 = vunpack.c.l.s4 1983009808
    %v2623 = vunpack.c.0.s8 %v2622
    %v2624 = vlaneseq
    %v2625 = vshrl.u32 %v2624, 7
    %v2626 = vsub.s32 %v2623, %v2625
    %v2627 = vrot.slane %v2619, %v2626
    %v2629 = vunpack.c.l.s4 1983009808
    %v2630 = vunpack.c.0.s8 %v2629
    %v2631 = vlaneseq
    %v2632 = vshrl.u32 %v2631, 7
    %v2633 = vsub.s32 %v2630, %v2632
    %v2634 = vrot.slane %v2620, %v2633
    %v2635 = vcombine.low %v2627, %v2634
    %2636 = vrot.lane.b32.xlu0 %v2618, 48
    %v2637 = vpop.permute.xlu0 %2636
    %2638 = vrot.lane.b32.xlu0 %v2635, 48
    %v2639 = vpop.permute.xlu0 %2638
    %v2650 = vcombine.low %v2138, %v2147
    %v2651 = vcombine.low %v2156, %v2165
    %v2653 = vunpack.c.l.s4 1983009808
    %v2654 = vunpack.c.0.s8 %v2653
    %v2655 = vlaneseq
    %v2656 = vshrl.u32 %v2655, 7
    %v2657 = vsub.s32 %v2654, %v2656
    %v2658 = vrot.slane %v2650, %v2657
    %v2660 = vunpack.c.l.s4 1983009808
    %v2661 = vunpack.c.0.s8 %v2660
    %v2662 = vlaneseq
    %v2663 = vshrl.u32 %v2662, 7
    %v2664 = vsub.s32 %v2661, %v2663
    %v2665 = vrot.slane %v2651, %v2664
    %v2666 = vcombine.low %v2658, %v2665
    %v2667 = vcombine.low %v2282, %v2291
    %v2668 = vcombine.low %v2300, %v2309
    %v2670 = vunpack.c.l.s4 1983009808
    %v2671 = vunpack.c.0.s8 %v2670
    %v2672 = vlaneseq
    %v2673 = vshrl.u32 %v2672, 7
    %v2674 = vsub.s32 %v2671, %v2673
    %v2675 = vrot.slane %v2667, %v2674
    %v2677 = vunpack.c.l.s4 1983009808
    %v2678 = vunpack.c.0.s8 %v2677
    %v2679 = vlaneseq
    %v2680 = vshrl.u32 %v2679, 7
    %v2681 = vsub.s32 %v2678, %v2680
    %v2682 = vrot.slane %v2668, %v2681
    %v2683 = vcombine.low %v2675, %v2682
    %2684 = vrot.lane.b32.xlu0 %v2666, 56
    %v2685 = vpop.permute.xlu0 %2684
    %2686 = vrot.lane.b32.xlu0 %v2683, 56
    %v2687 = vpop.permute.xlu0 %2686
    %vm2690 = vcmask 64512
    %v2691 = vsel %vm2690, %v2334, %v2397
    %v2692 = vsel %vm2690, %v2351, %v2399
    %vm2693 = vcmask 130048
    %v2694 = vsel %vm2693, %v2691, %v2445
    %v2695 = vsel %vm2693, %v2692, %v2447
    %vm2696 = vcmask 195584
    %v2697 = vsel %vm2696, %v2694, %v2493
    %v2698 = vsel %vm2696, %v2695, %v2495
    %vm2699 = vcmask 261120
    %v2700 = vsel %vm2699, %v2697, %v2541
    %v2701 = vsel %vm2699, %v2698, %v2543
    %vm2702 = vcmask 326656
    %v2703 = vsel %vm2702, %v2700, %v2589
    %v2704 = vsel %vm2702, %v2701, %v2591
    %vm2705 = vcmask 392192
    %v2706 = vsel %vm2705, %v2703, %v2637
    %v2707 = vsel %vm2705, %v2704, %v2639
    %vm2708 = vcmask 457728
    %v2709 = vsel %vm2708, %v2706, %v2685
    %v2710 = vsel %vm2708, %v2707, %v2687
    %2711 = vst.msk [vmem:[#allocation4 + $0x1] sm:$0xff] %vm119, %v2709
    %2712 = vst.msk [vmem:[#allocation4 + $0x11] sm:$0xff] %vm119, %v2710
    %v2713 = vld [vmem:[#allocation4] sm:$0xff]
    %v2714 = vld [vmem:[#allocation4 + $0x10] sm:$0xff]
    %2715 = vst.msk [vmem:[#allocation5] sm:$0xff] %vm119, %v2713
    %2716 = vst.msk [vmem:[#allocation5 + $0x10] sm:$0xff] %vm119, %v2714
    %v2717 = vld [vmem:[#allocation4 + $0x1] sm:$0xff]
    %v2718 = vld [vmem:[#allocation4 + $0x11] sm:$0xff]
    %2721 = vrot.lane.b32.xlu0 %v2717, 64
    %v2722 = vpop.permute.xlu0 %2721
    %2723 = vrot.lane.b32.xlu0 %v2718, 64
    %v2724 = vpop.permute.xlu0 %2723
    %2727 = vst.msk [vmem:[#allocation5] sm:$0xff] %vm152, %v2722
    %2728 = vst.msk [vmem:[#allocation5 + $0x10] sm:$0xff] %vm152, %v2724
    %v2729 = vld [vmem:[#allocation4 + $0x2] sm:$0xff]
    %v2730 = vld [vmem:[#allocation4 + $0x12] sm:$0xff]
    %2731 = vst.msk [vmem:[#allocation5 + $0x8] sm:$0xff] %vm119, %v2729
    %2732 = vst.msk [vmem:[#allocation5 + $0x18] sm:$0xff] %vm119, %v2730
    %v2733 = vld [vmem:[#allocation5] sm:$0xff]
    %v2734 = vld [vmem:[#allocation5 + $0x8] sm:$0xff]
    %v2735 = vld [vmem:[#allocation5 + $0x10] sm:$0xff]
    %v2736 = vld [vmem:[#allocation5 + $0x18] sm:$0xff]
    %v2737 = vld [vmem:[%s2] sm:$0xff]
    %v2738 = vld [vmem:[%s2 + $0x8] sm:$0xff]
    %v2739 = vld [vmem:[%s2 + $0x10] sm:$0xff]
    %v2740 = vld [vmem:[%s2 + $0x18] sm:$0xff]
    %v2741 = vld [vmem:[%s2 + $0x20] sm:$0xff]
    %v2742 = vld [vmem:[%s2 + $0x28] sm:$0xff]
    %v2743 = vld [vmem:[%s2 + $0x30] sm:$0xff]
    %v2744 = vld [vmem:[%s2 + $0x38] sm:$0xff]
    %v2745 = vld [vmem:[%s2 + $0x40] sm:$0xff]
    %v2746 = vld [vmem:[%s2 + $0x48] sm:$0xff]
    %v2747 = vld [vmem:[%s2 + $0x50] sm:$0xff]
    %v2748 = vld [vmem:[%s2 + $0x58] sm:$0xff]
    %v2749 = vld [vmem:[%s2 + $0x60] sm:$0xff]
    %v2750 = vld [vmem:[%s2 + $0x68] sm:$0xff]
    %v2751 = vld [vmem:[%s2 + $0x70] sm:$0xff]
    %v2752 = vld [vmem:[%s2 + $0x78] sm:$0xff]
    %v2753 = vld [vmem:[%s2 + $0x80] sm:$0xff]
    %v2754 = vld [vmem:[%s2 + $0x88] sm:$0xff]
    %v2755 = vld [vmem:[%s2 + $0x90] sm:$0xff]
    %v2756 = vld [vmem:[%s2 + $0x98] sm:$0xff]
    %v2757 = vld [vmem:[%s2 + $0xa0] sm:$0xff]
    %v2758 = vld [vmem:[%s2 + $0xa8] sm:$0xff]
    %v2759 = vld [vmem:[%s2 + $0xb0] sm:$0xff]
    %v2760 = vld [vmem:[%s2 + $0xb8] sm:$0xff]
    %v2762 = vsel %vm119, %v2734, 0
    %v2765 = vsel %vm119, %v2736, 0
    %2767 = vmatprep.subr.mxu0 0.0
    %2768 = vmatpush1.msra.mxu0 %v2737
    %2769 = vmatprep.subr.mxu0 0.0
    %2770 = vmatpush1.msra.mxu0 %v2738
    %2771 = vmatprep.subr.mxu0 0.0
    %2772 = vmatpush1.msra.mxu0 %v2739
    %2773 = vmatprep.subr.mxu0 0.0
    %2774 = vmatpush1.msra.mxu0 %v2740
    %2775 = vmatprep.subr.mxu0 0.0
    %2776 = vmatpush1.msra.mxu0 %v2741
    %2777 = vmatprep.subr.mxu0 0.0
    %2778 = vmatpush1.msra.mxu0 %v2742
    %2779 = vmatprep.subr.mxu0 0.0
    %2780 = vmatpush1.msra.mxu0 %v2743
    %2781 = vmatprep.subr.mxu0 0.0
    %2782 = vmatpush1.msra.mxu0 %v2744
    %2783 = vmatprep.subr.mxu0 0.0
    %2784 = vmatpush1.msra.mxu0 %v2745
    %2785 = vmatprep.subr.mxu0 0.0
    %2786 = vmatpush1.msra.mxu0 %v2746
    %2787 = vmatprep.subr.mxu0 0.0
    %2788 = vmatpush1.msra.mxu0 %v2747
    %2789 = vmatprep.subr.mxu0 0.0
    %2790 = vmatpush1.msra.mxu0 %v2748
    %2791 = vmatprep.subr.mxu0 0.0
    %2792 = vmatpush1.msra.mxu0 %v2749
    %2793 = vmatprep.subr.mxu0 0.0
    %2794 = vmatpush1.msra.mxu0 %v2750
    %2795 = vmatprep.subr.mxu0 0.0
    %2796 = vmatpush1.msra.mxu0 %v2751
    %2797 = vmatprep.subr.mxu0 0.0
    %2798 = vmatpush1.msra.mxu0 %v2752
    %2799 = vmatprep.subr.mxu0 0.0
    %2800 = vmatpush1.msra.mxu0 %v2753
    %2801 = vmatprep.subr.mxu0 0.0
    %2802 = vmatpush1.msra.mxu0 %v2754
    %2803 = vmatprep.subr.mxu0 0.0
    %2804 = vmatpush1.msra.mxu0 %v2755
    %2805 = vmatprep.subr.mxu0 0.0
    %2806 = vmatpush1.msra.mxu0 %v2756
    %2807 = vmatprep.subr.mxu0 0.0
    %2808 = vmatpush1.msra.mxu0 %v2757
    %2809 = vmatprep.subr.mxu0 0.0
    %2810 = vmatpush1.msra.mxu0 %v2758
    %2811 = vmatprep.subr.mxu0 0.0
    %2812 = vmatpush1.msra.mxu0 %v2759
    %2813 = vmatprep.subr.mxu0 0.0
    %2814 = vmatpush1.msra.mxu0 %v2760
    %2815 = vmatprep.subr.mxu0 0.0
    %2816 = vmatpush1.msra.mxu0 0.0
    %2817 = vmatprep.subr.mxu0 0.0
    %2818 = vmatpush1.msra.mxu0 0.0
    %2819 = vmatprep.subr.mxu0 0.0
    %2820 = vmatpush1.msra.mxu0 0.0
    %2821 = vmatprep.subr.mxu0 0.0
    %2822 = vmatpush1.msra.mxu0 0.0
    %2823 = vmatprep.subr.mxu0 0.0
    %2824 = vmatpush1.msra.mxu0 0.0
    %2825 = vmatprep.subr.mxu0 0.0
    %2826 = vmatpush1.msra.mxu0 0.0
    %2827 = vmatprep.subr.mxu0 0.0
    %2828 = vmatpush1.msra.mxu0 0.0
    %2829 = vmatprep.subr.mxu0 0.0
    %2830 = vmatpush1.msra.mxu0 0.0
    %2831 = vmatprep.mubr.f32.mxu0 %v2762
    %2832 = vmatmul.mubr.f32.gmra.mrb[0].mxu0 %v2733
    %v2833 = vpop.f32.mrb[0].mxu0
    %v2834 = vadd.f32 0.0, %v2833
    %v2835 = vpop.f32.mrb[0].mxu0
    %2836 = vmatprep.mubr.f32.mxu0 %v2765
    %2837 = vmatmul.mubr.f32.gmra.mrb[0].mxu0 %v2735
    %v2838 = vpop.f32.mrb[0].mxu0
    %v2839 = vadd.f32 0.0, %v2838
    %v2840 = vpop.f32.mrb[0].mxu0
    %2841 = vdwg.mxu0
    %v2842 = vadd.f32 %v2834, %v2839
    %v2843 = vrot.slane %v2842, 4
    %v2844 = vadd.f32 %v2842, %v2843
    %v2845 = vrot.slane %v2844, 2
    %v2846 = vadd.f32 %v2844, %v2845
    %v2847 = vrot.slane %v2846, 1
    %v2848 = vadd.f32 %v2846, %v2847
    %v2849 = vmul.f32 %v2834, %v2834
    %v2850 = vmul.f32 %v2839, %v2839
    %v2851 = vadd.f32 %v2849, %v2850
    %v2852 = vrot.slane %v2851, 4
    %v2853 = vadd.f32 %v2851, %v2852
    %v2854 = vrot.slane %v2853, 2
    %v2855 = vadd.f32 %v2853, %v2854
    %v2856 = vrot.slane %v2855, 1
    %v2857 = vadd.f32 %v2855, %v2856
    %v2858 = vld [vmem:[#allocation9] sm:$0xff]
    %v2859 = vld [vmem:[#allocation9 + $0x8] sm:$0xff]
    %v2860 = vld [vmem:[#allocation9 + $0x10] sm:$0xff]
    %v2861 = vld [vmem:[#allocation9 + $0x18] sm:$0xff]
    %v2862 = vld [vmem:[#allocation9 + $0x20] sm:$0xff]
    %v2863 = vld [vmem:[#allocation9 + $0x28] sm:$0xff]
    %v2864 = vld [vmem:[#allocation9 + $0x30] sm:$0xff]
    %v2865 = vld [vmem:[#allocation9 + $0x38] sm:$0xff]
    %v2866 = vld [vmem:[#allocation9 + $0x40] sm:$0xff]
    %v2867 = vld [vmem:[#allocation9 + $0x48] sm:$0xff]
    %v2868 = vld [vmem:[#allocation9 + $0x50] sm:$0xff]
    %v2869 = vld [vmem:[#allocation9 + $0x58] sm:$0xff]
    %v2870 = vld [vmem:[#allocation9 + $0x60] sm:$0xff]
    %v2871 = vld [vmem:[#allocation9 + $0x68] sm:$0xff]
    %v2872 = vld [vmem:[#allocation9 + $0x70] sm:$0xff]
    %v2873 = vld [vmem:[#allocation9 + $0x78] sm:$0xff]
    %2874 = vmatprep.subr.mxu0 0.0
    %2875 = vmatpush1.msra.mxu0 %v2858
    %2876 = vmatprep.subr.mxu0 0.0
    %2877 = vmatpush1.msra.mxu0 %v2859
    %2878 = vmatprep.subr.mxu0 0.0
    %2879 = vmatpush1.msra.mxu0 %v2860
    %2880 = vmatprep.subr.mxu0 0.0
    %2881 = vmatpush1.msra.mxu0 %v2861
    %2882 = vmatprep.subr.mxu0 0.0
    %2883 = vmatpush1.msra.mxu0 %v2862
    %2884 = vmatprep.subr.mxu0 0.0
    %2885 = vmatpush1.msra.mxu0 %v2863
    %2886 = vmatprep.subr.mxu0 0.0
    %2887 = vmatpush1.msra.mxu0 %v2864
    %2888 = vmatprep.subr.mxu0 0.0
    %2889 = vmatpush1.msra.mxu0 %v2865
    %2890 = vmatprep.subr.mxu0 0.0
    %2891 = vmatpush1.msra.mxu0 %v2866
    %2892 = vmatprep.subr.mxu0 0.0
    %2893 = vmatpush1.msra.mxu0 %v2867
    %2894 = vmatprep.subr.mxu0 0.0
    %2895 = vmatpush1.msra.mxu0 %v2868
    %2896 = vmatprep.subr.mxu0 0.0
    %2897 = vmatpush1.msra.mxu0 %v2869
    %2898 = vmatprep.subr.mxu0 0.0
    %2899 = vmatpush1.msra.mxu0 %v2870
    %2900 = vmatprep.subr.mxu0 0.0
    %2901 = vmatpush1.msra.mxu0 %v2871
    %2902 = vmatprep.subr.mxu0 0.0
    %2903 = vmatpush1.msra.mxu0 %v2872
    %2904 = vmatprep.subr.mxu0 0.0
    %2905 = vmatpush1.msra.mxu0 %v2873
    %2906 = vmatprep.subr.mxu0 0.0
    %2907 = vmatpush1.msra.mxu0 0.0
    %2908 = vmatprep.subr.mxu0 0.0
    %2909 = vmatpush1.msra.mxu0 0.0
    %2910 = vmatprep.subr.mxu0 0.0
    %2911 = vmatpush1.msra.mxu0 0.0
    %2912 = vmatprep.subr.mxu0 0.0
    %2913 = vmatpush1.msra.mxu0 0.0
    %2914 = vmatprep.subr.mxu0 0.0
    %2915 = vmatpush1.msra.mxu0 0.0
    %2916 = vmatprep.subr.mxu0 0.0
    %2917 = vmatpush1.msra.mxu0 0.0
    %2918 = vmatprep.subr.mxu0 0.0
    %2919 = vmatpush1.msra.mxu0 0.0
    %2920 = vmatprep.subr.mxu0 0.0
    %2921 = vmatpush1.msra.mxu0 0.0
    %2922 = vmatprep.subr.mxu0 0.0
    %2923 = vmatpush1.msra.mxu0 0.0
    %2924 = vmatprep.subr.mxu0 0.0
    %2925 = vmatpush1.msra.mxu0 0.0
    %2926 = vmatprep.subr.mxu0 0.0
    %2927 = vmatpush1.msra.mxu0 0.0
    %2928 = vmatprep.subr.mxu0 0.0
    %2929 = vmatpush1.msra.mxu0 0.0
    %2930 = vmatprep.subr.mxu0 0.0
    %2931 = vmatpush1.msra.mxu0 0.0
    %2932 = vmatprep.subr.mxu0 0.0
    %2933 = vmatpush1.msra.mxu0 0.0
    %2934 = vmatprep.subr.mxu0 0.0
    %2935 = vmatpush1.msra.mxu0 0.0
    %2936 = vmatprep.subr.mxu0 0.0
    %2937 = vmatpush1.msra.mxu0 0.0
    %2938 = vmatprep.mubr.f32.mxu0 0.0
    %2939 = vmatmul.mubr.f32.gmra.mrb[0].mxu0 %v2848
    %v2940 = vpop.f32.mrb[0].mxu0
    %v2941 = vadd.f32 0.0, %v2940
    %v2942 = vpop.f32.mrb[0].mxu0
    %2943 = vdwg.mxu0
    %v2944 = vmul.f32 %v2941, 0.0078125
    %2945 = vmatprep.subr.mxu0 0.0
    %2946 = vmatpush1.msra.mxu0 %v2858
    %2947 = vmatprep.subr.mxu0 0.0
    %2948 = vmatpush1.msra.mxu0 %v2859
    %2949 = vmatprep.subr.mxu0 0.0
    %2950 = vmatpush1.msra.mxu0 %v2860
    %2951 = vmatprep.subr.mxu0 0.0
    %2952 = vmatpush1.msra.mxu0 %v2861
    %2953 = vmatprep.subr.mxu0 0.0
    %2954 = vmatpush1.msra.mxu0 %v2862
    %2955 = vmatprep.subr.mxu0 0.0
    %2956 = vmatpush1.msra.mxu0 %v2863
    %2957 = vmatprep.subr.mxu0 0.0
    %2958 = vmatpush1.msra.mxu0 %v2864
    %2959 = vmatprep.subr.mxu0 0.0
    %2960 = vmatpush1.msra.mxu0 %v2865
    %2961 = vmatprep.subr.mxu0 0.0
    %2962 = vmatpush1.msra.mxu0 %v2866
    %2963 = vmatprep.subr.mxu0 0.0
    %2964 = vmatpush1.msra.mxu0 %v2867
    %2965 = vmatprep.subr.mxu0 0.0
    %2966 = vmatpush1.msra.mxu0 %v2868
    %2967 = vmatprep.subr.mxu0 0.0
    %2968 = vmatpush1.msra.mxu0 %v2869
    %2969 = vmatprep.subr.mxu0 0.0
    %2970 = vmatpush1.msra.mxu0 %v2870
    %2971 = vmatprep.subr.mxu0 0.0
    %2972 = vmatpush1.msra.mxu0 %v2871
    %2973 = vmatprep.subr.mxu0 0.0
    %2974 = vmatpush1.msra.mxu0 %v2872
    %2975 = vmatprep.subr.mxu0 0.0
    %2976 = vmatpush1.msra.mxu0 %v2873
    %2977 = vmatprep.subr.mxu0 0.0
    %2978 = vmatpush1.msra.mxu0 0.0
    %2979 = vmatprep.subr.mxu0 0.0
    %2980 = vmatpush1.msra.mxu0 0.0
    %2981 = vmatprep.subr.mxu0 0.0
    %2982 = vmatpush1.msra.mxu0 0.0
    %2983 = vmatprep.subr.mxu0 0.0
    %2984 = vmatpush1.msra.mxu0 0.0
    %2985 = vmatprep.subr.mxu0 0.0
    %2986 = vmatpush1.msra.mxu0 0.0
    %2987 = vmatprep.subr.mxu0 0.0
    %2988 = vmatpush1.msra.mxu0 0.0
    %2989 = vmatprep.subr.mxu0 0.0
    %2990 = vmatpush1.msra.mxu0 0.0
    %2991 = vmatprep.subr.mxu0 0.0
    %2992 = vmatpush1.msra.mxu0 0.0
    %2993 = vmatprep.subr.mxu0 0.0
    %2994 = vmatpush1.msra.mxu0 0.0
    %2995 = vmatprep.subr.mxu0 0.0
    %2996 = vmatpush1.msra.mxu0 0.0
    %2997 = vmatprep.subr.mxu0 0.0
    %2998 = vmatpush1.msra.mxu0 0.0
    %2999 = vmatprep.subr.mxu0 0.0
    %3000 = vmatpush1.msra.mxu0 0.0
    %3001 = vmatprep.subr.mxu0 0.0
    %3002 = vmatpush1.msra.mxu0 0.0
    %3003 = vmatprep.subr.mxu0 0.0
    %3004 = vmatpush1.msra.mxu0 0.0
    %3005 = vmatprep.subr.mxu0 0.0
    %3006 = vmatpush1.msra.mxu0 0.0
    %3007 = vmatprep.subr.mxu0 0.0
    %3008 = vmatpush1.msra.mxu0 0.0
    %3009 = vmatprep.mubr.f32.mxu0 0.0
    %3010 = vmatmul.mubr.f32.gmra.mrb[0].mxu0 %v2857
    %v3011 = vpop.f32.mrb[0].mxu0
    %v3012 = vadd.f32 0.0, %v3011
    %v3013 = vpop.f32.mrb[0].mxu0
    %3014 = vdwg.mxu0
    %v3015 = vmul.f32 %v3012, 0.0078125
    %v3016 = vmul.f32 %v2944, %v2944
    %v3017 = vsub.f32 %v3015, %v3016
    %v3018 = vmax.f32 %v3017, 0.0
    %v3019 = vlaneseq
    %v3020 = vshrl.u32 %v3019, 7
    %v3021 = vsub.s32 0, %v3020
    %v3022 = vrot.slane %v2944, %v3021
    %v3023 = vsub.f32 %v2834, %v3022
    %v3024 = vsub.f32 %v2839, %v3022
    %v3025 = vadd.f32 %v3018, 1e-05
    %v3026 = vrsqrt.pop %v3025
    %v3027 = vlaneseq
    %v3028 = vshrl.u32 %v3027, 7
    %v3029 = vsub.s32 0, %v3028
    %v3030 = vrot.slane %v3026, %v3029
    %v3031 = vmul.f32 %v3023, %v3030
    %v3032 = vmul.f32 %v3024, %v3030
    %v3033 = vmax.f32 %v3031, 0.0
    %v3034 = vmax.f32 %v3032, 0.0
    %v3037 = vcombine.high %v3033, %v3033
    %v3039 = vunpack.c.l.s4 1983009808
    %v3040 = vunpack.c.0.s8 %v3039
    %v3041 = vlaneseq
    %v3042 = vshrl.u32 %v3041, 7
    %v3043 = vsub.s32 %v3040, %v3042
    %v3044 = vrot.slane %v3033, %v3043
    %v3046 = vunpack.c.l.s4 1983009808
    %v3047 = vunpack.c.0.s8 %v3046
    %v3048 = vlaneseq
    %v3049 = vshrl.u32 %v3048, 7
    %v3050 = vsub.s32 %v3047, %v3049
    %v3051 = vrot.slane %v3037, %v3050
    %v3052 = vcombine.high %v3044, %v3044
    %v3053 = vcombine.high %v3051, %v3051
    %v3054 = vcombine.high %v3034, %v3034
    %v3056 = vunpack.c.l.s4 1983009808
    %v3057 = vunpack.c.0.s8 %v3056
    %v3058 = vlaneseq
    %v3059 = vshrl.u32 %v3058, 7
    %v3060 = vsub.s32 %v3057, %v3059
    %v3061 = vrot.slane %v3034, %v3060
    %v3063 = vunpack.c.l.s4 1983009808
    %v3064 = vunpack.c.0.s8 %v3063
    %v3065 = vlaneseq
    %v3066 = vshrl.u32 %v3065, 7
    %v3067 = vsub.s32 %v3064, %v3066
    %v3068 = vrot.slane %v3054, %v3067
    %v3069 = vcombine.high %v3061, %v3061
    %v3070 = vcombine.high %v3068, %v3068
    %v3079 = vrot.slane %v3044, 7
    %v3080 = vrot.slane %v3079, 2
    %v3081 = vrot.slane %v3052, 7
    %v3082 = vrot.slane %v3081, 2
    %v3083 = vrot.slane %v3051, 7
    %v3084 = vrot.slane %v3083, 2
    %v3085 = vrot.slane %v3053, 7
    %v3086 = vrot.slane %v3085, 2
    %v3087 = vrot.slane %v3061, 7
    %v3088 = vrot.slane %v3087, 2
    %v3089 = vrot.slane %v3069, 7
    %v3090 = vrot.slane %v3089, 2
    %v3091 = vrot.slane %v3068, 7
    %v3092 = vrot.slane %v3091, 2
    %v3093 = vrot.slane %v3070, 7
    %v3094 = vrot.slane %v3093, 2
    %v3103 = vmax.f32 %v3044, %v3080
    %v3104 = vmax.f32 %v3052, %v3082
    %v3105 = vmax.f32 %v3051, %v3084
    %v3106 = vmax.f32 %v3053, %v3086
    %v3107 = vmax.f32 %v3061, %v3088
    %v3108 = vmax.f32 %v3069, %v3090
    %v3109 = vmax.f32 %v3068, %v3092
    %v3110 = vmax.f32 %v3070, %v3094
    %3119 = vrot.lane.b32.xlu0 %v3103, 96
    %v3120 = vpop.permute.xlu0 %3119
    %3121 = vrot.lane.b32.xlu0 %v3104, 96
    %v3122 = vpop.permute.xlu0 %3121
    %3123 = vrot.lane.b32.xlu0 %v3105, 96
    %v3124 = vpop.permute.xlu0 %3123
    %3125 = vrot.lane.b32.xlu0 %v3106, 96
    %v3126 = vpop.permute.xlu0 %3125
    %3127 = vrot.lane.b32.xlu0 %v3107, 96
    %v3128 = vpop.permute.xlu0 %3127
    %3129 = vrot.lane.b32.xlu0 %v3108, 96
    %v3130 = vpop.permute.xlu0 %3129
    %3131 = vrot.lane.b32.xlu0 %v3109, 96
    %v3132 = vpop.permute.xlu0 %3131
    %3133 = vrot.lane.b32.xlu0 %v3110, 96
    %v3134 = vpop.permute.xlu0 %3133
    %3135 = vrot.lane.b32.xlu0 %v3103, 64
    %v3136 = vpop.permute.xlu0 %3135
    %3137 = vrot.lane.b32.xlu0 %v3104, 64
    %v3138 = vpop.permute.xlu0 %3137
    %3139 = vrot.lane.b32.xlu0 %v3105, 64
    %v3140 = vpop.permute.xlu0 %3139
    %3141 = vrot.lane.b32.xlu0 %v3106, 64
    %v3142 = vpop.permute.xlu0 %3141
    %3143 = vrot.lane.b32.xlu0 %v3107, 64
    %v3144 = vpop.permute.xlu0 %3143
    %3145 = vrot.lane.b32.xlu0 %v3108, 64
    %v3146 = vpop.permute.xlu0 %3145
    %3147 = vrot.lane.b32.xlu0 %v3109, 64
    %v3148 = vpop.permute.xlu0 %3147
    %3149 = vrot.lane.b32.xlu0 %v3110, 64
    %v3150 = vpop.permute.xlu0 %3149
    %3151 = vrot.lane.b32.xlu0 %v3103, 32
    %v3152 = vpop.permute.xlu0 %3151
    %3153 = vrot.lane.b32.xlu0 %v3104, 32
    %v3154 = vpop.permute.xlu0 %3153
    %3155 = vrot.lane.b32.xlu0 %v3105, 32
    %v3156 = vpop.permute.xlu0 %3155
    %3157 = vrot.lane.b32.xlu0 %v3106, 32
    %v3158 = vpop.permute.xlu0 %3157
    %3159 = vrot.lane.b32.xlu0 %v3107, 32
    %v3160 = vpop.permute.xlu0 %3159
    %3161 = vrot.lane.b32.xlu0 %v3108, 32
    %v3162 = vpop.permute.xlu0 %3161
    %3163 = vrot.lane.b32.xlu0 %v3109, 32
    %v3164 = vpop.permute.xlu0 %3163
    %3165 = vrot.lane.b32.xlu0 %v3110, 32
    %v3166 = vpop.permute.xlu0 %3165
    %v3167 = vsel %vm892, %v3103, %v3103
    %v3168 = vsel %vm894, %v3103, %v3167
    %v3169 = vrot.slane %v3104, 7
    %v3170 = vsel %vm897, %v3169, %v3168
    %v3171 = vsel %vm899, %v3169, %v3170
    %v3172 = vsel %vm901, %v3169, %v3171
    %v3173 = vsel %vm903, %v3169, %v3172
    %v3174 = vsel %vm892, %v3105, %v3105
    %v3175 = vsel %vm894, %v3105, %v3174
    %v3176 = vrot.slane %v3106, 7
    %v3177 = vsel %vm897, %v3176, %v3175
    %v3178 = vsel %vm899, %v3176, %v3177
    %v3179 = vsel %vm901, %v3176, %v3178
    %v3180 = vsel %vm903, %v3176, %v3179
    %v3181 = vsel %vm892, %v3107, %v3107
    %v3182 = vsel %vm894, %v3107, %v3181
    %v3183 = vrot.slane %v3108, 7
    %v3184 = vsel %vm897, %v3183, %v3182
    %v3185 = vsel %vm899, %v3183, %v3184
    %v3186 = vsel %vm901, %v3183, %v3185
    %v3187 = vsel %vm903, %v3183, %v3186
    %v3188 = vsel %vm892, %v3109, %v3109
    %v3189 = vsel %vm894, %v3109, %v3188
    %v3190 = vrot.slane %v3110, 7
    %v3191 = vsel %vm897, %v3190, %v3189
    %v3192 = vsel %vm899, %v3190, %v3191
    %v3193 = vsel %vm901, %v3190, %v3192
    %v3194 = vsel %vm903, %v3190, %v3193
    %v3195 = vsel %vm892, %v3120, %v3120
    %v3196 = vsel %vm894, %v3120, %v3195
    %v3197 = vrot.slane %v3122, 7
    %v3198 = vsel %vm897, %v3197, %v3196
    %v3199 = vsel %vm899, %v3197, %v3198
    %v3200 = vsel %vm901, %v3197, %v3199
    %v3201 = vsel %vm903, %v3197, %v3200
    %v3202 = vsel %vm892, %v3124, %v3124
    %v3203 = vsel %vm894, %v3124, %v3202
    %v3204 = vrot.slane %v3126, 7
    %v3205 = vsel %vm897, %v3204, %v3203
    %v3206 = vsel %vm899, %v3204, %v3205
    %v3207 = vsel %vm901, %v3204, %v3206
    %v3208 = vsel %vm903, %v3204, %v3207
    %v3209 = vsel %vm892, %v3128, %v3128
    %v3210 = vsel %vm894, %v3128, %v3209
    %v3211 = vrot.slane %v3130, 7
    %v3212 = vsel %vm897, %v3211, %v3210
    %v3213 = vsel %vm899, %v3211, %v3212
    %v3214 = vsel %vm901, %v3211, %v3213
    %v3215 = vsel %vm903, %v3211, %v3214
    %v3216 = vsel %vm892, %v3132, %v3132
    %v3217 = vsel %vm894, %v3132, %v3216
    %v3218 = vrot.slane %v3134, 7
    %v3219 = vsel %vm897, %v3218, %v3217
    %v3220 = vsel %vm899, %v3218, %v3219
    %v3221 = vsel %vm901, %v3218, %v3220
    %v3222 = vsel %vm903, %v3218, %v3221
    %v3223 = vsel %vm892, %v3136, %v3136
    %v3224 = vsel %vm894, %v3136, %v3223
    %v3225 = vrot.slane %v3138, 7
    %v3226 = vsel %vm897, %v3225, %v3224
    %v3227 = vsel %vm899, %v3225, %v3226
    %v3228 = vsel %vm901, %v3225, %v3227
    %v3229 = vsel %vm903, %v3225, %v3228
    %v3230 = vsel %vm892, %v3140, %v3140
    %v3231 = vsel %vm894, %v3140, %v3230
    %v3232 = vrot.slane %v3142, 7
    %v3233 = vsel %vm897, %v3232, %v3231
    %v3234 = vsel %vm899, %v3232, %v3233
    %v3235 = vsel %vm901, %v3232, %v3234
    %v3236 = vsel %vm903, %v3232, %v3235
    %v3237 = vsel %vm892, %v3144, %v3144
    %v3238 = vsel %vm894, %v3144, %v3237
    %v3239 = vrot.slane %v3146, 7
    %v3240 = vsel %vm897, %v3239, %v3238
    %v3241 = vsel %vm899, %v3239, %v3240
    %v3242 = vsel %vm901, %v3239, %v3241
    %v3243 = vsel %vm903, %v3239, %v3242
    %v3244 = vsel %vm892, %v3148, %v3148
    %v3245 = vsel %vm894, %v3148, %v3244
    %v3246 = vrot.slane %v3150, 7
    %v3247 = vsel %vm897, %v3246, %v3245
    %v3248 = vsel %vm899, %v3246, %v3247
    %v3249 = vsel %vm901, %v3246, %v3248
    %v3250 = vsel %vm903, %v3246, %v3249
    %v3251 = vsel %vm892, %v3152, %v3152
    %v3252 = vsel %vm894, %v3152, %v3251
    %v3253 = vrot.slane %v3154, 7
    %v3254 = vsel %vm897, %v3253, %v3252
    %v3255 = vsel %vm899, %v3253, %v3254
    %v3256 = vsel %vm901, %v3253, %v3255
    %v3257 = vsel %vm903, %v3253, %v3256
    %v3258 = vsel %vm892, %v3156, %v3156
    %v3259 = vsel %vm894, %v3156, %v3258
    %v3260 = vrot.slane %v3158, 7
    %v3261 = vsel %vm897, %v3260, %v3259
    %v3262 = vsel %vm899, %v3260, %v3261
    %v3263 = vsel %vm901, %v3260, %v3262
    %v3264 = vsel %vm903, %v3260, %v3263
    %v3265 = vsel %vm892, %v3160, %v3160
    %v3266 = vsel %vm894, %v3160, %v3265
    %v3267 = vrot.slane %v3162, 7
    %v3268 = vsel %vm897, %v3267, %v3266
    %v3269 = vsel %vm899, %v3267, %v3268
    %v3270 = vsel %vm901, %v3267, %v3269
    %v3271 = vsel %vm903, %v3267, %v3270
    %v3272 = vsel %vm892, %v3164, %v3164
    %v3273 = vsel %vm894, %v3164, %v3272
    %v3274 = vrot.slane %v3166, 7
    %v3275 = vsel %vm897, %v3274, %v3273
    %v3276 = vsel %vm899, %v3274, %v3275
    %v3277 = vsel %vm901, %v3274, %v3276
    %v3278 = vsel %vm903, %v3274, %v3277
    %v3295 = vcombine.low %v3173, %v3201
    %v3297 = vunpack.c.l.s4 1934713408
    %v3298 = vunpack.c.0.s8 %v3297
    %v3299 = vlaneseq
    %v3300 = vshrl.u32 %v3299, 7
    %v3301 = vsub.s32 %v3298, %v3300
    %v3302 = vrot.slane %v3295, %v3301
    %v3303 = vcombine.high %v3302, 0.0
    %v3304 = vcombine.low %v3229, %v3257
    %v3306 = vunpack.c.l.s4 1934713408
    %v3307 = vunpack.c.0.s8 %v3306
    %v3308 = vlaneseq
    %v3309 = vshrl.u32 %v3308, 7
    %v3310 = vsub.s32 %v3307, %v3309
    %v3311 = vrot.slane %v3304, %v3310
    %v3312 = vcombine.high %v3311, 0.0
    %v3313 = vcombine.low %v3180, %v3208
    %v3315 = vunpack.c.l.s4 1934713408
    %v3316 = vunpack.c.0.s8 %v3315
    %v3317 = vlaneseq
    %v3318 = vshrl.u32 %v3317, 7
    %v3319 = vsub.s32 %v3316, %v3318
    %v3320 = vrot.slane %v3313, %v3319
    %v3321 = vcombine.high %v3320, 0.0
    %v3322 = vcombine.low %v3236, %v3264
    %v3324 = vunpack.c.l.s4 1934713408
    %v3325 = vunpack.c.0.s8 %v3324
    %v3326 = vlaneseq
    %v3327 = vshrl.u32 %v3326, 7
    %v3328 = vsub.s32 %v3325, %v3327
    %v3329 = vrot.slane %v3322, %v3328
    %v3330 = vcombine.high %v3329, 0.0
    %v3331 = vcombine.low %v3187, %v3215
    %v3333 = vunpack.c.l.s4 1934713408
    %v3334 = vunpack.c.0.s8 %v3333
    %v3335 = vlaneseq
    %v3336 = vshrl.u32 %v3335, 7
    %v3337 = vsub.s32 %v3334, %v3336
    %v3338 = vrot.slane %v3331, %v3337
    %v3339 = vcombine.high %v3338, 0.0
    %v3340 = vcombine.low %v3243, %v3271
    %v3342 = vunpack.c.l.s4 1934713408
    %v3343 = vunpack.c.0.s8 %v3342
    %v3344 = vlaneseq
    %v3345 = vshrl.u32 %v3344, 7
    %v3346 = vsub.s32 %v3343, %v3345
    %v3347 = vrot.slane %v3340, %v3346
    %v3348 = vcombine.high %v3347, 0.0
    %v3349 = vcombine.low %v3194, %v3222
    %v3351 = vunpack.c.l.s4 1934713408
    %v3352 = vunpack.c.0.s8 %v3351
    %v3353 = vlaneseq
    %v3354 = vshrl.u32 %v3353, 7
    %v3355 = vsub.s32 %v3352, %v3354
    %v3356 = vrot.slane %v3349, %v3355
    %v3357 = vcombine.high %v3356, 0.0
    %v3358 = vcombine.low %v3250, %v3278
    %v3360 = vunpack.c.l.s4 1934713408
    %v3361 = vunpack.c.0.s8 %v3360
    %v3362 = vlaneseq
    %v3363 = vshrl.u32 %v3362, 7
    %v3364 = vsub.s32 %v3361, %v3363
    %v3365 = vrot.slane %v3358, %v3364
    %v3366 = vcombine.high %v3365, 0.0
    %3383 = vrot.lane.b32.xlu0 %v3302, 112
    %v3384 = vpop.permute.xlu0 %3383
    %3385 = vrot.lane.b32.xlu0 %v3311, 112
    %v3386 = vpop.permute.xlu0 %3385
    %3387 = vrot.lane.b32.xlu0 %v3303, 112
    %v3388 = vpop.permute.xlu0 %3387
    %3389 = vrot.lane.b32.xlu0 %v3312, 112
    %v3390 = vpop.permute.xlu0 %3389
    %3391 = vrot.lane.b32.xlu0 %v3320, 112
    %v3392 = vpop.permute.xlu0 %3391
    %3393 = vrot.lane.b32.xlu0 %v3329, 112
    %v3394 = vpop.permute.xlu0 %3393
    %3395 = vrot.lane.b32.xlu0 %v3321, 112
    %v3396 = vpop.permute.xlu0 %3395
    %3397 = vrot.lane.b32.xlu0 %v3330, 112
    %v3398 = vpop.permute.xlu0 %3397
    %3399 = vrot.lane.b32.xlu0 %v3338, 112
    %v3400 = vpop.permute.xlu0 %3399
    %3401 = vrot.lane.b32.xlu0 %v3347, 112
    %v3402 = vpop.permute.xlu0 %3401
    %3403 = vrot.lane.b32.xlu0 %v3339, 112
    %v3404 = vpop.permute.xlu0 %3403
    %3405 = vrot.lane.b32.xlu0 %v3348, 112
    %v3406 = vpop.permute.xlu0 %3405
    %3407 = vrot.lane.b32.xlu0 %v3356, 112
    %v3408 = vpop.permute.xlu0 %3407
    %3409 = vrot.lane.b32.xlu0 %v3365, 112
    %v3410 = vpop.permute.xlu0 %3409
    %3411 = vrot.lane.b32.xlu0 %v3357, 112
    %v3412 = vpop.permute.xlu0 %3411
    %3413 = vrot.lane.b32.xlu0 %v3366, 112
    %v3414 = vpop.permute.xlu0 %3413
    %v3431 = vmax.f32 %v3302, %v3384
    %v3432 = vmax.f32 %v3311, %v3386
    %v3433 = vmax.f32 %v3303, %v3388
    %v3434 = vmax.f32 %v3312, %v3390
    %v3435 = vmax.f32 %v3320, %v3392
    %v3436 = vmax.f32 %v3329, %v3394
    %v3437 = vmax.f32 %v3321, %v3396
    %v3438 = vmax.f32 %v3330, %v3398
    %v3439 = vmax.f32 %v3338, %v3400
    %v3440 = vmax.f32 %v3347, %v3402
    %v3441 = vmax.f32 %v3339, %v3404
    %v3442 = vmax.f32 %v3348, %v3406
    %v3443 = vmax.f32 %v3356, %v3408
    %v3444 = vmax.f32 %v3365, %v3410
    %v3445 = vmax.f32 %v3357, %v3412
    %v3446 = vmax.f32 %v3366, %v3414
    %v3447 = vcombine.low %v3431, %v3433
    %v3449 = vunpack.c.l.s4 1934713408
    %v3450 = vunpack.c.0.s8 %v3449
    %v3451 = vlaneseq
    %v3452 = vshrl.u32 %v3451, 7
    %v3453 = vsub.s32 %v3450, %v3452
    %v3454 = vrot.slane %v3447, %v3453
    %v3455 = vcombine.high %v3454, 0.0
    %v3456 = vcombine.low %v3435, %v3437
    %v3458 = vunpack.c.l.s4 1934713408
    %v3459 = vunpack.c.0.s8 %v3458
    %v3460 = vlaneseq
    %v3461 = vshrl.u32 %v3460, 7
    %v3462 = vsub.s32 %v3459, %v3461
    %v3463 = vrot.slane %v3456, %v3462
    %v3464 = vcombine.high %v3463, 0.0
    %v3465 = vcombine.low %v3439, %v3441
    %v3467 = vunpack.c.l.s4 1934713408
    %v3468 = vunpack.c.0.s8 %v3467
    %v3469 = vlaneseq
    %v3470 = vshrl.u32 %v3469, 7
    %v3471 = vsub.s32 %v3468, %v3470
    %v3472 = vrot.slane %v3465, %v3471
    %v3473 = vcombine.high %v3472, 0.0
    %v3474 = vcombine.low %v3443, %v3445
    %v3476 = vunpack.c.l.s4 1934713408
    %v3477 = vunpack.c.0.s8 %v3476
    %v3478 = vlaneseq
    %v3479 = vshrl.u32 %v3478, 7
    %v3480 = vsub.s32 %v3477, %v3479
    %v3481 = vrot.slane %v3474, %v3480
    %v3482 = vcombine.high %v3481, 0.0
    %v3483 = vcombine.low %v3432, %v3434
    %v3485 = vunpack.c.l.s4 1934713408
    %v3486 = vunpack.c.0.s8 %v3485
    %v3487 = vlaneseq
    %v3488 = vshrl.u32 %v3487, 7
    %v3489 = vsub.s32 %v3486, %v3488
    %v3490 = vrot.slane %v3483, %v3489
    %v3491 = vcombine.high %v3490, 0.0
    %v3492 = vcombine.low %v3436, %v3438
    %v3494 = vunpack.c.l.s4 1934713408
    %v3495 = vunpack.c.0.s8 %v3494
    %v3496 = vlaneseq
    %v3497 = vshrl.u32 %v3496, 7
    %v3498 = vsub.s32 %v3495, %v3497
    %v3499 = vrot.slane %v3492, %v3498
    %v3500 = vcombine.high %v3499, 0.0
    %v3501 = vcombine.low %v3440, %v3442
    %v3503 = vunpack.c.l.s4 1934713408
    %v3504 = vunpack.c.0.s8 %v3503
    %v3505 = vlaneseq
    %v3506 = vshrl.u32 %v3505, 7
    %v3507 = vsub.s32 %v3504, %v3506
    %v3508 = vrot.slane %v3501, %v3507
    %v3509 = vcombine.high %v3508, 0.0
    %v3510 = vcombine.low %v3444, %v3446
    %v3512 = vunpack.c.l.s4 1934713408
    %v3513 = vunpack.c.0.s8 %v3512
    %v3514 = vlaneseq
    %v3515 = vshrl.u32 %v3514, 7
    %v3516 = vsub.s32 %v3513, %v3515
    %v3517 = vrot.slane %v3510, %v3516
    %v3518 = vcombine.high %v3517, 0.0
    %v3523 = vcombine.low %v3454, %v3463
    %v3524 = vcombine.low %v3472, %v3481
    %v3526 = vunpack.c.l.s4 1983009808
    %v3527 = vunpack.c.0.s8 %v3526
    %v3528 = vlaneseq
    %v3529 = vshrl.u32 %v3528, 7
    %v3530 = vsub.s32 %v3527, %v3529
    %v3531 = vrot.slane %v3523, %v3530
    %v3533 = vunpack.c.l.s4 1983009808
    %v3534 = vunpack.c.0.s8 %v3533
    %v3535 = vlaneseq
    %v3536 = vshrl.u32 %v3535, 7
    %v3537 = vsub.s32 %v3534, %v3536
    %v3538 = vrot.slane %v3524, %v3537
    %v3539 = vcombine.low %v3531, %v3538
    %v3545 = vcombine.low %v3455, %v3464
    %v3546 = vcombine.low %v3473, %v3482
    %v3548 = vunpack.c.l.s4 1983009808
    %v3549 = vunpack.c.0.s8 %v3548
    %v3550 = vlaneseq
    %v3551 = vshrl.u32 %v3550, 7
    %v3552 = vsub.s32 %v3549, %v3551
    %v3553 = vrot.slane %v3545, %v3552
    %v3555 = vunpack.c.l.s4 1983009808
    %v3556 = vunpack.c.0.s8 %v3555
    %v3557 = vlaneseq
    %v3558 = vshrl.u32 %v3557, 7
    %v3559 = vsub.s32 %v3556, %v3558
    %v3560 = vrot.slane %v3546, %v3559
    %v3561 = vcombine.low %v3553, %v3560
    %3562 = vrot.lane.b32.xlu0 %v3561, 16
    %v3563 = vpop.permute.xlu0 %3562
    %v3569 = vcombine.low %v3490, %v3499
    %v3570 = vcombine.low %v3508, %v3517
    %v3572 = vunpack.c.l.s4 1983009808
    %v3573 = vunpack.c.0.s8 %v3572
    %v3574 = vlaneseq
    %v3575 = vshrl.u32 %v3574, 7
    %v3576 = vsub.s32 %v3573, %v3575
    %v3577 = vrot.slane %v3569, %v3576
    %v3579 = vunpack.c.l.s4 1983009808
    %v3580 = vunpack.c.0.s8 %v3579
    %v3581 = vlaneseq
    %v3582 = vshrl.u32 %v3581, 7
    %v3583 = vsub.s32 %v3580, %v3582
    %v3584 = vrot.slane %v3570, %v3583
    %v3585 = vcombine.low %v3577, %v3584
    %3586 = vrot.lane.b32.xlu0 %v3585, 32
    %v3587 = vpop.permute.xlu0 %3586
    %v3593 = vcombine.low %v3491, %v3500
    %v3594 = vcombine.low %v3509, %v3518
    %v3596 = vunpack.c.l.s4 1983009808
    %v3597 = vunpack.c.0.s8 %v3596
    %v3598 = vlaneseq
    %v3599 = vshrl.u32 %v3598, 7
    %v3600 = vsub.s32 %v3597, %v3599
    %v3601 = vrot.slane %v3593, %v3600
    %v3603 = vunpack.c.l.s4 1983009808
    %v3604 = vunpack.c.0.s8 %v3603
    %v3605 = vlaneseq
    %v3606 = vshrl.u32 %v3605, 7
    %v3607 = vsub.s32 %v3604, %v3606
    %v3608 = vrot.slane %v3594, %v3607
    %v3609 = vcombine.low %v3601, %v3608
    %3610 = vrot.lane.b32.xlu0 %v3609, 48
    %v3611 = vpop.permute.xlu0 %3610
    %v3613 = vsel %vm2693, %v3539, %v3563
    %v3614 = vsel %vm2699, %v3613, %v3587
    %v3615 = vsel %vm2705, %v3614, %v3611
    %v3617 = vunpack.c.l.s4 1983009808
    %v3618 = vunpack.c.0.s8 %v3617
    %v3619 = vlaneseq
    %v3620 = vshrl.u32 %v3619, 7
    %v3621 = vsub.s32 %v3618, %v3620
    %v3622 = vrot.slane %v2030, %v3621
    %v3624 = vunpack.c.l.s4 1983009808
    %v3625 = vunpack.c.0.s8 %v3624
    %v3626 = vlaneseq
    %v3627 = vshrl.u32 %v3626, 7
    %v3628 = vsub.s32 %v3625, %v3627
    %v3629 = vrot.slane %v2039, %v3628
    %v3631 = vunpack.c.l.s4 1983009808
    %v3632 = vunpack.c.0.s8 %v3631
    %v3633 = vlaneseq
    %v3634 = vshrl.u32 %v3633, 7
    %v3635 = vsub.s32 %v3632, %v3634
    %v3636 = vrot.slane %v2048, %v3635
    %v3638 = vunpack.c.l.s4 1983009808
    %v3639 = vunpack.c.0.s8 %v3638
    %v3640 = vlaneseq
    %v3641 = vshrl.u32 %v3640, 7
    %v3642 = vsub.s32 %v3639, %v3641
    %v3643 = vrot.slane %v2057, %v3642
    %v3645 = vunpack.c.l.s4 1983009808
    %v3646 = vunpack.c.0.s8 %v3645
    %v3647 = vlaneseq
    %v3648 = vshrl.u32 %v3647, 7
    %v3649 = vsub.s32 %v3646, %v3648
    %v3650 = vrot.slane %v2174, %v3649
    %v3652 = vunpack.c.l.s4 1983009808
    %v3653 = vunpack.c.0.s8 %v3652
    %v3654 = vlaneseq
    %v3655 = vshrl.u32 %v3654, 7
    %v3656 = vsub.s32 %v3653, %v3655
    %v3657 = vrot.slane %v2183, %v3656
    %v3659 = vunpack.c.l.s4 1983009808
    %v3660 = vunpack.c.0.s8 %v3659
    %v3661 = vlaneseq
    %v3662 = vshrl.u32 %v3661, 7
    %v3663 = vsub.s32 %v3660, %v3662
    %v3664 = vrot.slane %v2192, %v3663
    %v3666 = vunpack.c.l.s4 1983009808
    %v3667 = vunpack.c.0.s8 %v3666
    %v3668 = vlaneseq
    %v3669 = vshrl.u32 %v3668, 7
    %v3670 = vsub.s32 %v3667, %v3669
    %v3671 = vrot.slane %v2201, %v3670
    %3672 = vrot.lane.b32.xlu0 %v3622, 8
    %v3673 = vpop.permute.xlu0 %3672
    %3674 = vrot.lane.b32.xlu0 %v3629, 8
    %v3675 = vpop.permute.xlu0 %3674
    %3676 = vrot.lane.b32.xlu0 %v3636, 8
    %v3677 = vpop.permute.xlu0 %3676
    %3678 = vrot.lane.b32.xlu0 %v3643, 8
    %v3679 = vpop.permute.xlu0 %3678
    %3680 = vrot.lane.b32.xlu0 %v3650, 8
    %v3681 = vpop.permute.xlu0 %3680
    %3682 = vrot.lane.b32.xlu0 %v3657, 8
    %v3683 = vpop.permute.xlu0 %3682
    %3684 = vrot.lane.b32.xlu0 %v3664, 8
    %v3685 = vpop.permute.xlu0 %3684
    %3686 = vrot.lane.b32.xlu0 %v3671, 8
    %v3687 = vpop.permute.xlu0 %3686
    %v3697 = vunpack.c.l.s4 1983009808
    %v3698 = vunpack.c.0.s8 %v3697
    %v3699 = vlaneseq
    %v3700 = vshrl.u32 %v3699, 7
    %v3701 = vsub.s32 %v3698, %v3700
    %v3702 = vrot.slane %v2065, %v3701
    %v3704 = vunpack.c.l.s4 1983009808
    %v3705 = vunpack.c.0.s8 %v3704
    %v3706 = vlaneseq
    %v3707 = vshrl.u32 %v3706, 7
    %v3708 = vsub.s32 %v3705, %v3707
    %v3709 = vrot.slane %v2074, %v3708
    %v3711 = vunpack.c.l.s4 1983009808
    %v3712 = vunpack.c.0.s8 %v3711
    %v3713 = vlaneseq
    %v3714 = vshrl.u32 %v3713, 7
    %v3715 = vsub.s32 %v3712, %v3714
    %v3716 = vrot.slane %v2083, %v3715
    %v3718 = vunpack.c.l.s4 1983009808
    %v3719 = vunpack.c.0.s8 %v3718
    %v3720 = vlaneseq
    %v3721 = vshrl.u32 %v3720, 7
    %v3722 = vsub.s32 %v3719, %v3721
    %v3723 = vrot.slane %v2092, %v3722
    %v3725 = vunpack.c.l.s4 1983009808
    %v3726 = vunpack.c.0.s8 %v3725
    %v3727 = vlaneseq
    %v3728 = vshrl.u32 %v3727, 7
    %v3729 = vsub.s32 %v3726, %v3728
    %v3730 = vrot.slane %v2209, %v3729
    %v3732 = vunpack.c.l.s4 1983009808
    %v3733 = vunpack.c.0.s8 %v3732
    %v3734 = vlaneseq
    %v3735 = vshrl.u32 %v3734, 7
    %v3736 = vsub.s32 %v3733, %v3735
    %v3737 = vrot.slane %v2218, %v3736
    %v3739 = vunpack.c.l.s4 1983009808
    %v3740 = vunpack.c.0.s8 %v3739
    %v3741 = vlaneseq
    %v3742 = vshrl.u32 %v3741, 7
    %v3743 = vsub.s32 %v3740, %v3742
    %v3744 = vrot.slane %v2227, %v3743
    %v3746 = vunpack.c.l.s4 1983009808
    %v3747 = vunpack.c.0.s8 %v3746
    %v3748 = vlaneseq
    %v3749 = vshrl.u32 %v3748, 7
    %v3750 = vsub.s32 %v3747, %v3749
    %v3751 = vrot.slane %v2236, %v3750
    %3752 = vrot.lane.b32.xlu0 %v3702, 16
    %v3753 = vpop.permute.xlu0 %3752
    %3754 = vrot.lane.b32.xlu0 %v3709, 16
    %v3755 = vpop.permute.xlu0 %3754
    %3756 = vrot.lane.b32.xlu0 %v3716, 16
    %v3757 = vpop.permute.xlu0 %3756
    %3758 = vrot.lane.b32.xlu0 %v3723, 16
    %v3759 = vpop.permute.xlu0 %3758
    %3760 = vrot.lane.b32.xlu0 %v3730, 16
    %v3761 = vpop.permute.xlu0 %3760
    %3762 = vrot.lane.b32.xlu0 %v3737, 16
    %v3763 = vpop.permute.xlu0 %3762
    %3764 = vrot.lane.b32.xlu0 %v3744, 16
    %v3765 = vpop.permute.xlu0 %3764
    %3766 = vrot.lane.b32.xlu0 %v3751, 16
    %v3767 = vpop.permute.xlu0 %3766
    %v3777 = vunpack.c.l.s4 1983009808
    %v3778 = vunpack.c.0.s8 %v3777
    %v3779 = vlaneseq
    %v3780 = vshrl.u32 %v3779, 7
    %v3781 = vsub.s32 %v3778, %v3780
    %v3782 = vrot.slane %v2066, %v3781
    %v3784 = vunpack.c.l.s4 1983009808
    %v3785 = vunpack.c.0.s8 %v3784
    %v3786 = vlaneseq
    %v3787 = vshrl.u32 %v3786, 7
    %v3788 = vsub.s32 %v3785, %v3787
    %v3789 = vrot.slane %v2075, %v3788
    %v3791 = vunpack.c.l.s4 1983009808
    %v3792 = vunpack.c.0.s8 %v3791
    %v3793 = vlaneseq
    %v3794 = vshrl.u32 %v3793, 7
    %v3795 = vsub.s32 %v3792, %v3794
    %v3796 = vrot.slane %v2084, %v3795
    %v3798 = vunpack.c.l.s4 1983009808
    %v3799 = vunpack.c.0.s8 %v3798
    %v3800 = vlaneseq
    %v3801 = vshrl.u32 %v3800, 7
    %v3802 = vsub.s32 %v3799, %v3801
    %v3803 = vrot.slane %v2093, %v3802
    %v3805 = vunpack.c.l.s4 1983009808
    %v3806 = vunpack.c.0.s8 %v3805
    %v3807 = vlaneseq
    %v3808 = vshrl.u32 %v3807, 7
    %v3809 = vsub.s32 %v3806, %v3808
    %v3810 = vrot.slane %v2210, %v3809
    %v3812 = vunpack.c.l.s4 1983009808
    %v3813 = vunpack.c.0.s8 %v3812
    %v3814 = vlaneseq
    %v3815 = vshrl.u32 %v3814, 7
    %v3816 = vsub.s32 %v3813, %v3815
    %v3817 = vrot.slane %v2219, %v3816
    %v3819 = vunpack.c.l.s4 1983009808
    %v3820 = vunpack.c.0.s8 %v3819
    %v3821 = vlaneseq
    %v3822 = vshrl.u32 %v3821, 7
    %v3823 = vsub.s32 %v3820, %v3822
    %v3824 = vrot.slane %v2228, %v3823
    %v3826 = vunpack.c.l.s4 1983009808
    %v3827 = vunpack.c.0.s8 %v3826
    %v3828 = vlaneseq
    %v3829 = vshrl.u32 %v3828, 7
    %v3830 = vsub.s32 %v3827, %v3829
    %v3831 = vrot.slane %v2237, %v3830
    %3832 = vrot.lane.b32.xlu0 %v3782, 24
    %v3833 = vpop.permute.xlu0 %3832
    %3834 = vrot.lane.b32.xlu0 %v3789, 24
    %v3835 = vpop.permute.xlu0 %3834
    %3836 = vrot.lane.b32.xlu0 %v3796, 24
    %v3837 = vpop.permute.xlu0 %3836
    %3838 = vrot.lane.b32.xlu0 %v3803, 24
    %v3839 = vpop.permute.xlu0 %3838
    %3840 = vrot.lane.b32.xlu0 %v3810, 24
    %v3841 = vpop.permute.xlu0 %3840
    %3842 = vrot.lane.b32.xlu0 %v3817, 24
    %v3843 = vpop.permute.xlu0 %3842
    %3844 = vrot.lane.b32.xlu0 %v3824, 24
    %v3845 = vpop.permute.xlu0 %3844
    %3846 = vrot.lane.b32.xlu0 %v3831, 24
    %v3847 = vpop.permute.xlu0 %3846
    %v3857 = vunpack.c.l.s4 1983009808
    %v3858 = vunpack.c.0.s8 %v3857
    %v3859 = vlaneseq
    %v3860 = vshrl.u32 %v3859, 7
    %v3861 = vsub.s32 %v3858, %v3860
    %v3862 = vrot.slane %v2101, %v3861
    %v3864 = vunpack.c.l.s4 1983009808
    %v3865 = vunpack.c.0.s8 %v3864
    %v3866 = vlaneseq
    %v3867 = vshrl.u32 %v3866, 7
    %v3868 = vsub.s32 %v3865, %v3867
    %v3869 = vrot.slane %v2110, %v3868
    %v3871 = vunpack.c.l.s4 1983009808
    %v3872 = vunpack.c.0.s8 %v3871
    %v3873 = vlaneseq
    %v3874 = vshrl.u32 %v3873, 7
    %v3875 = vsub.s32 %v3872, %v3874
    %v3876 = vrot.slane %v2119, %v3875
    %v3878 = vunpack.c.l.s4 1983009808
    %v3879 = vunpack.c.0.s8 %v3878
    %v3880 = vlaneseq
    %v3881 = vshrl.u32 %v3880, 7
    %v3882 = vsub.s32 %v3879, %v3881
    %v3883 = vrot.slane %v2128, %v3882
    %v3885 = vunpack.c.l.s4 1983009808
    %v3886 = vunpack.c.0.s8 %v3885
    %v3887 = vlaneseq
    %v3888 = vshrl.u32 %v3887, 7
    %v3889 = vsub.s32 %v3886, %v3888
    %v3890 = vrot.slane %v2245, %v3889
    %v3892 = vunpack.c.l.s4 1983009808
    %v3893 = vunpack.c.0.s8 %v3892
    %v3894 = vlaneseq
    %v3895 = vshrl.u32 %v3894, 7
    %v3896 = vsub.s32 %v3893, %v3895
    %v3897 = vrot.slane %v2254, %v3896
    %v3899 = vunpack.c.l.s4 1983009808
    %v3900 = vunpack.c.0.s8 %v3899
    %v3901 = vlaneseq
    %v3902 = vshrl.u32 %v3901, 7
    %v3903 = vsub.s32 %v3900, %v3902
    %v3904 = vrot.slane %v2263, %v3903
    %v3906 = vunpack.c.l.s4 1983009808
    %v3907 = vunpack.c.0.s8 %v3906
    %v3908 = vlaneseq
    %v3909 = vshrl.u32 %v3908, 7
    %v3910 = vsub.s32 %v3907, %v3909
    %v3911 = vrot.slane %v2272, %v3910
    %3912 = vrot.lane.b32.xlu0 %v3862, 32
    %v3913 = vpop.permute.xlu0 %3912
    %3914 = vrot.lane.b32.xlu0 %v3869, 32
    %v3915 = vpop.permute.xlu0 %3914
    %3916 = vrot.lane.b32.xlu0 %v3876, 32
    %v3917 = vpop.permute.xlu0 %3916
    %3918 = vrot.lane.b32.xlu0 %v3883, 32
    %v3919 = vpop.permute.xlu0 %3918
    %3920 = vrot.lane.b32.xlu0 %v3890, 32
    %v3921 = vpop.permute.xlu0 %3920
    %3922 = vrot.lane.b32.xlu0 %v3897, 32
    %v3923 = vpop.permute.xlu0 %3922
    %3924 = vrot.lane.b32.xlu0 %v3904, 32
    %v3925 = vpop.permute.xlu0 %3924
    %3926 = vrot.lane.b32.xlu0 %v3911, 32
    %v3927 = vpop.permute.xlu0 %3926
    %v3937 = vunpack.c.l.s4 1983009808
    %v3938 = vunpack.c.0.s8 %v3937
    %v3939 = vlaneseq
    %v3940 = vshrl.u32 %v3939, 7
    %v3941 = vsub.s32 %v3938, %v3940
    %v3942 = vrot.slane %v2102, %v3941
    %v3944 = vunpack.c.l.s4 1983009808
    %v3945 = vunpack.c.0.s8 %v3944
    %v3946 = vlaneseq
    %v3947 = vshrl.u32 %v3946, 7
    %v3948 = vsub.s32 %v3945, %v3947
    %v3949 = vrot.slane %v2111, %v3948
    %v3951 = vunpack.c.l.s4 1983009808
    %v3952 = vunpack.c.0.s8 %v3951
    %v3953 = vlaneseq
    %v3954 = vshrl.u32 %v3953, 7
    %v3955 = vsub.s32 %v3952, %v3954
    %v3956 = vrot.slane %v2120, %v3955
    %v3958 = vunpack.c.l.s4 1983009808
    %v3959 = vunpack.c.0.s8 %v3958
    %v3960 = vlaneseq
    %v3961 = vshrl.u32 %v3960, 7
    %v3962 = vsub.s32 %v3959, %v3961
    %v3963 = vrot.slane %v2129, %v3962
    %v3965 = vunpack.c.l.s4 1983009808
    %v3966 = vunpack.c.0.s8 %v3965
    %v3967 = vlaneseq
    %v3968 = vshrl.u32 %v3967, 7
    %v3969 = vsub.s32 %v3966, %v3968
    %v3970 = vrot.slane %v2246, %v3969
    %v3972 = vunpack.c.l.s4 1983009808
    %v3973 = vunpack.c.0.s8 %v3972
    %v3974 = vlaneseq
    %v3975 = vshrl.u32 %v3974, 7
    %v3976 = vsub.s32 %v3973, %v3975
    %v3977 = vrot.slane %v2255, %v3976
    %v3979 = vunpack.c.l.s4 1983009808
    %v3980 = vunpack.c.0.s8 %v3979
    %v3981 = vlaneseq
    %v3982 = vshrl.u32 %v3981, 7
    %v3983 = vsub.s32 %v3980, %v3982
    %v3984 = vrot.slane %v2264, %v3983
    %v3986 = vunpack.c.l.s4 1983009808
    %v3987 = vunpack.c.0.s8 %v3986
    %v3988 = vlaneseq
    %v3989 = vshrl.u32 %v3988, 7
    %v3990 = vsub.s32 %v3987, %v3989
    %v3991 = vrot.slane %v2273, %v3990
    %3992 = vrot.lane.b32.xlu0 %v3942, 40
    %v3993 = vpop.permute.xlu0 %3992
    %3994 = vrot.lane.b32.xlu0 %v3949, 40
    %v3995 = vpop.permute.xlu0 %3994
    %3996 = vrot.lane.b32.xlu0 %v3956, 40
    %v3997 = vpop.permute.xlu0 %3996
    %3998 = vrot.lane.b32.xlu0 %v3963, 40
    %v3999 = vpop.permute.xlu0 %3998
    %4000 = vrot.lane.b32.xlu0 %v3970, 40
    %v4001 = vpop.permute.xlu0 %4000
    %4002 = vrot.lane.b32.xlu0 %v3977, 40
    %v4003 = vpop.permute.xlu0 %4002
    %4004 = vrot.lane.b32.xlu0 %v3984, 40
    %v4005 = vpop.permute.xlu0 %4004
    %4006 = vrot.lane.b32.xlu0 %v3991, 40
    %v4007 = vpop.permute.xlu0 %4006
    %v4017 = vunpack.c.l.s4 1983009808
    %v4018 = vunpack.c.0.s8 %v4017
    %v4019 = vlaneseq
    %v4020 = vshrl.u32 %v4019, 7
    %v4021 = vsub.s32 %v4018, %v4020
    %v4022 = vrot.slane %v2137, %v4021
    %v4024 = vunpack.c.l.s4 1983009808
    %v4025 = vunpack.c.0.s8 %v4024
    %v4026 = vlaneseq
    %v4027 = vshrl.u32 %v4026, 7
    %v4028 = vsub.s32 %v4025, %v4027
    %v4029 = vrot.slane %v2146, %v4028
    %v4031 = vunpack.c.l.s4 1983009808
    %v4032 = vunpack.c.0.s8 %v4031
    %v4033 = vlaneseq
    %v4034 = vshrl.u32 %v4033, 7
    %v4035 = vsub.s32 %v4032, %v4034
    %v4036 = vrot.slane %v2155, %v4035
    %v4038 = vunpack.c.l.s4 1983009808
    %v4039 = vunpack.c.0.s8 %v4038
    %v4040 = vlaneseq
    %v4041 = vshrl.u32 %v4040, 7
    %v4042 = vsub.s32 %v4039, %v4041
    %v4043 = vrot.slane %v2164, %v4042
    %v4045 = vunpack.c.l.s4 1983009808
    %v4046 = vunpack.c.0.s8 %v4045
    %v4047 = vlaneseq
    %v4048 = vshrl.u32 %v4047, 7
    %v4049 = vsub.s32 %v4046, %v4048
    %v4050 = vrot.slane %v2281, %v4049
    %v4052 = vunpack.c.l.s4 1983009808
    %v4053 = vunpack.c.0.s8 %v4052
    %v4054 = vlaneseq
    %v4055 = vshrl.u32 %v4054, 7
    %v4056 = vsub.s32 %v4053, %v4055
    %v4057 = vrot.slane %v2290, %v4056
    %v4059 = vunpack.c.l.s4 1983009808
    %v4060 = vunpack.c.0.s8 %v4059
    %v4061 = vlaneseq
    %v4062 = vshrl.u32 %v4061, 7
    %v4063 = vsub.s32 %v4060, %v4062
    %v4064 = vrot.slane %v2299, %v4063
    %v4066 = vunpack.c.l.s4 1983009808
    %v4067 = vunpack.c.0.s8 %v4066
    %v4068 = vlaneseq
    %v4069 = vshrl.u32 %v4068, 7
    %v4070 = vsub.s32 %v4067, %v4069
    %v4071 = vrot.slane %v2308, %v4070
    %4072 = vrot.lane.b32.xlu0 %v4022, 48
    %v4073 = vpop.permute.xlu0 %4072
    %4074 = vrot.lane.b32.xlu0 %v4029, 48
    %v4075 = vpop.permute.xlu0 %4074
    %4076 = vrot.lane.b32.xlu0 %v4036, 48
    %v4077 = vpop.permute.xlu0 %4076
    %4078 = vrot.lane.b32.xlu0 %v4043, 48
    %v4079 = vpop.permute.xlu0 %4078
    %4080 = vrot.lane.b32.xlu0 %v4050, 48
    %v4081 = vpop.permute.xlu0 %4080
    %4082 = vrot.lane.b32.xlu0 %v4057, 48
    %v4083 = vpop.permute.xlu0 %4082
    %4084 = vrot.lane.b32.xlu0 %v4064, 48
    %v4085 = vpop.permute.xlu0 %4084
    %4086 = vrot.lane.b32.xlu0 %v4071, 48
    %v4087 = vpop.permute.xlu0 %4086
    %v4097 = vunpack.c.l.s4 1983009808
    %v4098 = vunpack.c.0.s8 %v4097
    %v4099 = vlaneseq
    %v4100 = vshrl.u32 %v4099, 7
    %v4101 = vsub.s32 %v4098, %v4100
    %v4102 = vrot.slane %v2138, %v4101
    %v4104 = vunpack.c.l.s4 1983009808
    %v4105 = vunpack.c.0.s8 %v4104
    %v4106 = vlaneseq
    %v4107 = vshrl.u32 %v4106, 7
    %v4108 = vsub.s32 %v4105, %v4107
    %v4109 = vrot.slane %v2147, %v4108
    %v4111 = vunpack.c.l.s4 1983009808
    %v4112 = vunpack.c.0.s8 %v4111
    %v4113 = vlaneseq
    %v4114 = vshrl.u32 %v4113, 7
    %v4115 = vsub.s32 %v4112, %v4114
    %v4116 = vrot.slane %v2156, %v4115
    %v4118 = vunpack.c.l.s4 1983009808
    %v4119 = vunpack.c.0.s8 %v4118
    %v4120 = vlaneseq
    %v4121 = vshrl.u32 %v4120, 7
    %v4122 = vsub.s32 %v4119, %v4121
    %v4123 = vrot.slane %v2165, %v4122
    %v4125 = vunpack.c.l.s4 1983009808
    %v4126 = vunpack.c.0.s8 %v4125
    %v4127 = vlaneseq
    %v4128 = vshrl.u32 %v4127, 7
    %v4129 = vsub.s32 %v4126, %v4128
    %v4130 = vrot.slane %v2282, %v4129
    %v4132 = vunpack.c.l.s4 1983009808
    %v4133 = vunpack.c.0.s8 %v4132
    %v4134 = vlaneseq
    %v4135 = vshrl.u32 %v4134, 7
    %v4136 = vsub.s32 %v4133, %v4135
    %v4137 = vrot.slane %v2291, %v4136
    %v4139 = vunpack.c.l.s4 1983009808
    %v4140 = vunpack.c.0.s8 %v4139
    %v4141 = vlaneseq
    %v4142 = vshrl.u32 %v4141, 7
    %v4143 = vsub.s32 %v4140, %v4142
    %v4144 = vrot.slane %v2300, %v4143
    %v4146 = vunpack.c.l.s4 1983009808
    %v4147 = vunpack.c.0.s8 %v4146
    %v4148 = vlaneseq
    %v4149 = vshrl.u32 %v4148, 7
    %v4150 = vsub.s32 %v4147, %v4149
    %v4151 = vrot.slane %v2309, %v4150
    %4152 = vrot.lane.b32.xlu0 %v4102, 56
    %v4153 = vpop.permute.xlu0 %4152
    %4154 = vrot.lane.b32.xlu0 %v4109, 56
    %v4155 = vpop.permute.xlu0 %4154
    %4156 = vrot.lane.b32.xlu0 %v4116, 56
    %v4157 = vpop.permute.xlu0 %4156
    %4158 = vrot.lane.b32.xlu0 %v4123, 56
    %v4159 = vpop.permute.xlu0 %4158
    %4160 = vrot.lane.b32.xlu0 %v4130, 56
    %v4161 = vpop.permute.xlu0 %4160
    %4162 = vrot.lane.b32.xlu0 %v4137, 56
    %v4163 = vpop.permute.xlu0 %4162
    %4164 = vrot.lane.b32.xlu0 %v4144, 56
    %v4165 = vpop.permute.xlu0 %4164
    %4166 = vrot.lane.b32.xlu0 %v4151, 56
    %v4167 = vpop.permute.xlu0 %4166
    %v4176 = vsel %vm2690, %v2029, %v3673
    %v4177 = vsel %vm2690, %v2038, %v3675
    %v4178 = vsel %vm2690, %v2047, %v3677
    %v4179 = vsel %vm2690, %v2056, %v3679
    %v4180 = vsel %vm2690, %v2173, %v3681
    %v4181 = vsel %vm2690, %v2182, %v3683
    %v4182 = vsel %vm2690, %v2191, %v3685
    %v4183 = vsel %vm2690, %v2200, %v3687
    %v4184 = vsel %vm2693, %v4176, %v3753
    %v4185 = vsel %vm2693, %v4177, %v3755
    %v4186 = vsel %vm2693, %v4178, %v3757
    %v4187 = vsel %vm2693, %v4179, %v3759
    %v4188 = vsel %vm2693, %v4180, %v3761
    %v4189 = vsel %vm2693, %v4181, %v3763
    %v4190 = vsel %vm2693, %v4182, %v3765
    %v4191 = vsel %vm2693, %v4183, %v3767
    %v4192 = vsel %vm2696, %v4184, %v3833
    %v4193 = vsel %vm2696, %v4185, %v3835
    %v4194 = vsel %vm2696, %v4186, %v3837
    %v4195 = vsel %vm2696, %v4187, %v3839
    %v4196 = vsel %vm2696, %v4188, %v3841
    %v4197 = vsel %vm2696, %v4189, %v3843
    %v4198 = vsel %vm2696, %v4190, %v3845
    %v4199 = vsel %vm2696, %v4191, %v3847
    %v4200 = vsel %vm2699, %v4192, %v3913
    %v4201 = vsel %vm2699, %v4193, %v3915
    %v4202 = vsel %vm2699, %v4194, %v3917
    %v4203 = vsel %vm2699, %v4195, %v3919
    %v4204 = vsel %vm2699, %v4196, %v3921
    %v4205 = vsel %vm2699, %v4197, %v3923
    %v4206 = vsel %vm2699, %v4198, %v3925
    %v4207 = vsel %vm2699, %v4199, %v3927
    %v4208 = vsel %vm2702, %v4200, %v3993
    %v4209 = vsel %vm2702, %v4201, %v3995
    %v4210 = vsel %vm2702, %v4202, %v3997
    %v4211 = vsel %vm2702, %v4203, %v3999
    %v4212 = vsel %vm2702, %v4204, %v4001
    %v4213 = vsel %vm2702, %v4205, %v4003
    %v4214 = vsel %vm2702, %v4206, %v4005
    %v4215 = vsel %vm2702, %v4207, %v4007
    %v4216 = vsel %vm2705, %v4208, %v4073
    %v4217 = vsel %vm2705, %v4209, %v4075
    %v4218 = vsel %vm2705, %v4210, %v4077
    %v4219 = vsel %vm2705, %v4211, %v4079
    %v4220 = vsel %vm2705, %v4212, %v4081
    %v4221 = vsel %vm2705, %v4213, %v4083
    %v4222 = vsel %vm2705, %v4214, %v4085
    %v4223 = vsel %vm2705, %v4215, %v4087
    %v4224 = vsel %vm2708, %v4216, %v4153
    %v4225 = vsel %vm2708, %v4217, %v4155
    %v4226 = vsel %vm2708, %v4218, %v4157
    %v4227 = vsel %vm2708, %v4219, %v4159
    %v4228 = vsel %vm2708, %v4220, %v4161
    %v4229 = vsel %vm2708, %v4221, %v4163
    %v4230 = vsel %vm2708, %v4222, %v4165
    %v4231 = vsel %vm2708, %v4223, %v4167
    %v4240 = vrot.slane %v4224, 1
    %v4241 = vrot.slane %v4225, 1
    %v4242 = vrot.slane %v4226, 1
    %v4243 = vrot.slane %v4227, 1
    %v4244 = vrot.slane %v4228, 1
    %v4245 = vrot.slane %v4229, 1
    %v4246 = vrot.slane %v4230, 1
    %v4247 = vrot.slane %v4231, 1
    %v4256 = vmax.f32 %v4224, %v4240
    %v4257 = vmax.f32 %v4225, %v4241
    %v4258 = vmax.f32 %v4226, %v4242
    %v4259 = vmax.f32 %v4227, %v4243
    %v4260 = vmax.f32 %v4228, %v4244
    %v4261 = vmax.f32 %v4229, %v4245
    %v4262 = vmax.f32 %v4230, %v4246
    %v4263 = vmax.f32 %v4231, %v4247
    %4272 = vrot.lane.b32.xlu0 %v4256, 112
    %v4273 = vpop.permute.xlu0 %4272
    %4274 = vrot.lane.b32.xlu0 %v4257, 112
    %v4275 = vpop.permute.xlu0 %4274
    %4276 = vrot.lane.b32.xlu0 %v4258, 112
    %v4277 = vpop.permute.xlu0 %4276
    %4278 = vrot.lane.b32.xlu0 %v4259, 112
    %v4279 = vpop.permute.xlu0 %4278
    %4280 = vrot.lane.b32.xlu0 %v4260, 112
    %v4281 = vpop.permute.xlu0 %4280
    %4282 = vrot.lane.b32.xlu0 %v4261, 112
    %v4283 = vpop.permute.xlu0 %4282
    %4284 = vrot.lane.b32.xlu0 %v4262, 112
    %v4285 = vpop.permute.xlu0 %4284
    %4286 = vrot.lane.b32.xlu0 %v4263, 112
    %v4287 = vpop.permute.xlu0 %4286
    %4288 = vrot.lane.b32.xlu0 %v4256, 96
    %v4289 = vpop.permute.xlu0 %4288
    %4290 = vrot.lane.b32.xlu0 %v4257, 96
    %v4291 = vpop.permute.xlu0 %4290
    %4292 = vrot.lane.b32.xlu0 %v4258, 96
    %v4293 = vpop.permute.xlu0 %4292
    %4294 = vrot.lane.b32.xlu0 %v4259, 96
    %v4295 = vpop.permute.xlu0 %4294
    %4296 = vrot.lane.b32.xlu0 %v4260, 96
    %v4297 = vpop.permute.xlu0 %4296
    %4298 = vrot.lane.b32.xlu0 %v4261, 96
    %v4299 = vpop.permute.xlu0 %4298
    %4300 = vrot.lane.b32.xlu0 %v4262, 96
    %v4301 = vpop.permute.xlu0 %4300
    %4302 = vrot.lane.b32.xlu0 %v4263, 96
    %v4303 = vpop.permute.xlu0 %4302
    %4304 = vrot.lane.b32.xlu0 %v4256, 80
    %v4305 = vpop.permute.xlu0 %4304
    %4306 = vrot.lane.b32.xlu0 %v4257, 80
    %v4307 = vpop.permute.xlu0 %4306
    %4308 = vrot.lane.b32.xlu0 %v4258, 80
    %v4309 = vpop.permute.xlu0 %4308
    %4310 = vrot.lane.b32.xlu0 %v4259, 80
    %v4311 = vpop.permute.xlu0 %4310
    %4312 = vrot.lane.b32.xlu0 %v4260, 80
    %v4313 = vpop.permute.xlu0 %4312
    %4314 = vrot.lane.b32.xlu0 %v4261, 80
    %v4315 = vpop.permute.xlu0 %4314
    %4316 = vrot.lane.b32.xlu0 %v4262, 80
    %v4317 = vpop.permute.xlu0 %4316
    %4318 = vrot.lane.b32.xlu0 %v4263, 80
    %v4319 = vpop.permute.xlu0 %4318
    %v4320 = vrot.slane %v4257, 7
    %v4321 = vsel %vm897, %v4320, %v4256
    %v4322 = vrot.slane %v4258, 6
    %v4323 = vsel %vm891, %v4322, %v4321
    %v4324 = vrot.slane %v4259, 5
    %v4325 = vsel %vm899, %v4324, %v4323
    %v4326 = vrot.slane %v4260, 4
    %v4327 = vsel %vm892, %v4326, %v4325
    %v4328 = vrot.slane %v4261, 3
    %v4329 = vsel %vm901, %v4328, %v4327
    %v4330 = vrot.slane %v4262, 2
    %v4331 = vsel %vm894, %v4330, %v4329
    %v4332 = vrot.slane %v4263, 1
    %v4333 = vsel %vm903, %v4332, %v4331
    %v4334 = vrot.slane %v4275, 7
    %v4335 = vsel %vm897, %v4334, %v4273
    %v4336 = vrot.slane %v4277, 6
    %v4337 = vsel %vm891, %v4336, %v4335
    %v4338 = vrot.slane %v4279, 5
    %v4339 = vsel %vm899, %v4338, %v4337
    %v4340 = vrot.slane %v4281, 4
    %v4341 = vsel %vm892, %v4340, %v4339
    %v4342 = vrot.slane %v4283, 3
    %v4343 = vsel %vm901, %v4342, %v4341
    %v4344 = vrot.slane %v4285, 2
    %v4345 = vsel %vm894, %v4344, %v4343
    %v4346 = vrot.slane %v4287, 1
    %v4347 = vsel %vm903, %v4346, %v4345
    %v4348 = vrot.slane %v4291, 7
    %v4349 = vsel %vm897, %v4348, %v4289
    %v4350 = vrot.slane %v4293, 6
    %v4351 = vsel %vm891, %v4350, %v4349
    %v4352 = vrot.slane %v4295, 5
    %v4353 = vsel %vm899, %v4352, %v4351
    %v4354 = vrot.slane %v4297, 4
    %v4355 = vsel %vm892, %v4354, %v4353
    %v4356 = vrot.slane %v4299, 3
    %v4357 = vsel %vm901, %v4356, %v4355
    %v4358 = vrot.slane %v4301, 2
    %v4359 = vsel %vm894, %v4358, %v4357
    %v4360 = vrot.slane %v4303, 1
    %v4361 = vsel %vm903, %v4360, %v4359
    %v4362 = vrot.slane %v4307, 7
    %v4363 = vsel %vm897, %v4362, %v4305
    %v4364 = vrot.slane %v4309, 6
    %v4365 = vsel %vm891, %v4364, %v4363
    %v4366 = vrot.slane %v4311, 5
    %v4367 = vsel %vm899, %v4366, %v4365
    %v4368 = vrot.slane %v4313, 4
    %v4369 = vsel %vm892, %v4368, %v4367
    %v4370 = vrot.slane %v4315, 3
    %v4371 = vsel %vm901, %v4370, %v4369
    %v4372 = vrot.slane %v4317, 2
    %v4373 = vsel %vm894, %v4372, %v4371
    %v4374 = vrot.slane %v4319, 1
    %v4375 = vsel %vm903, %v4374, %v4373
    %v4380 = vcombine.low %v4333, %v4361
    %v4381 = vcombine.high %v4333, %v4361
    %v4383 = vunpack.c.l.s4 1983009808
    %v4384 = vunpack.c.0.s8 %v4383
    %v4385 = vlaneseq
    %v4386 = vshrl.u32 %v4385, 7
    %v4387 = vsub.s32 %v4384, %v4386
    %v4388 = vrot.slane %v4380, %v4387
    %v4390 = vunpack.c.l.s4 1983009808
    %v4391 = vunpack.c.0.s8 %v4390
    %v4392 = vlaneseq
    %v4393 = vshrl.u32 %v4392, 7
    %v4394 = vsub.s32 %v4391, %v4393
    %v4395 = vrot.slane %v4381, %v4394
    %v4396 = vcombine.low %v4347, %v4375
    %v4397 = vcombine.high %v4347, %v4375
    %v4399 = vunpack.c.l.s4 1983009808
    %v4400 = vunpack.c.0.s8 %v4399
    %v4401 = vlaneseq
    %v4402 = vshrl.u32 %v4401, 7
    %v4403 = vsub.s32 %v4400, %v4402
    %v4404 = vrot.slane %v4396, %v4403
    %v4406 = vunpack.c.l.s4 1983009808
    %v4407 = vunpack.c.0.s8 %v4406
    %v4408 = vlaneseq
    %v4409 = vshrl.u32 %v4408, 7
    %v4410 = vsub.s32 %v4407, %v4409
    %v4411 = vrot.slane %v4397, %v4410
    %v4412 = vcombine.low %v4388, %v4404
    %v4413 = vcombine.high %v4388, %v4404
    %v4415 = vunpack.c.l.s4 1934713408
    %v4416 = vunpack.c.0.s8 %v4415
    %v4417 = vlaneseq
    %v4418 = vshrl.u32 %v4417, 7
    %v4419 = vsub.s32 %v4416, %v4418
    %v4420 = vrot.slane %v4412, %v4419
    %v4422 = vunpack.c.l.s4 1934713408
    %v4423 = vunpack.c.0.s8 %v4422
    %v4424 = vlaneseq
    %v4425 = vshrl.u32 %v4424, 7
    %v4426 = vsub.s32 %v4423, %v4425
    %v4427 = vrot.slane %v4413, %v4426
    %v4428 = vcombine.low %v4395, %v4411
    %v4429 = vcombine.high %v4395, %v4411
    %v4431 = vunpack.c.l.s4 1934713408
    %v4432 = vunpack.c.0.s8 %v4431
    %v4433 = vlaneseq
    %v4434 = vshrl.u32 %v4433, 7
    %v4435 = vsub.s32 %v4432, %v4434
    %v4436 = vrot.slane %v4428, %v4435
    %v4438 = vunpack.c.l.s4 1934713408
    %v4439 = vunpack.c.0.s8 %v4438
    %v4440 = vlaneseq
    %v4441 = vshrl.u32 %v4440, 7
    %v4442 = vsub.s32 %v4439, %v4441
    %v4443 = vrot.slane %v4429, %v4442
    %v4444 = vcombine.high %v4420, 0.0
    %v4445 = vcombine.high %v4427, 0.0
    %v4446 = vcombine.high %v4436, 0.0
    %v4447 = vcombine.high %v4443, 0.0
    %4456 = vrot.lane.b32.xlu0 %v4420, 120
    %v4457 = vpop.permute.xlu0 %4456
    %4458 = vrot.lane.b32.xlu0 %v4444, 120
    %v4459 = vpop.permute.xlu0 %4458
    %4460 = vrot.lane.b32.xlu0 %v4427, 120
    %v4461 = vpop.permute.xlu0 %4460
    %4462 = vrot.lane.b32.xlu0 %v4445, 120
    %v4463 = vpop.permute.xlu0 %4462
    %4464 = vrot.lane.b32.xlu0 %v4436, 120
    %v4465 = vpop.permute.xlu0 %4464
    %4466 = vrot.lane.b32.xlu0 %v4446, 120
    %v4467 = vpop.permute.xlu0 %4466
    %4468 = vrot.lane.b32.xlu0 %v4443, 120
    %v4469 = vpop.permute.xlu0 %4468
    %4470 = vrot.lane.b32.xlu0 %v4447, 120
    %v4471 = vpop.permute.xlu0 %4470
    %v4480 = vmax.f32 %v4420, %v4457
    %v4481 = vmax.f32 %v4444, %v4459
    %v4482 = vmax.f32 %v4427, %v4461
    %v4483 = vmax.f32 %v4445, %v4463
    %v4484 = vmax.f32 %v4436, %v4465
    %v4485 = vmax.f32 %v4446, %v4467
    %v4486 = vmax.f32 %v4443, %v4469
    %v4487 = vmax.f32 %v4447, %v4471
    %v4488 = vcombine.low %v4480, %v4482
    %v4490 = vunpack.c.l.s4 1983009808
    %v4491 = vunpack.c.0.s8 %v4490
    %v4492 = vlaneseq
    %v4493 = vshrl.u32 %v4492, 7
    %v4494 = vsub.s32 %v4491, %v4493
    %v4495 = vrot.slane %v4488, %v4494
    %v4496 = vcombine.low %v4481, %v4483
    %v4498 = vunpack.c.l.s4 1983009808
    %v4499 = vunpack.c.0.s8 %v4498
    %v4500 = vlaneseq
    %v4501 = vshrl.u32 %v4500, 7
    %v4502 = vsub.s32 %v4499, %v4501
    %v4503 = vrot.slane %v4496, %v4502
    %v4504 = vcombine.low %v4484, %v4486
    %v4506 = vunpack.c.l.s4 1983009808
    %v4507 = vunpack.c.0.s8 %v4506
    %v4508 = vlaneseq
    %v4509 = vshrl.u32 %v4508, 7
    %v4510 = vsub.s32 %v4507, %v4509
    %v4511 = vrot.slane %v4504, %v4510
    %v4512 = vcombine.low %v4485, %v4487
    %v4514 = vunpack.c.l.s4 1983009808
    %v4515 = vunpack.c.0.s8 %v4514
    %v4516 = vlaneseq
    %v4517 = vshrl.u32 %v4516, 7
    %v4518 = vsub.s32 %v4515, %v4517
    %v4519 = vrot.slane %v4512, %v4518
    %v4520 = vcombine.low %v4495, %v4503
    %v4521 = vcombine.high %v4495, %v4503
    %v4523 = vunpack.c.l.s4 1934713408
    %v4524 = vunpack.c.0.s8 %v4523
    %v4525 = vlaneseq
    %v4526 = vshrl.u32 %v4525, 7
    %v4527 = vsub.s32 %v4524, %v4526
    %v4528 = vrot.slane %v4520, %v4527
    %v4530 = vunpack.c.l.s4 1934713408
    %v4531 = vunpack.c.0.s8 %v4530
    %v4532 = vlaneseq
    %v4533 = vshrl.u32 %v4532, 7
    %v4534 = vsub.s32 %v4531, %v4533
    %v4535 = vrot.slane %v4521, %v4534
    %v4536 = vcombine.low %v4511, %v4519
    %v4537 = vcombine.high %v4511, %v4519
    %v4539 = vunpack.c.l.s4 1934713408
    %v4540 = vunpack.c.0.s8 %v4539
    %v4541 = vlaneseq
    %v4542 = vshrl.u32 %v4541, 7
    %v4543 = vsub.s32 %v4540, %v4542
    %v4544 = vrot.slane %v4536, %v4543
    %v4546 = vunpack.c.l.s4 1934713408
    %v4547 = vunpack.c.0.s8 %v4546
    %v4548 = vlaneseq
    %v4549 = vshrl.u32 %v4548, 7
    %v4550 = vsub.s32 %v4547, %v4549
    %v4551 = vrot.slane %v4537, %v4550
    %v4552 = vcombine.low %v4528, %v4544
    %v4553 = vcombine.high %v4528, %v4544
    %v4554 = vcombine.low %v4535, %v4551
    %v4555 = vcombine.high %v4535, %v4551
    %4557 = vrot.lane.b32.xlu0 %v4553, 8
    %v4558 = vpop.permute.xlu0 %4557
    %4561 = vrot.lane.b32.xlu0 %v4554, 16
    %v4562 = vpop.permute.xlu0 %4561
    %4565 = vrot.lane.b32.xlu0 %v4555, 24
    %v4566 = vpop.permute.xlu0 %4565
    %v4568 = vsel %vm2690, %v4552, %v4558
    %v4569 = vsel %vm2693, %v4568, %v4562
    %v4570 = vsel %vm2696, %v4569, %v4566
    %v4571 = vld [vmem:[#allocation11] sm:$0xff]
    %v4572 = vld [vmem:[#allocation11 + $0x8] sm:$0xff]
    %v4573 = vld [vmem:[#allocation11 + $0x10] sm:$0xff]
    %v4574 = vld [vmem:[#allocation11 + $0x18] sm:$0xff]
    %v4575 = vld [vmem:[#allocation11 + $0x20] sm:$0xff]
    %v4576 = vld [vmem:[#allocation11 + $0x28] sm:$0xff]
    %v4577 = vld [vmem:[#allocation11 + $0x30] sm:$0xff]
    %v4578 = vld [vmem:[#allocation11 + $0x38] sm:$0xff]
    %v4579 = vld [vmem:[%s6] sm:$0xff]
    %v4580 = vld [vmem:[%s6 + $0x8] sm:$0xff]
    %v4581 = vld [vmem:[%s6 + $0x10] sm:$0xff]
    %v4582 = vld [vmem:[%s6 + $0x18] sm:$0xff]
    %v4584 = vsel %vm2699, %v4570, 0
    %4586 = vmatprep.subr.mxu0 0.0
    %4587 = vmatpush1.msra.mxu0 %v4579
    %4588 = vmatprep.subr.mxu0 0.0
    %4589 = vmatpush1.msra.mxu0 %v4580
    %4590 = vmatprep.subr.mxu0 0.0
    %4591 = vmatpush1.msra.mxu0 %v4581
    %4592 = vmatprep.subr.mxu0 0.0
    %4593 = vmatpush1.msra.mxu0 %v4582
    %4594 = vmatprep.subr.mxu0 0.0
    %4595 = vmatpush1.msra.mxu0 0.0
    %4596 = vmatprep.subr.mxu0 0.0
    %4597 = vmatpush1.msra.mxu0 0.0
    %4598 = vmatprep.subr.mxu0 0.0
    %4599 = vmatpush1.msra.mxu0 0.0
    %4600 = vmatprep.subr.mxu0 0.0
    %4601 = vmatpush1.msra.mxu0 0.0
    %4602 = vmatprep.subr.mxu0 0.0
    %4603 = vmatpush1.msra.mxu0 0.0
    %4604 = vmatprep.subr.mxu0 0.0
    %4605 = vmatpush1.msra.mxu0 0.0
    %4606 = vmatprep.subr.mxu0 0.0
    %4607 = vmatpush1.msra.mxu0 0.0
    %4608 = vmatprep.subr.mxu0 0.0
    %4609 = vmatpush1.msra.mxu0 0.0
    %4610 = vmatprep.subr.mxu0 0.0
    %4611 = vmatpush1.msra.mxu0 0.0
    %4612 = vmatprep.subr.mxu0 0.0
    %4613 = vmatpush1.msra.mxu0 0.0
    %4614 = vmatprep.subr.mxu0 0.0
    %4615 = vmatpush1.msra.mxu0 0.0
    %4616 = vmatprep.subr.mxu0 0.0
    %4617 = vmatpush1.msra.mxu0 0.0
    %4618 = vmatprep.subr.mxu0 0.0
    %4619 = vmatpush1.msra.mxu0 0.0
    %4620 = vmatprep.subr.mxu0 0.0
    %4621 = vmatpush1.msra.mxu0 0.0
    %4622 = vmatprep.subr.mxu0 0.0
    %4623 = vmatpush1.msra.mxu0 0.0
    %4624 = vmatprep.subr.mxu0 0.0
    %4625 = vmatpush1.msra.mxu0 0.0
    %4626 = vmatprep.subr.mxu0 0.0
    %4627 = vmatpush1.msra.mxu0 0.0
    %4628 = vmatprep.subr.mxu0 0.0
    %4629 = vmatpush1.msra.mxu0 0.0
    %4630 = vmatprep.subr.mxu0 0.0
    %4631 = vmatpush1.msra.mxu0 0.0
    %4632 = vmatprep.subr.mxu0 0.0
    %4633 = vmatpush1.msra.mxu0 0.0
    %4634 = vmatprep.subr.mxu0 0.0
    %4635 = vmatpush1.msra.mxu0 0.0
    %4636 = vmatprep.subr.mxu0 0.0
    %4637 = vmatpush1.msra.mxu0 0.0
    %4638 = vmatprep.subr.mxu0 0.0
    %4639 = vmatpush1.msra.mxu0 0.0
    %4640 = vmatprep.subr.mxu0 0.0
    %4641 = vmatpush1.msra.mxu0 0.0
    %4642 = vmatprep.subr.mxu0 0.0
    %4643 = vmatpush1.msra.mxu0 0.0
    %4644 = vmatprep.subr.mxu0 0.0
    %4645 = vmatpush1.msra.mxu0 0.0
    %4646 = vmatprep.subr.mxu0 0.0
    %4647 = vmatpush1.msra.mxu0 0.0
    %4648 = vmatprep.subr.mxu0 0.0
    %4649 = vmatpush1.msra.mxu0 0.0
    %4650 = vmatprep.mubr.f32.mxu0 0.0
    %4651 = vmatmul.mubr.f32.gmra.mrb[0].mxu0 %v4584
    %v4652 = vpop.f32.mrb[0].mxu0
    %v4653 = vadd.f32 0.0, %v4652
    %v4654 = vpop.f32.mrb[0].mxu0
    %4655 = vdwg.mxu0
    %v4657 = vsel %vm119, %v3615, 0
    %4659 = vmatprep.subr.mxu0 0.0
    %4660 = vmatpush1.msra.mxu0 %v4571
    %4661 = vmatprep.subr.mxu0 0.0
    %4662 = vmatpush1.msra.mxu0 %v4572
    %4663 = vmatprep.subr.mxu0 0.0
    %4664 = vmatpush1.msra.mxu0 %v4573
    %4665 = vmatprep.subr.mxu0 0.0
    %4666 = vmatpush1.msra.mxu0 %v4574
    %4667 = vmatprep.subr.mxu0 0.0
    %4668 = vmatpush1.msra.mxu0 %v4575
    %4669 = vmatprep.subr.mxu0 0.0
    %4670 = vmatpush1.msra.mxu0 %v4576
    %4671 = vmatprep.subr.mxu0 0.0
    %4672 = vmatpush1.msra.mxu0 %v4577
    %4673 = vmatprep.subr.mxu0 0.0
    %4674 = vmatpush1.msra.mxu0 %v4578
    %4675 = vmatprep.subr.mxu0 0.0
    %4676 = vmatpush1.msra.mxu0 0.0
    %4677 = vmatprep.subr.mxu0 0.0
    %4678 = vmatpush1.msra.mxu0 0.0
    %4679 = vmatprep.subr.mxu0 0.0
    %4680 = vmatpush1.msra.mxu0 0.0
    %4681 = vmatprep.subr.mxu0 0.0
    %4682 = vmatpush1.msra.mxu0 0.0
    %4683 = vmatprep.subr.mxu0 0.0
    %4684 = vmatpush1.msra.mxu0 0.0
    %4685 = vmatprep.subr.mxu0 0.0
    %4686 = vmatpush1.msra.mxu0 0.0
    %4687 = vmatprep.subr.mxu0 0.0
    %4688 = vmatpush1.msra.mxu0 0.0
    %4689 = vmatprep.subr.mxu0 0.0
    %4690 = vmatpush1.msra.mxu0 0.0
    %4691 = vmatprep.subr.mxu0 0.0
    %4692 = vmatpush1.msra.mxu0 0.0
    %4693 = vmatprep.subr.mxu0 0.0
    %4694 = vmatpush1.msra.mxu0 0.0
    %4695 = vmatprep.subr.mxu0 0.0
    %4696 = vmatpush1.msra.mxu0 0.0
    %4697 = vmatprep.subr.mxu0 0.0
    %4698 = vmatpush1.msra.mxu0 0.0
    %4699 = vmatprep.subr.mxu0 0.0
    %4700 = vmatpush1.msra.mxu0 0.0
    %4701 = vmatprep.subr.mxu0 0.0
    %4702 = vmatpush1.msra.mxu0 0.0
    %4703 = vmatprep.subr.mxu0 0.0
    %4704 = vmatpush1.msra.mxu0 0.0
    %4705 = vmatprep.subr.mxu0 0.0
    %4706 = vmatpush1.msra.mxu0 0.0
    %4707 = vmatprep.subr.mxu0 0.0
    %4708 = vmatpush1.msra.mxu0 0.0
    %4709 = vmatprep.subr.mxu0 0.0
    %4710 = vmatpush1.msra.mxu0 0.0
    %4711 = vmatprep.subr.mxu0 0.0
    %4712 = vmatpush1.msra.mxu0 0.0
    %4713 = vmatprep.subr.mxu0 0.0
    %4714 = vmatpush1.msra.mxu0 0.0
    %4715 = vmatprep.subr.mxu0 0.0
    %4716 = vmatpush1.msra.mxu0 0.0
    %4717 = vmatprep.subr.mxu0 0.0
    %4718 = vmatpush1.msra.mxu0 0.0
    %4719 = vmatprep.subr.mxu0 0.0
    %4720 = vmatpush1.msra.mxu0 0.0
    %4721 = vmatprep.subr.mxu0 0.0
    %4722 = vmatpush1.msra.mxu0 0.0
    %4723 = vmatprep.mubr.f32.mxu0 0.0
    %4724 = vmatmul.mubr.f32.gmra.mrb[0].mxu0 %v4657
    %v4725 = vpop.f32.mrb[0].mxu0
    %v4726 = vadd.f32 %v4653, %v4725
    %v4727 = vpop.f32.mrb[0].mxu0
    %4728 = vdwg.mxu0
    %v4729 = vld [vmem:[%s7] sm:$0x1]
    %v4731 = vlaneseq
    %v4732 = vshrl.u32 %v4731, 7
    %v4733 = vsub.s32 0, %v4732
    %v4734 = vrot.slane %v4729, %v4733
    %v4736 = vadd.f32 %v4726, %v4734
    %vm4737 = vcmp.gt.f32.partialorder %v4736, 0.0
    %v4738 = vmul.f32 %v4736, 0.2
    %v4739 = vsel %vm4737, %v4736, %v4738
    %v4741 = vunpack.c.l.s4 1935823168
    %v4742 = vunpack.c.0.s8 %v4741
    %v4743 = vlaneseq
    %v4744 = vshrl.u32 %v4743, 7
    %v4745 = vsub.s32 %v4742, %v4744
    %v4746 = vrot.slane %v4739, %v4745
    %v4747 = vld [vmem:[#allocation12] sm:$0xff]
    %v4748 = vld [vmem:[#allocation12 + $0x8] sm:$0xff]
    %v4749 = vld [vmem:[#allocation12 + $0x10] sm:$0xff]
    %v4750 = vld [vmem:[#allocation12 + $0x18] sm:$0xff]
    %v4751 = vld [vmem:[#allocation12 + $0x20] sm:$0xff]
    %v4752 = vld [vmem:[#allocation12 + $0x28] sm:$0xff]
    %v4753 = vld [vmem:[#allocation12 + $0x30] sm:$0xff]
    %v4754 = vld [vmem:[#allocation12 + $0x38] sm:$0xff]
    %v4755 = vld [vmem:[#allocation12 + $0x40] sm:$0xff]
    %v4756 = vld [vmem:[#allocation12 + $0x48] sm:$0xff]
    %v4757 = vld [vmem:[#allocation12 + $0x50] sm:$0xff]
    %v4758 = vld [vmem:[#allocation12 + $0x58] sm:$0xff]
    %v4759 = vld [vmem:[#allocation12 + $0x60] sm:$0xff]
    %v4760 = vld [vmem:[#allocation12 + $0x68] sm:$0xff]
    %v4761 = vld [vmem:[#allocation12 + $0x70] sm:$0xff]
    %v4762 = vld [vmem:[#allocation12 + $0x78] sm:$0xff]
    %v4763 = vld [vmem:[#allocation12 + $0x80] sm:$0xff]
    %v4764 = vld [vmem:[#allocation12 + $0x88] sm:$0xff]
    %v4765 = vld [vmem:[#allocation12 + $0x90] sm:$0xff]
    %v4766 = vld [vmem:[#allocation12 + $0x98] sm:$0xff]
    %v4767 = vld [vmem:[#allocation12 + $0xa0] sm:$0xff]
    %v4768 = vld [vmem:[#allocation12 + $0xa8] sm:$0xff]
    %v4769 = vld [vmem:[#allocation12 + $0xb0] sm:$0xff]
    %v4770 = vld [vmem:[#allocation12 + $0xb8] sm:$0xff]
    %v4771 = vld [vmem:[#allocation12 + $0xc0] sm:$0xff]
    %v4772 = vld [vmem:[#allocation12 + $0xc8] sm:$0xff]
    %v4773 = vld [vmem:[#allocation12 + $0xd0] sm:$0xff]
    %v4774 = vld [vmem:[#allocation12 + $0xd8] sm:$0xff]
    %v4775 = vld [vmem:[#allocation12 + $0xe0] sm:$0xff]
    %v4776 = vld [vmem:[#allocation12 + $0xe8] sm:$0xff]
    %v4777 = vld [vmem:[#allocation12 + $0xf0] sm:$0xff]
    %v4778 = vld [vmem:[#allocation12 + $0xf8] sm:$0xff]
    %v4779 = vld [vmem:[#allocation12 + $0x100] sm:$0xff]
    %v4780 = vld [vmem:[#allocation12 + $0x108] sm:$0xff]
    %v4781 = vld [vmem:[#allocation12 + $0x110] sm:$0xff]
    %v4782 = vld [vmem:[#allocation12 + $0x118] sm:$0xff]
    %v4783 = vld [vmem:[#allocation12 + $0x120] sm:$0xff]
    %v4784 = vld [vmem:[#allocation12 + $0x128] sm:$0xff]
    %v4785 = vld [vmem:[#allocation12 + $0x130] sm:$0xff]
    %v4786 = vld [vmem:[#allocation12 + $0x138] sm:$0xff]
    %v4787 = vld [vmem:[#allocation12 + $0x140] sm:$0xff]
    %v4788 = vld [vmem:[#allocation12 + $0x148] sm:$0xff]
    %v4789 = vld [vmem:[#allocation12 + $0x150] sm:$0xff]
    %v4790 = vld [vmem:[#allocation12 + $0x158] sm:$0xff]
    %v4791 = vld [vmem:[#allocation12 + $0x160] sm:$0xff]
    %v4792 = vld [vmem:[#allocation12 + $0x168] sm:$0xff]
    %v4793 = vld [vmem:[#allocation12 + $0x170] sm:$0xff]
    %v4794 = vld [vmem:[#allocation12 + $0x178] sm:$0xff]
    %v4795 = vld [vmem:[#allocation12 + $0x180] sm:$0xff]
    %v4796 = vld [vmem:[#allocation12 + $0x188] sm:$0xff]
    %v4797 = vld [vmem:[#allocation12 + $0x190] sm:$0xff]
    %v4798 = vld [vmem:[#allocation12 + $0x198] sm:$0xff]
    %v4799 = vld [vmem:[#allocation12 + $0x1a0] sm:$0xff]
    %v4800 = vld [vmem:[#allocation12 + $0x1a8] sm:$0xff]
    %v4801 = vld [vmem:[#allocation12 + $0x1b0] sm:$0xff]
    %v4802 = vld [vmem:[#allocation12 + $0x1b8] sm:$0xff]
    %v4803 = vld [vmem:[#allocation12 + $0x1c0] sm:$0xff]
    %v4804 = vld [vmem:[#allocation12 + $0x1c8] sm:$0xff]
    %v4805 = vld [vmem:[#allocation12 + $0x1d0] sm:$0xff]
    %v4806 = vld [vmem:[#allocation12 + $0x1d8] sm:$0xff]
    %v4807 = vld [vmem:[#allocation12 + $0x1e0] sm:$0xff]
    %v4808 = vld [vmem:[#allocation12 + $0x1e8] sm:$0xff]
    %v4809 = vld [vmem:[#allocation12 + $0x1f0] sm:$0xff]
    %v4810 = vld [vmem:[#allocation12 + $0x1f8] sm:$0xff]
    %v4811 = vld [vmem:[%s9] sm:$0x1]
    %v4813 = vlaneseq
    %v4814 = vshrl.u32 %v4813, 7
    %v4815 = vsub.s32 0, %v4814
    %v4816 = vrot.slane %v4811, %v4815
    %v4819 = vcombine.high %v4746, %v4746
    %v4821 = vunpack.c.l.s4 1983009808
    %v4822 = vunpack.c.0.s8 %v4821
    %v4823 = vlaneseq
    %v4824 = vshrl.u32 %v4823, 7
    %v4825 = vsub.s32 %v4822, %v4824
    %v4826 = vrot.slane %v4746, %v4825
    %v4828 = vunpack.c.l.s4 1983009808
    %v4829 = vunpack.c.0.s8 %v4828
    %v4830 = vlaneseq
    %v4831 = vshrl.u32 %v4830, 7
    %v4832 = vsub.s32 %v4829, %v4831
    %v4833 = vrot.slane %v4819, %v4832
    %v4834 = vcombine.high %v4826, %v4826
    %v4835 = vcombine.high %v4833, %v4833
    %4840 = vmatprep.subr.mxu0 0.0
    %4841 = vmatpush1.msra.mxu0 %v4747
    %4842 = vmatprep.subr.mxu0 0.0
    %4843 = vmatpush1.msra.mxu0 %v4748
    %4844 = vmatprep.subr.mxu0 0.0
    %4845 = vmatpush1.msra.mxu0 %v4749
    %4846 = vmatprep.subr.mxu0 0.0
    %4847 = vmatpush1.msra.mxu0 %v4750
    %4848 = vmatprep.subr.mxu0 0.0
    %4849 = vmatpush1.msra.mxu0 %v4751
    %4850 = vmatprep.subr.mxu0 0.0
    %4851 = vmatpush1.msra.mxu0 %v4752
    %4852 = vmatprep.subr.mxu0 0.0
    %4853 = vmatpush1.msra.mxu0 %v4753
    %4854 = vmatprep.subr.mxu0 0.0
    %4855 = vmatpush1.msra.mxu0 %v4754
    %4856 = vmatprep.subr.mxu0 0.0
    %4857 = vmatpush1.msra.mxu0 %v4755
    %4858 = vmatprep.subr.mxu0 0.0
    %4859 = vmatpush1.msra.mxu0 %v4756
    %4860 = vmatprep.subr.mxu0 0.0
    %4861 = vmatpush1.msra.mxu0 %v4757
    %4862 = vmatprep.subr.mxu0 0.0
    %4863 = vmatpush1.msra.mxu0 %v4758
    %4864 = vmatprep.subr.mxu0 0.0
    %4865 = vmatpush1.msra.mxu0 %v4759
    %4866 = vmatprep.subr.mxu0 0.0
    %4867 = vmatpush1.msra.mxu0 %v4760
    %4868 = vmatprep.subr.mxu0 0.0
    %4869 = vmatpush1.msra.mxu0 %v4761
    %4870 = vmatprep.subr.mxu0 0.0
    %4871 = vmatpush1.msra.mxu0 %v4762
    %4872 = vmatprep.subr.mxu0 0.0
    %4873 = vmatpush1.msra.mxu0 %v4763
    %4874 = vmatprep.subr.mxu0 0.0
    %4875 = vmatpush1.msra.mxu0 %v4764
    %4876 = vmatprep.subr.mxu0 0.0
    %4877 = vmatpush1.msra.mxu0 %v4765
    %4878 = vmatprep.subr.mxu0 0.0
    %4879 = vmatpush1.msra.mxu0 %v4766
    %4880 = vmatprep.subr.mxu0 0.0
    %4881 = vmatpush1.msra.mxu0 %v4767
    %4882 = vmatprep.subr.mxu0 0.0
    %4883 = vmatpush1.msra.mxu0 %v4768
    %4884 = vmatprep.subr.mxu0 0.0
    %4885 = vmatpush1.msra.mxu0 %v4769
    %4886 = vmatprep.subr.mxu0 0.0
    %4887 = vmatpush1.msra.mxu0 %v4770
    %4888 = vmatprep.subr.mxu0 0.0
    %4889 = vmatpush1.msra.mxu0 %v4771
    %4890 = vmatprep.subr.mxu0 0.0
    %4891 = vmatpush1.msra.mxu0 %v4772
    %4892 = vmatprep.subr.mxu0 0.0
    %4893 = vmatpush1.msra.mxu0 %v4773
    %4894 = vmatprep.subr.mxu0 0.0
    %4895 = vmatpush1.msra.mxu0 %v4774
    %4896 = vmatprep.subr.mxu0 0.0
    %4897 = vmatpush1.msra.mxu0 %v4775
    %4898 = vmatprep.subr.mxu0 0.0
    %4899 = vmatpush1.msra.mxu0 %v4776
    %4900 = vmatprep.subr.mxu0 0.0
    %4901 = vmatpush1.msra.mxu0 %v4777
    %4902 = vmatprep.subr.mxu0 0.0
    %4903 = vmatpush1.msra.mxu0 %v4778
    %4904 = vmatprep.mubr.f32.mxu0 %v4834
    %4905 = vmatmul.mubr.f32.gmra.mrb[0].mxu0 %v4826
    %v4906 = vpop.f32.mrb[0].mxu0
    %v4907 = vadd.f32 %v4816, %v4906
    %v4908 = vpop.f32.mrb[0].mxu0
    %4909 = vdwg.mxu0
    %4910 = vmatprep.subr.mxu0 0.0
    %4911 = vmatpush1.msra.mxu0 %v4779
    %4912 = vmatprep.subr.mxu0 0.0
    %4913 = vmatpush1.msra.mxu0 %v4780
    %4914 = vmatprep.subr.mxu0 0.0
    %4915 = vmatpush1.msra.mxu0 %v4781
    %4916 = vmatprep.subr.mxu0 0.0
    %4917 = vmatpush1.msra.mxu0 %v4782
    %4918 = vmatprep.subr.mxu0 0.0
    %4919 = vmatpush1.msra.mxu0 %v4783
    %4920 = vmatprep.subr.mxu0 0.0
    %4921 = vmatpush1.msra.mxu0 %v4784
    %4922 = vmatprep.subr.mxu0 0.0
    %4923 = vmatpush1.msra.mxu0 %v4785
    %4924 = vmatprep.subr.mxu0 0.0
    %4925 = vmatpush1.msra.mxu0 %v4786
    %4926 = vmatprep.subr.mxu0 0.0
    %4927 = vmatpush1.msra.mxu0 %v4787
    %4928 = vmatprep.subr.mxu0 0.0
    %4929 = vmatpush1.msra.mxu0 %v4788
    %4930 = vmatprep.subr.mxu0 0.0
    %4931 = vmatpush1.msra.mxu0 %v4789
    %4932 = vmatprep.subr.mxu0 0.0
    %4933 = vmatpush1.msra.mxu0 %v4790
    %4934 = vmatprep.subr.mxu0 0.0
    %4935 = vmatpush1.msra.mxu0 %v4791
    %4936 = vmatprep.subr.mxu0 0.0
    %4937 = vmatpush1.msra.mxu0 %v4792
    %4938 = vmatprep.subr.mxu0 0.0
    %4939 = vmatpush1.msra.mxu0 %v4793
    %4940 = vmatprep.subr.mxu0 0.0
    %4941 = vmatpush1.msra.mxu0 %v4794
    %4942 = vmatprep.subr.mxu0 0.0
    %4943 = vmatpush1.msra.mxu0 %v4795
    %4944 = vmatprep.subr.mxu0 0.0
    %4945 = vmatpush1.msra.mxu0 %v4796
    %4946 = vmatprep.subr.mxu0 0.0
    %4947 = vmatpush1.msra.mxu0 %v4797
    %4948 = vmatprep.subr.mxu0 0.0
    %4949 = vmatpush1.msra.mxu0 %v4798
    %4950 = vmatprep.subr.mxu0 0.0
    %4951 = vmatpush1.msra.mxu0 %v4799
    %4952 = vmatprep.subr.mxu0 0.0
    %4953 = vmatpush1.msra.mxu0 %v4800
    %4954 = vmatprep.subr.mxu0 0.0
    %4955 = vmatpush1.msra.mxu0 %v4801
    %4956 = vmatprep.subr.mxu0 0.0
    %4957 = vmatpush1.msra.mxu0 %v4802
    %4958 = vmatprep.subr.mxu0 0.0
    %4959 = vmatpush1.msra.mxu0 %v4803
    %4960 = vmatprep.subr.mxu0 0.0
    %4961 = vmatpush1.msra.mxu0 %v4804
    %4962 = vmatprep.subr.mxu0 0.0
    %4963 = vmatpush1.msra.mxu0 %v4805
    %4964 = vmatprep.subr.mxu0 0.0
    %4965 = vmatpush1.msra.mxu0 %v4806
    %4966 = vmatprep.subr.mxu0 0.0
    %4967 = vmatpush1.msra.mxu0 %v4807
    %4968 = vmatprep.subr.mxu0 0.0
    %4969 = vmatpush1.msra.mxu0 %v4808
    %4970 = vmatprep.subr.mxu0 0.0
    %4971 = vmatpush1.msra.mxu0 %v4809
    %4972 = vmatprep.subr.mxu0 0.0
    %4973 = vmatpush1.msra.mxu0 %v4810
    %4974 = vmatprep.mubr.f32.mxu0 %v4835
    %4975 = vmatmul.mubr.f32.gmra.mrb[0].mxu0 %v4833
    %v4976 = vpop.f32.mrb[0].mxu0
    %v4977 = vadd.f32 %v4907, %v4976
    %v4978 = vpop.f32.mrb[0].mxu0
    %4979 = vdwg.mxu0
    %v4980 = vmax.f32 %v4977, 0.0
    %vm4981 = vcmask 1041408
    %v4982 = vsel %vm4981, %v4980, 0.0
    %v4983 = vrot.slane %v4982, 4
    %v4984 = vadd.f32 %v4982, %v4983
    %v4985 = vrot.slane %v4984, 2
    %v4986 = vadd.f32 %v4984, %v4985
    %v4987 = vrot.slane %v4986, 1
    %v4988 = vadd.f32 %v4986, %v4987
    %v4989 = vrcp.pop 2.0
    %v4990 = vmul.f32 %v4988, %v4989
    %v4991 = vmul.f32 %v4980, %v4980
    %v4992 = vsel %vm4981, %v4991, 0.0
    %v4993 = vrot.slane %v4992, 4
    %v4994 = vadd.f32 %v4992, %v4993
    %v4995 = vrot.slane %v4994, 2
    %v4996 = vadd.f32 %v4994, %v4995
    %v4997 = vrot.slane %v4996, 1
    %v4998 = vadd.f32 %v4996, %v4997
    %v4999 = vmul.f32 %v4998, %v4989
    %v5000 = vmul.f32 %v4990, %v4990
    %v5001 = vsub.f32 %v4999, %v5000
    %v5002 = vmax.f32 %v5001, 0.0
    %v5003 = vsub.f32 %v4980, %v4990
    %v5004 = vadd.f32 %v5002, 1e-05
    %v5005 = vrsqrt.pop %v5004
    %v5006 = vmul.f32 %v5003, %v5005
    %v5007 = vld [vmem:[#allocation14] sm:$0xff]
    %v5008 = vld [vmem:[#allocation14 + $0x8] sm:$0xff]
    %v5009 = vld [vmem:[#allocation14 + $0x10] sm:$0xff]
    %v5010 = vld [vmem:[#allocation14 + $0x18] sm:$0xff]
    %v5011 = vld [vmem:[#allocation14 + $0x20] sm:$0xff]
    %v5012 = vld [vmem:[#allocation14 + $0x28] sm:$0xff]
    %v5013 = vld [vmem:[#allocation14 + $0x30] sm:$0xff]
    %v5014 = vld [vmem:[#allocation14 + $0x38] sm:$0xff]
    %v5015 = vld [vmem:[#allocation14 + $0x40] sm:$0xff]
    %v5016 = vld [vmem:[#allocation14 + $0x48] sm:$0xff]
    %v5017 = vld [vmem:[#allocation14 + $0x50] sm:$0xff]
    %v5018 = vld [vmem:[#allocation14 + $0x58] sm:$0xff]
    %v5019 = vld [vmem:[#allocation14 + $0x60] sm:$0xff]
    %v5020 = vld [vmem:[#allocation14 + $0x68] sm:$0xff]
    %v5021 = vld [vmem:[#allocation14 + $0x70] sm:$0xff]
    %v5022 = vld [vmem:[#allocation14 + $0x78] sm:$0xff]
    %v5023 = vld [vmem:[%s11] sm:$0x1]
    %v5025 = vlaneseq
    %v5026 = vshrl.u32 %v5025, 7
    %v5027 = vsub.s32 0, %v5026
    %v5028 = vrot.slane %v5023, %v5027
    %5030 = vmatprep.subr.mxu0 0.0
    %5031 = vmatpush1.msra.mxu0 %v5007
    %5032 = vmatprep.subr.mxu0 0.0
    %5033 = vmatpush1.msra.mxu0 %v5008
    %5034 = vmatprep.subr.mxu0 0.0
    %5035 = vmatpush1.msra.mxu0 %v5009
    %5036 = vmatprep.subr.mxu0 0.0
    %5037 = vmatpush1.msra.mxu0 %v5010
    %5038 = vmatprep.subr.mxu0 0.0
    %5039 = vmatpush1.msra.mxu0 %v5011
    %5040 = vmatprep.subr.mxu0 0.0
    %5041 = vmatpush1.msra.mxu0 %v5012
    %5042 = vmatprep.subr.mxu0 0.0
    %5043 = vmatpush1.msra.mxu0 %v5013
    %5044 = vmatprep.subr.mxu0 0.0
    %5045 = vmatpush1.msra.mxu0 %v5014
    %5046 = vmatprep.subr.mxu0 0.0
    %5047 = vmatpush1.msra.mxu0 %v5015
    %5048 = vmatprep.subr.mxu0 0.0
    %5049 = vmatpush1.msra.mxu0 %v5016
    %5050 = vmatprep.subr.mxu0 0.0
    %5051 = vmatpush1.msra.mxu0 %v5017
    %5052 = vmatprep.subr.mxu0 0.0
    %5053 = vmatpush1.msra.mxu0 %v5018
    %5054 = vmatprep.subr.mxu0 0.0
    %5055 = vmatpush1.msra.mxu0 %v5019
    %5056 = vmatprep.subr.mxu0 0.0
    %5057 = vmatpush1.msra.mxu0 %v5020
    %5058 = vmatprep.subr.mxu0 0.0
    %5059 = vmatpush1.msra.mxu0 %v5021
    %5060 = vmatprep.subr.mxu0 0.0
    %5061 = vmatpush1.msra.mxu0 %v5022
    %5062 = vmatprep.subr.mxu0 0.0
    %5063 = vmatpush1.msra.mxu0 0.0
    %5064 = vmatprep.subr.mxu0 0.0
    %5065 = vmatpush1.msra.mxu0 0.0
    %5066 = vmatprep.subr.mxu0 0.0
    %5067 = vmatpush1.msra.mxu0 0.0
    %5068 = vmatprep.subr.mxu0 0.0
    %5069 = vmatpush1.msra.mxu0 0.0
    %5070 = vmatprep.subr.mxu0 0.0
    %5071 = vmatpush1.msra.mxu0 0.0
    %5072 = vmatprep.subr.mxu0 0.0
    %5073 = vmatpush1.msra.mxu0 0.0
    %5074 = vmatprep.subr.mxu0 0.0
    %5075 = vmatpush1.msra.mxu0 0.0
    %5076 = vmatprep.subr.mxu0 0.0
    %5077 = vmatpush1.msra.mxu0 0.0
    %5078 = vmatprep.subr.mxu0 0.0
    %5079 = vmatpush1.msra.mxu0 0.0
    %5080 = vmatprep.subr.mxu0 0.0
    %5081 = vmatpush1.msra.mxu0 0.0
    %5082 = vmatprep.subr.mxu0 0.0
    %5083 = vmatpush1.msra.mxu0 0.0
    %5084 = vmatprep.subr.mxu0 0.0
    %5085 = vmatpush1.msra.mxu0 0.0
    %5086 = vmatprep.subr.mxu0 0.0
    %5087 = vmatpush1.msra.mxu0 0.0
    %5088 = vmatprep.subr.mxu0 0.0
    %5089 = vmatpush1.msra.mxu0 0.0
    %5090 = vmatprep.subr.mxu0 0.0
    %5091 = vmatpush1.msra.mxu0 0.0
    %5092 = vmatprep.subr.mxu0 0.0
    %5093 = vmatpush1.msra.mxu0 0.0
    %5094 = vmatprep.mubr.f32.mxu0 0.0
    %5095 = vmatmul.mubr.f32.gmra.mrb[0].mxu0 %v5006
    %v5096 = vpop.f32.mrb[0].mxu0
    %v5097 = vadd.f32 %v5028, %v5096
    %v5098 = vpop.f32.mrb[0].mxu0
    %5099 = vdwg.mxu0
    %5100 = vst [vmem:[#allocation15] sm:$0x3] %v5097
    // Predicated region
    $region70: #{_lambda_.1} parent=1 // pred_check
      _
    $region71: #{_lambda_.1} parent=1 // pred_check_branch
      %5102 = sbr.rel (0) target = $region73
    $region72: #{_lambda_.1} parent=1 // pred_region
      %s5104 = ssub.s32 32, 32
      %5105 = vsyncadd [#allocation8], %s5104
      %s5107 = sshll.u32 [#allocation15], 4
      %s5108 = int_to_ptr.vmem [resolvable:$true] %s5107
      %5110 = dma.vmem_to_hbm [thread:$0]  %s5108, 32, %s12, [#allocation8]
    $region73: #{_lambda_.1} parent=1 // pred_fallthru
      _
    // Predicated region
    $region74: #{_lambda_.1} parent=1 // pred_check
      _
    $region75: #{_lambda_.1} parent=1 // pred_check_branch
      %5112 = sbr.rel (0) target = $region77
    $region76: #{_lambda_.1} parent=1 // pred_region
      %5113 = dma.done [#allocation8], 32
    $region77: #{_lambda_.1} parent=1 // pred_fallthru
      _
    %5114 = vsyncpa [#allocation7], 1
    %5115 = vsyncpa [#allocation10], 1
    %5116 = vsyncpa [#allocation13], 1
    %5117 = vsyncpa [#allocation8], 1

</llo_original>
